<compile_context>
chip_gen: v5e
topology: v5e:2x2
jax: 0.10.0
libtpu: 0.0.40
codegen_flags: <defaults>
</compile_context>

<pallas_src>
import functools

import jax
import jax.numpy as jnp
from jax import lax
from jax.experimental import pallas as pl
from jax.experimental.pallas import tpu as pltpu

_BN_EPS = 1e-5
_IM2COL_MIN_DIRECT_CIN = 64     # Cin >= this -> direct 9-dot path (no im2col scratch)


def _vmem_params():
    """(vmem_limit_bytes, tile_budget_bytes) per TPU generation."""
    try:
        kind = jax.devices()[0].device_kind.lower()
    except Exception:
        kind = ""
    if ("v5" in kind) or ("v6" in kind):
        return 96 << 20, 48 << 20          # 128 MiB physical-VMEM parts
    return 48 << 20, 24 << 20              # v7x (64 MiB physical) and unknown: conservative


def _pick_block_n(N, H, W, Cin, Cout, budget_bytes):
    """Largest batch-tile TN (divisor of N) whose per-pass working set fits the
    per-generation VMEM tile budget (double-buffered ins/outs + scratch + weight)."""
    use_im2col = Cin < _IM2COL_MIN_DIRECT_CIN
    fixed = 2 * 9 * Cin * Cout * 2                        # bf16 weight, double-buffered
    per_img_p1 = (2 * (H + 2) * (W + 2) * Cin * 2         # xpad tile, bf16, double-buffered
                  + 2 * H * W * Cout * 4)                 # z tile, f32, double-buffered
    if use_im2col:
        per_img_p1 += H * W * 9 * Cin * 2                 # bf16 im2col scratch
    per_img_p2 = (2 * H * W * Cout * 4                    # z in, f32, double-buffered
                  + 2 * (H + 2) * (W + 2) * Cin * 2       # xpad in (shortcut branches)
                  + 2 * H * W * Cout * 4)                 # out, f32, double-buffered
    per_img = max(per_img_p1, per_img_p2)
    avail = max(budget_bytes - fixed, per_img)
    tn = int(max(1, min(N, avail // per_img)))
    while N % tn:                                         # stats need whole tiles
        tn -= 1
    return tn


# -----------------------------------------------------------------------------
# Pass 1: 3x3 conv (bf16 MXU, f32 accumulation) + partial batch-norm statistics.
# -----------------------------------------------------------------------------
def _conv3x3_stats_kernel(x_ref, w3_ref, z_ref, psum_ref, pssq_ref, *col):
    """x_ref  : (TN, H+2, W+2, Cin)  bf16  zero-padded NHWC input tile
       w3_ref : (9*Cin, Cout)        bf16  conv weight, tap-major rows (t*Cin + c)
       z_ref  : (TN, H, W, Cout)     f32   raw conv output tile
       psum_ref, pssq_ref : (1, 1, Cout) f32  this grid step's partial sum / sum-sq
       col    : optional (TN*H*W, 9*Cin) bf16 im2col scratch (small-Cin path)
    """
    TN, Hp, Wp, Cin = x_ref.shape
    H, W = Hp - 2, Wp - 2
    Cout = w3_ref.shape[-1]
    TM = TN * H * W
    taps = [(dy, dx) for dy in range(3) for dx in range(3)]

    if col:
        # Small Cin: stage a bf16 im2col so the MXU sees one matmul of depth 9*Cin.
        col_ref, = col
        for t, (dy, dx) in enumerate(taps):
            col_ref[:, t * Cin:(t + 1) * Cin] = (
                x_ref[:, dy:dy + H, dx:dx + W, :].reshape(TM, Cin))
        acc = jnp.dot(col_ref[...], w3_ref[...],
                      preferred_element_type=jnp.float32)           # (TM, Cout) f32
    else:
        # Large Cin: contraction depth Cin already saturates the MXU; accumulate
        # nine dots directly and skip the im2col staging stores + reload.
        acc = jnp.zeros((TM, Cout), jnp.float32)
        for t, (dy, dx) in enumerate(taps):
            acc = acc + jnp.dot(
                x_ref[:, dy:dy + H, dx:dx + W, :].reshape(TM, Cin),
                w3_ref[t * Cin:(t + 1) * Cin, :],
                preferred_element_type=jnp.float32)

    # Per-grid-step partial batch statistics (reduced in XLA afterwards) so the
    # grid axis stays "parallel" and can shard across both v7x TensorCores.
    psum_ref[0] = jnp.sum(acc, axis=0, keepdims=True)
    pssq_ref[0] = jnp.sum(acc * acc, axis=0, keepdims=True)

    z_ref[...] = acc.reshape(TN, H, W, Cout)


# -----------------------------------------------------------------------------
# Pass 2 variants: normalize + ReLU + shortcut combine.
# -----------------------------------------------------------------------------
def _bn_relu_kernel(s0, z_ref, scale_ref, bias_ref, out_ref):
    """Hot branch (frozen shortcut [1,0], or first=True): BN + ReLU only.
    Operates on lane-dense (TN, H, W*Cout) slabs; scale/bias are per-(w,c) tiled."""
    WC = out_ref.shape[-1]
    z = (z_ref[...] * scale_ref[...].reshape(1, 1, WC)
         + bias_ref[...].reshape(1, 1, WC))
    z = jnp.maximum(z, 0.0)
    if s0 != 1.0:
        z = z * s0
    out_ref[...] = z


def _bn_relu_add_kernel(s0, s1, z_ref, xpad_ref, scale_ref, bias_ref, out_ref):
    """expend_block is the identity (Cin == Cout): out = s0*relu(bn(z)) + s1*x.
    x is read (bf16) from the already-materialized padded activation."""
    TN, H, W, Cout = out_ref.shape
    z = (z_ref[...] * scale_ref[...].reshape(1, 1, 1, Cout)
         + bias_ref[...].reshape(1, 1, 1, Cout))
    z = jnp.maximum(z, 0.0)
    y = xpad_ref[:, 1:H + 1, 1:W + 1, :].astype(jnp.float32)
    out_ref[...] = s0 * z + s1 * y


def _bn_relu_expend_kernel(s0, s1, z_ref, xpad_ref, w1_ref, scale_ref, bias_ref,
                           out_ref):
    """expend_block is a real 1x1 conv (Cin != Cout): out = s0*relu(bn(z)) + s1*(x@w1)."""
    TN, H, W, Cout = out_ref.shape
    Cin = xpad_ref.shape[-1]
    TM = TN * H * W
    z = (z_ref[...] * scale_ref[...].reshape(1, 1, 1, Cout)
         + bias_ref[...].reshape(1, 1, 1, Cout))
    z = jnp.maximum(z, 0.0)
    x_int = xpad_ref[:, 1:H + 1, 1:W + 1, :]                        # (TN,H,W,Cin) bf16
    y = jnp.dot(x_int.reshape(TM, Cin), w1_ref[...],
                preferred_element_type=jnp.float32).reshape(TN, H, W, Cout)
    out_ref[...] = s0 * z + s1 * y


# -----------------------------------------------------------------------------
# Wrapper
# -----------------------------------------------------------------------------
@functools.partial(jax.jit,
                   static_argnames=("s0", "s1", "block_n", "vmem_limit", "nchw"))
def _vgg_block_fwd(x, w3_oihw, w1_oihw, gamma, beta, *, s0, s1, block_n,
                   vmem_limit, nchw):
    if nchw:
        N, Cin, H, W = x.shape
        x_nhwc = jnp.transpose(x, (0, 2, 3, 1))
    else:
        N, H, W, Cin = x.shape
        x_nhwc = x
    Cout = w3_oihw.shape[0]
    tn = block_n
    G = N // tn

    # Layout glue (fuses into one XLA op): halo pad + bf16 cast (+ the NCHW->NHWC
    # transpose only when the caller uses the PyTorch layout).
    xpad = jnp.pad(x_nhwc.astype(jnp.float32),
                   ((0, 0), (1, 1), (1, 1), (0, 0))).astype(jnp.bfloat16)
    w3r = jnp.transpose(w3_oihw.astype(jnp.float32),
                        (2, 3, 1, 0)).reshape(9 * Cin, Cout).astype(jnp.bfloat16)

    cparams = pltpu.CompilerParams(dimension_semantics=("parallel",),
                                   vmem_limit_bytes=vmem_limit)

    # --- pass 1: conv + partial batch statistics ------------------------------
    use_im2col = Cin < _IM2COL_MIN_DIRECT_CIN
    scratch = ([pltpu.VMEM((tn * H * W, 9 * Cin), jnp.bfloat16)]
               if use_im2col else [])
    z_raw, psum, pssq = pl.pallas_call(
        _conv3x3_stats_kernel,
        grid=(G,),
        in_specs=[
            pl.BlockSpec((tn, H + 2, W + 2, Cin), lambda i: (i, 0, 0, 0)),
            # Constant index_map -> fetched once; still double-buffered by Pallas
            # (charged to the VMEM budget instead of using pl.Buffered(1)).
            pl.BlockSpec((9 * Cin, Cout), lambda i: (0, 0)),
        ],
        out_specs=[
            pl.BlockSpec((tn, H, W, Cout), lambda i: (i, 0, 0, 0)),
            pl.BlockSpec((1, 1, Cout), lambda i: (i, 0, 0)),
            pl.BlockSpec((1, 1, Cout), lambda i: (i, 0, 0)),
        ],
        out_shape=[
            jax.ShapeDtypeStruct((N, H, W, Cout), jnp.float32),
            jax.ShapeDtypeStruct((G, 1, Cout), jnp.float32),
            jax.ShapeDtypeStruct((G, 1, Cout), jnp.float32),
        ],
        scratch_shapes=scratch,
        compiler_params=cparams,
    )(xpad, w3r)

    # Per-channel scale/bias computed once in XLA (O(Cout); training-mode biased var).
    cnt = float(N * H * W)
    mean = jnp.sum(psum, axis=(0, 1)) / cnt                          # (Cout,)
    var = jnp.sum(pssq, axis=(0, 1)) / cnt - mean * mean
    scale_c = gamma.astype(jnp.float32) * lax.rsqrt(var + _BN_EPS)
    bias_c = beta.astype(jnp.float32) - mean * scale_c

    # --- pass 2: normalize + ReLU + shortcut ----------------------------------
    out_shape4 = jax.ShapeDtypeStruct((N, H, W, Cout), jnp.float32)
    z4_spec = pl.BlockSpec((tn, H, W, Cout), lambda i: (i, 0, 0, 0))
    xpad_spec = pl.BlockSpec((tn, H + 2, W + 2, Cin), lambda i: (i, 0, 0, 0))
    cvec_spec = pl.BlockSpec((1, Cout), lambda i: (0, 0))

    if s1 == 0.0:
        # Hot branch: lane-dense (N, H, W*Cout) slabs -> unmasked >=128-lane
        # stores even when Cout < 128. The reshapes are free (same memory layout).
        WC = W * Cout
        z_flat = z_raw.reshape(N, H, WC)
        scale_t = jnp.tile(scale_c, W).reshape(1, WC)     # per-(w, c) scale
        bias_t = jnp.tile(bias_c, W).reshape(1, WC)
        slab_spec = pl.BlockSpec((tn, H, WC), lambda i: (i, 0, 0))
        wvec_spec = pl.BlockSpec((1, WC), lambda i: (0, 0))
        out_flat = pl.pallas_call(
            functools.partial(_bn_relu_kernel, s0),
            grid=(G,),
            in_specs=[slab_spec, wvec_spec, wvec_spec],
            out_specs=slab_spec,
            out_shape=jax.ShapeDtypeStruct((N, H, WC), jnp.float32),
            input_output_aliases={0: 0},                  # reuse z_raw's HBM buffer
            compiler_params=cparams,
        )(z_flat, scale_t, bias_t)
        out_nhwc = out_flat.reshape(N, H, W, Cout)
    elif Cin == Cout:
        # expend_block is the identity: y = x (read from the bf16 padded copy).
        out_nhwc = pl.pallas_call(
            functools.partial(_bn_relu_add_kernel, s0, s1),
            grid=(G,),
            in_specs=[z4_spec, xpad_spec, cvec_spec, cvec_spec],
            out_specs=z4_spec,
            out_shape=out_shape4,
            input_output_aliases={0: 0},
            compiler_params=cparams,
        )(z_raw, xpad, scale_c.reshape(1, Cout), bias_c.reshape(1, Cout))
    else:
        # expend_block is a real 1x1 conv.
        w1 = jnp.transpose(w1_oihw.astype(jnp.float32)[:, :, 0, 0],
                           (1, 0)).astype(jnp.bfloat16)              # (Cin, Cout)
        out_nhwc = pl.pallas_call(
            functools.partial(_bn_relu_expend_kernel, s0, s1),
            grid=(G,),
            in_specs=[z4_spec, xpad_spec,
                      pl.BlockSpec((Cin, Cout), lambda i: (0, 0)),
                      cvec_spec, cvec_spec],
            out_specs=z4_spec,
            out_shape=out_shape4,
            input_output_aliases={0: 0},
            compiler_params=cparams,
        )(z_raw, xpad, w1, scale_c.reshape(1, Cout), bias_c.reshape(1, Cout))

    if nchw:
        return jnp.transpose(out_nhwc, (0, 3, 1, 2))     # PyTorch-compat NCHW out
    return out_nhwc


def _forward(x, w3_oihw, w1_oihw, gamma, beta, shortcut, first, block_n, nchw):
    if nchw:
        N, Cin, H, W = x.shape
    else:
        N, H, W, Cin = x.shape
    Cout = w3_oihw.shape[0]
    if first:
        s0, s1 = 1.0, 0.0               # first branch: plain conv-bn-relu
    else:
        # shortcut is a frozen, non-trainable Parameter -> concretize at trace
        # time so the dead expend matmul is specialized away.
        s0, s1 = float(shortcut[0]), float(shortcut[1])
    if s1 != 0.0 and Cin != Cout and w1_oihw is None:
        raise ValueError("expend_block weights required when in_channels != out_channels")
    vmem_limit, tile_budget = _vmem_params()
    if block_n is None:
        block_n = _pick_block_n(N, H, W, Cin, Cout, tile_budget)
    if N % block_n:
        raise ValueError("block_n must divide the batch size")
    return _vgg_block_fwd(x, w3_oihw, w1_oihw, gamma, beta,
                          s0=s0, s1=s1, block_n=int(block_n),
                          vmem_limit=int(vmem_limit), nchw=bool(nchw))


def vgg_block_forward(x_nchw, w3_oihw, w1_oihw, gamma, beta, shortcut,
                      first=False, block_n=None):
    """PyTorch-layout (NCHW) entry point for vgg_block.

    x_nchw  : (N, Cin, H, W) f32        activation
    w3_oihw : (Cout, Cin, 3, 3)         3x3 conv weight
    w1_oihw : (Cout, Cin, 1, 1) or None expend_block 1x1 conv weight
    gamma, beta : (Cout,)               BatchNorm affine parameters
    shortcut    : length-2 vector       frozen Parameter [1, 0] in the module
    """
    return _forward(x_nchw, w3_oihw, w1_oihw, gamma, beta, shortcut, first,
                    block_n, nchw=True)


def vgg_block_forward_nhwc(x_nhwc, w3_oihw, w1_oihw, gamma, beta, shortcut,
                           first=False, block_n=None):
    """Channels-last entry point: keeping the whole network NHWC removes the
    per-block NCHW<->NHWC HBM round trips entirely."""
    return _forward(x_nhwc, w3_oihw, w1_oihw, gamma, beta, shortcut, first,
                    block_n, nchw=False)


def _reference_forward(x, w3, w1, gamma, beta, shortcut, first=False):
    """Pure-JAX reference mirroring the PyTorch forward (training-mode BN) with the
    kernel's precision policy: conv inputs rounded to bf16, f32 accumulation/BN."""
    f32 = jnp.float32
    xc = x.astype(jnp.bfloat16).astype(f32)
    w3c = w3.astype(jnp.bfloat16).astype(f32)
    z = lax.conv_general_dilated(xc, w3c, (1, 1), 'SAME',
                                 dimension_numbers=('NCHW', 'OIHW', 'NCHW'))
    mean = z.mean(axis=(0, 2, 3), keepdims=True)
    var = ((z - mean) ** 2).mean(axis=(0, 2, 3), keepdims=True)
    z = (z - mean) * lax.rsqrt(var + _BN_EPS)
    z = z * gamma.reshape(1, -1, 1, 1) + beta.reshape(1, -1, 1, 1)
    z = jnp.maximum(z, 0.0)
    if first:
        return z
    s0, s1 = shortcut
    if x.shape[1] != w3.shape[0]:
        w1c = w1.astype(jnp.bfloat16).astype(f32)
        y = lax.conv_general_dilated(xc, w1c, (1, 1), 'VALID',
                                     dimension_numbers=('NCHW', 'OIHW', 'NCHW'))
    else:
        y = x
    return s0 * z + s1 * y


if __name__ == "__main__":
    # Small shapes consistent with the module: batch=2, in=4, out=8, spatial=16.
    N, Cin, Cout, H, W = 2, 4, 8, 16, 16

    key = jax.random.PRNGKey(0)
    k1, k2, k3, k4, k5 = jax.random.split(key, 5)

    x = jax.random.normal(k1, (N, Cin, H, W), jnp.float32)
    w3 = jax.random.normal(k2, (Cout, Cin, 3, 3), jnp.float32) * 0.2
    w1 = jax.random.normal(k3, (Cout, Cin, 1, 1), jnp.float32) * 0.2
    gamma = 1.0 + 0.1 * jax.random.normal(k4, (Cout,), jnp.float32)
    beta = 0.1 * jax.random.normal(k5, (Cout,), jnp.float32)
    shortcut = jnp.array([1.0, 0.0], jnp.float32)   # frozen Parameter([1, 0])

    ref = jax.block_until_ready(_reference_forward(x, w3, w1, gamma, beta, (1.0, 0.0)))

    # Main path: the module as constructed (shortcut=[1,0] -> expend path is dead).
    # block_n=1 forces a multi-step grid so cross-tile partial statistics are used.
    out = jax.block_until_ready(
        vgg_block_forward(x, w3, w1, gamma, beta, shortcut, first=False, block_n=1))
    assert out.shape == (N, Cout, H, W)
    err = float(jnp.max(jnp.abs(out - ref)))
    assert err < 2e-3, f"main path max abs err {err}"

    # Auto-picked batch tile (single-step grid on these toy shapes).
    out_auto = jax.block_until_ready(
        vgg_block_forward(x, w3, w1, gamma, beta, shortcut, first=False))
    err_auto = float(jnp.max(jnp.abs(out_auto - ref)))
    assert err_auto < 2e-3, f"auto-tile max abs err {err_auto}"

    # Channels-last entry point (no NCHW<->NHWC layout round trips inside).
    x_nhwc = jnp.transpose(x, (0, 2, 3, 1))
    out_nhwc = jax.block_until_ready(
        vgg_block_forward_nhwc(x_nhwc, w3, w1, gamma, beta, shortcut,
                               first=False, block_n=1))
    err_nhwc = float(jnp.max(jnp.abs(jnp.transpose(out_nhwc, (0, 3, 1, 2)) - ref)))
    assert err_nhwc < 2e-3, f"NHWC path max abs err {err_nhwc}"

    # General shortcut values (exercises the 1x1 expend matmul branch of pass 2).
    sc2 = jnp.array([0.7, 0.3], jnp.float32)
    out2 = jax.block_until_ready(
        vgg_block_forward(x, w3, w1, gamma, beta, sc2, first=False, block_n=1))
    ref2 = jax.block_until_ready(_reference_forward(x, w3, w1, gamma, beta, (0.7, 0.3)))
    err2 = float(jnp.max(jnp.abs(out2 - ref2)))
    assert err2 < 2e-3, f"expend path max abs err {err2}"

    print("KERNEL_OK")
</pallas_src>

<mosaic_0001>
module attributes {stable_mosaic.version = 11 : i64} {
  func.func @_conv3x3_stats_kernel(%arg0: i32, %arg1: memref<1x18x18x4xbf16, #tpu.memory_space<vmem>>, %arg2: memref<36x8xbf16, #tpu.memory_space<vmem>>, %arg3: memref<1x16x16x8xf32, #tpu.memory_space<vmem>>, %arg4: memref<1x1x8xf32, #tpu.memory_space<vmem>>, %arg5: memref<1x1x8xf32, #tpu.memory_space<vmem>>, %arg6: memref<256x36xbf16, #tpu.memory_space<vmem>>) attributes {dimension_semantics = [#tpu.dimension_semantics<parallel>], iteration_bounds = array<i64: 2>, scalar_prefetch = 0 : i64, scratch_operands = 1 : i64, tpu.core_type = #tpu.core_type<tc>, window_params = [{transform_indices = @transform_0, window_bounds = array<i64: 1, 18, 18, 4>}, {pipeline_mode = #tpu.pipeline_mode<synchronous>, transform_indices = @transform_1, window_bounds = array<i64: 36, 8>}, {transform_indices = @transform_2, window_bounds = array<i64: 1, 16, 16, 8>}, {transform_indices = @transform_3, window_bounds = array<i64: 1, 1, 8>}, {transform_indices = @transform_4, window_bounds = array<i64: 1, 1, 8>}]} {
    %c0 = arith.constant 0 : index
    %c0_0 = arith.constant 0 : index
    %c0_1 = arith.constant 0 : index
    %c0_2 = arith.constant 0 : index
    %0 = vector.load %arg1[%c0, %c0_0, %c0_1, %c0_2] : memref<1x18x18x4xbf16, #tpu.memory_space<vmem>>, vector<1x16x16x4xbf16>
    %1 = vector.shape_cast %0 : vector<1x16x16x4xbf16> to vector<256x4xbf16>
    %c0_3 = arith.constant 0 : index
    %c0_4 = arith.constant 0 : index
    %2 = vector.load %arg6[%c0_3, %c0_4] : memref<256x36xbf16, #tpu.memory_space<vmem>>, vector<256x4xbf16>
    tpu.vector_store %arg6[%c0_3, %c0_4], %1 {strides = array<i32>} : memref<256x36xbf16, #tpu.memory_space<vmem>>, vector<256x4xbf16>,
    %c0_5 = arith.constant 0 : index
    %c0_6 = arith.constant 0 : index
    %c1 = arith.constant 1 : index
    %c0_7 = arith.constant 0 : index
    %3 = vector.load %arg1[%c0_5, %c0_6, %c1, %c0_7] : memref<1x18x18x4xbf16, #tpu.memory_space<vmem>>, vector<1x16x16x4xbf16>
    %4 = vector.shape_cast %3 : vector<1x16x16x4xbf16> to vector<256x4xbf16>
    %c0_8 = arith.constant 0 : index
    %c4 = arith.constant 4 : index
    %5 = vector.load %arg6[%c0_8, %c4] : memref<256x36xbf16, #tpu.memory_space<vmem>>, vector<256x4xbf16>
    tpu.vector_store %arg6[%c0_8, %c4], %4 {strides = array<i32>} : memref<256x36xbf16, #tpu.memory_space<vmem>>, vector<256x4xbf16>,
    %c0_9 = arith.constant 0 : index
    %c0_10 = arith.constant 0 : index
    %c2 = arith.constant 2 : index
    %c0_11 = arith.constant 0 : index
    %6 = vector.load %arg1[%c0_9, %c0_10, %c2, %c0_11] : memref<1x18x18x4xbf16, #tpu.memory_space<vmem>>, vector<1x16x16x4xbf16>
    %7 = vector.shape_cast %6 : vector<1x16x16x4xbf16> to vector<256x4xbf16>
    %c0_12 = arith.constant 0 : index
    %c8 = arith.constant 8 : index
    %8 = vector.load %arg6[%c0_12, %c8] : memref<256x36xbf16, #tpu.memory_space<vmem>>, vector<256x4xbf16>
    tpu.vector_store %arg6[%c0_12, %c8], %7 {strides = array<i32>} : memref<256x36xbf16, #tpu.memory_space<vmem>>, vector<256x4xbf16>,
    %c0_13 = arith.constant 0 : index
    %c1_14 = arith.constant 1 : index
    %c0_15 = arith.constant 0 : index
    %c0_16 = arith.constant 0 : index
    %9 = vector.load %arg1[%c0_13, %c1_14, %c0_15, %c0_16] : memref<1x18x18x4xbf16, #tpu.memory_space<vmem>>, vector<1x16x16x4xbf16>
    %10 = vector.shape_cast %9 : vector<1x16x16x4xbf16> to vector<256x4xbf16>
    %c0_17 = arith.constant 0 : index
    %c12 = arith.constant 12 : index
    %11 = vector.load %arg6[%c0_17, %c12] : memref<256x36xbf16, #tpu.memory_space<vmem>>, vector<256x4xbf16>
    tpu.vector_store %arg6[%c0_17, %c12], %10 {strides = array<i32>} : memref<256x36xbf16, #tpu.memory_space<vmem>>, vector<256x4xbf16>,
    %c0_18 = arith.constant 0 : index
    %c1_19 = arith.constant 1 : index
    %c1_20 = arith.constant 1 : index
    %c0_21 = arith.constant 0 : index
    %12 = vector.load %arg1[%c0_18, %c1_19, %c1_20, %c0_21] : memref<1x18x18x4xbf16, #tpu.memory_space<vmem>>, vector<1x16x16x4xbf16>
    %13 = vector.shape_cast %12 : vector<1x16x16x4xbf16> to vector<256x4xbf16>
    %c0_22 = arith.constant 0 : index
    %c16 = arith.constant 16 : index
    %14 = vector.load %arg6[%c0_22, %c16] : memref<256x36xbf16, #tpu.memory_space<vmem>>, vector<256x4xbf16>
    tpu.vector_store %arg6[%c0_22, %c16], %13 {strides = array<i32>} : memref<256x36xbf16, #tpu.memory_space<vmem>>, vector<256x4xbf16>,
    %c0_23 = arith.constant 0 : index
    %c1_24 = arith.constant 1 : index
    %c2_25 = arith.constant 2 : index
    %c0_26 = arith.constant 0 : index
    %15 = vector.load %arg1[%c0_23, %c1_24, %c2_25, %c0_26] : memref<1x18x18x4xbf16, #tpu.memory_space<vmem>>, vector<1x16x16x4xbf16>
    %16 = vector.shape_cast %15 : vector<1x16x16x4xbf16> to vector<256x4xbf16>
    %c0_27 = arith.constant 0 : index
    %c20 = arith.constant 20 : index
    %17 = vector.load %arg6[%c0_27, %c20] : memref<256x36xbf16, #tpu.memory_space<vmem>>, vector<256x4xbf16>
    tpu.vector_store %arg6[%c0_27, %c20], %16 {strides = array<i32>} : memref<256x36xbf16, #tpu.memory_space<vmem>>, vector<256x4xbf16>,
    %c0_28 = arith.constant 0 : index
    %c2_29 = arith.constant 2 : index
    %c0_30 = arith.constant 0 : index
    %c0_31 = arith.constant 0 : index
    %18 = vector.load %arg1[%c0_28, %c2_29, %c0_30, %c0_31] : memref<1x18x18x4xbf16, #tpu.memory_space<vmem>>, vector<1x16x16x4xbf16>
    %19 = vector.shape_cast %18 : vector<1x16x16x4xbf16> to vector<256x4xbf16>
    %c0_32 = arith.constant 0 : index
    %c24 = arith.constant 24 : index
    %20 = vector.load %arg6[%c0_32, %c24] : memref<256x36xbf16, #tpu.memory_space<vmem>>, vector<256x4xbf16>
    tpu.vector_store %arg6[%c0_32, %c24], %19 {strides = array<i32>} : memref<256x36xbf16, #tpu.memory_space<vmem>>, vector<256x4xbf16>,
    %c0_33 = arith.constant 0 : index
    %c2_34 = arith.constant 2 : index
    %c1_35 = arith.constant 1 : index
    %c0_36 = arith.constant 0 : index
    %21 = vector.load %arg1[%c0_33, %c2_34, %c1_35, %c0_36] : memref<1x18x18x4xbf16, #tpu.memory_space<vmem>>, vector<1x16x16x4xbf16>
    %22 = vector.shape_cast %21 : vector<1x16x16x4xbf16> to vector<256x4xbf16>
    %c0_37 = arith.constant 0 : index
    %c28 = arith.constant 28 : index
    %23 = vector.load %arg6[%c0_37, %c28] : memref<256x36xbf16, #tpu.memory_space<vmem>>, vector<256x4xbf16>
    tpu.vector_store %arg6[%c0_37, %c28], %22 {strides = array<i32>} : memref<256x36xbf16, #tpu.memory_space<vmem>>, vector<256x4xbf16>,
    %c0_38 = arith.constant 0 : index
    %c2_39 = arith.constant 2 : index
    %c2_40 = arith.constant 2 : index
    %c0_41 = arith.constant 0 : index
    %24 = vector.load %arg1[%c0_38, %c2_39, %c2_40, %c0_41] : memref<1x18x18x4xbf16, #tpu.memory_space<vmem>>, vector<1x16x16x4xbf16>
    %25 = vector.shape_cast %24 : vector<1x16x16x4xbf16> to vector<256x4xbf16>
    %c0_42 = arith.constant 0 : index
    %c32 = arith.constant 32 : index
    %26 = vector.load %arg6[%c0_42, %c32] : memref<256x36xbf16, #tpu.memory_space<vmem>>, vector<256x4xbf16>
    tpu.vector_store %arg6[%c0_42, %c32], %25 {strides = array<i32>} : memref<256x36xbf16, #tpu.memory_space<vmem>>, vector<256x4xbf16>,
    %c0_43 = arith.constant 0 : index
    %c0_44 = arith.constant 0 : index
    %27 = vector.load %arg6[%c0_43, %c0_44] : memref<256x36xbf16, #tpu.memory_space<vmem>>, vector<256x36xbf16>
    %c0_45 = arith.constant 0 : index
    %c0_46 = arith.constant 0 : index
    %28 = vector.load %arg2[%c0_45, %c0_46] : memref<36x8xbf16, #tpu.memory_space<vmem>>, vector<36x8xbf16>
    %cst = arith.constant dense<0.000000e+00> : vector<256x8xf32>
    %29 = tpu.matmul %27, %28, %cst {dimension_numbers = #tpu.dot_dimension_numbers<[1], [0], [0], [1], [0, 0, 1, 1], [], []>} : vector<256x36xbf16>, vector<36x8xbf16>, vector<256x8xf32> -> vector<256x8xf32>
    %cst_47 = arith.constant dense<0.000000e+00> : vector<8xf32>
    %30 = vector.multi_reduction <add>, %29, %cst_47 [0] : vector<256x8xf32> to vector<8xf32>
    %31 = vector.shape_cast %30 : vector<8xf32> to vector<1x8xf32>
    %c0_48 = arith.constant 0 : index
    %c0_49 = arith.constant 0 : index
    %c0_50 = arith.constant 0 : index
    %32 = vector.load %arg4[%c0_48, %c0_49, %c0_50] : memref<1x1x8xf32, #tpu.memory_space<vmem>>, vector<1x1x8xf32>
    %33 = vector.shape_cast %32 : vector<1x1x8xf32> to vector<1x8xf32>
    %34 = vector.shape_cast %31 : vector<1x8xf32> to vector<1x1x8xf32>
    tpu.vector_store %arg4[%c0_48, %c0_49, %c0_50], %34 {strides = array<i32>} : memref<1x1x8xf32, #tpu.memory_space<vmem>>, vector<1x1x8xf32>,
    %35 = arith.mulf %29, %29 : vector<256x8xf32>
    %cst_51 = arith.constant dense<0.000000e+00> : vector<8xf32>
    %36 = vector.multi_reduction <add>, %35, %cst_51 [0] : vector<256x8xf32> to vector<8xf32>
    %37 = vector.shape_cast %36 : vector<8xf32> to vector<1x8xf32>
    %c0_52 = arith.constant 0 : index
    %c0_53 = arith.constant 0 : index
    %c0_54 = arith.constant 0 : index
    %38 = vector.load %arg5[%c0_52, %c0_53, %c0_54] : memref<1x1x8xf32, #tpu.memory_space<vmem>>, vector<1x1x8xf32>
    %39 = vector.shape_cast %38 : vector<1x1x8xf32> to vector<1x8xf32>
    %40 = vector.shape_cast %37 : vector<1x8xf32> to vector<1x1x8xf32>
    tpu.vector_store %arg5[%c0_52, %c0_53, %c0_54], %40 {strides = array<i32>} : memref<1x1x8xf32, #tpu.memory_space<vmem>>, vector<1x1x8xf32>,
    %41 = vector.shape_cast %29 : vector<256x8xf32> to vector<1x16x16x8xf32>
    %c0_55 = arith.constant 0 : index
    %c0_56 = arith.constant 0 : index
    %c0_57 = arith.constant 0 : index
    %c0_58 = arith.constant 0 : index
    %42 = vector.load %arg3[%c0_55, %c0_56, %c0_57, %c0_58] : memref<1x16x16x8xf32, #tpu.memory_space<vmem>>, vector<1x16x16x8xf32>
    tpu.vector_store %arg3[%c0_55, %c0_56, %c0_57, %c0_58], %41 {strides = array<i32>} : memref<1x16x16x8xf32, #tpu.memory_space<vmem>>, vector<1x16x16x8xf32>,
    return
  }
  func.func @transform_0(%arg0: i32) -> (i32, i32, i32, i32) {
    %c0_i32 = arith.constant 0 : i32
    %c0_i32_0 = arith.constant 0 : i32
    %c0_i32_1 = arith.constant 0 : i32
    %c0_i32_2 = arith.constant 0 : i32
    return %arg0, %c0_i32, %c0_i32_0, %c0_i32_1 : i32, i32, i32, i32
  }
  func.func @transform_1(%arg0: i32) -> (i32, i32) {
    %c0_i32 = arith.constant 0 : i32
    %c0_i32_0 = arith.constant 0 : i32
    %c0_i32_1 = arith.constant 0 : i32
    return %c0_i32, %c0_i32_0 : i32, i32
  }
  func.func @transform_2(%arg0: i32) -> (i32, i32, i32, i32) {
    %c0_i32 = arith.constant 0 : i32
    %c0_i32_0 = arith.constant 0 : i32
    %c0_i32_1 = arith.constant 0 : i32
    %c0_i32_2 = arith.constant 0 : i32
    return %arg0, %c0_i32, %c0_i32_0, %c0_i32_1 : i32, i32, i32, i32
  }
  func.func @transform_3(%arg0: i32) -> (i32, i32, i32) {
    %c0_i32 = arith.constant 0 : i32
    %c0_i32_0 = arith.constant 0 : i32
    %c0_i32_1 = arith.constant 0 : i32
    return %arg0, %c0_i32, %c0_i32_0 : i32, i32, i32
  }
  func.func @transform_4(%arg0: i32) -> (i32, i32, i32) {
    %c0_i32 = arith.constant 0 : i32
    %c0_i32_0 = arith.constant 0 : i32
    %c0_i32_1 = arith.constant 0 : i32
    return %arg0, %c0_i32, %c0_i32_0 : i32, i32, i32
  }
}

module attributes {stable_mosaic.version = 11 : i64} {
  func.func @_bn_relu_kernel(%arg0: i32, %arg1: memref<1x16x128xf32, #tpu.memory_space<vmem>>, %arg2: memref<1x128xf32, #tpu.memory_space<vmem>>, %arg3: memref<1x128xf32, #tpu.memory_space<vmem>>, %arg4: memref<1x16x128xf32, #tpu.memory_space<vmem>>) attributes {dimension_semantics = [#tpu.dimension_semantics<parallel>], iteration_bounds = array<i64: 2>, scalar_prefetch = 0 : i64, scratch_operands = 0 : i64, tpu.core_type = #tpu.core_type<tc>, window_params = [{transform_indices = @transform_0, window_bounds = array<i64: 1, 16, 128>}, {pipeline_mode = #tpu.pipeline_mode<synchronous>, transform_indices = @transform_1, window_bounds = array<i64: 1, 128>}, {pipeline_mode = #tpu.pipeline_mode<synchronous>, transform_indices = @transform_2, window_bounds = array<i64: 1, 128>}, {transform_indices = @transform_3, window_bounds = array<i64: 1, 16, 128>}]} {
    %c0 = arith.constant 0 : index
    %c0_0 = arith.constant 0 : index
    %c0_1 = arith.constant 0 : index
    %0 = vector.load %arg1[%c0, %c0_0, %c0_1] : memref<1x16x128xf32, #tpu.memory_space<vmem>>, vector<1x16x128xf32>
    %c0_2 = arith.constant 0 : index
    %c0_3 = arith.constant 0 : index
    %1 = vector.load %arg2[%c0_2, %c0_3] : memref<1x128xf32, #tpu.memory_space<vmem>>, vector<1x128xf32>
    %2 = vector.shape_cast %1 : vector<1x128xf32> to vector<1x1x128xf32>
    %3 = vector.broadcast %2 : vector<1x1x128xf32> to vector<1x16x128xf32>
    %4 = arith.mulf %0, %3 : vector<1x16x128xf32>
    %c0_4 = arith.constant 0 : index
    %c0_5 = arith.constant 0 : index
    %5 = vector.load %arg3[%c0_4, %c0_5] : memref<1x128xf32, #tpu.memory_space<vmem>>, vector<1x128xf32>
    %6 = vector.shape_cast %5 : vector<1x128xf32> to vector<1x1x128xf32>
    %7 = vector.broadcast %6 : vector<1x1x128xf32> to vector<1x16x128xf32>
    %8 = arith.addf %4, %7 : vector<1x16x128xf32>
    %cst = arith.constant 0.000000e+00 : f32
    %9 = vector.broadcast %cst : f32 to vector<1x16x128xf32>
    %10 = arith.maximumf %8, %9 : vector<1x16x128xf32>
    %c0_6 = arith.constant 0 : index
    %c0_7 = arith.constant 0 : index
    %c0_8 = arith.constant 0 : index
    %11 = vector.load %arg4[%c0_6, %c0_7, %c0_8] : memref<1x16x128xf32, #tpu.memory_space<vmem>>, vector<1x16x128xf32>
    tpu.vector_store %arg4[%c0_6, %c0_7, %c0_8], %10 {strides = array<i32>} : memref<1x16x128xf32, #tpu.memory_space<vmem>>, vector<1x16x128xf32>,
    return
  }
  func.func @transform_0(%arg0: i32) -> (i32, i32, i32) {
    %c0_i32 = arith.constant 0 : i32
    %c0_i32_0 = arith.constant 0 : i32
    %c0_i32_1 = arith.constant 0 : i32
    return %arg0, %c0_i32, %c0_i32_0 : i32, i32, i32
  }
  func.func @transform_1(%arg0: i32) -> (i32, i32) {
    %c0_i32 = arith.constant 0 : i32
    %c0_i32_0 = arith.constant 0 : i32
    %c0_i32_1 = arith.constant 0 : i32
    return %c0_i32, %c0_i32_0 : i32, i32
  }
  func.func @transform_2(%arg0: i32) -> (i32, i32) {
    %c0_i32 = arith.constant 0 : i32
    %c0_i32_0 = arith.constant 0 : i32
    %c0_i32_1 = arith.constant 0 : i32
    return %c0_i32, %c0_i32_0 : i32, i32
  }
  func.func @transform_3(%arg0: i32) -> (i32, i32, i32) {
    %c0_i32 = arith.constant 0 : i32
    %c0_i32_0 = arith.constant 0 : i32
    %c0_i32_1 = arith.constant 0 : i32
    return %arg0, %c0_i32, %c0_i32_0 : i32, i32, i32
  }
}

</mosaic_0001>

<llo_original>
// kernel: tile.18
$region0: #{tile.18}
  #allocation0 [shape = 's32[1]{0}', space=sflag, size = 0x4, scoped, tag = 'scoped memory for tile.18']
  %s0 = inlined_call_operand.vmem [shape: f32[8], index: 0, kind: input, shape index: {}]
  %s1 = inlined_call_operand.vmem [shape: f32[16,8], index: 1, kind: output, shape index: {}]
  // Predicated region
  $region2: #{tile.18} parent=0 // pred_check
    _
  $region3: #{tile.18} parent=0 // pred_check_branch
    %3 = sbr.rel (0) target = $region5
  $region4: #{tile.18} parent=0 // pred_region
    _
  $region5: #{tile.18} parent=0 // pred_fallthru
    _
  %v4 = vld [vmem:[%s0] ss:$0 sm:$0xff]
  %5 = vst [vmem:[%s1] sm:$0xff] %v4
  %s6 = scalar_lea.vmem %s1, 8
  %7 = vst [vmem:[%s6] sm:$0xff] %v4

// kernel: tile.19
$region0: #{tile.19}
  %s0 = inlined_call_operand.vmem [shape: f32[16,8], index: 0, kind: input, shape index: {}]
  %s1 = inlined_call_operand.vmem [shape: f32[1,128], index: 1, kind: output, shape index: {}]
  $region1: #{tile.19} parent=0
    #allocation0 [shape = 'u8[4096]{0}', space=vmem, size = 0x1000, scoped, tag = 'scoped mem for output reshape']
    %v2 = vld [vmem:[%s0] sm:$0x1]
    %vm3 = vcmask 64512
    %4 = vst.msk [vmem:[#allocation0] sm:$0x1] %vm3, %v2
    %s5 = scalar_lea.vmem %s0, 15
    %v6 = vld [vmem:[%s5] sm:$0x1]
    %7 = vrot.lane.b32.xlu0 %v6, 120
    %v8 = vpop.permute.xlu0 %7
    %vm9 = vcmask 1048512
    %10 = vst.msk [vmem:[#allocation0] sm:$0x1] %vm9, %v8
    %s11 = scalar_lea.vmem %s0, 14
    %v12 = vld [vmem:[%s11] sm:$0x1]
    %13 = vrot.lane.b32.xlu0 %v12, 112
    %v14 = vpop.permute.xlu0 %13
    %vm15 = vcmask 982912
    %16 = vst.msk [vmem:[#allocation0] sm:$0x1] %vm15, %v14
    %s17 = scalar_lea.vmem %s0, 13
    %v18 = vld [vmem:[%s17] sm:$0x1]
    %19 = vrot.lane.b32.xlu0 %v18, 104
    %v20 = vpop.permute.xlu0 %19
    %vm21 = vcmask 917312
    %22 = vst.msk [vmem:[#allocation0] sm:$0x1] %vm21, %v20
    %s23 = scalar_lea.vmem %s0, 12
    %v24 = vld [vmem:[%s23] sm:$0x1]
    %25 = vrot.lane.b32.xlu0 %v24, 96
    %v26 = vpop.permute.xlu0 %25
    %vm27 = vcmask 851712
    %28 = vst.msk [vmem:[#allocation0] sm:$0x1] %vm27, %v26
    %s29 = scalar_lea.vmem %s0, 11
    %v30 = vld [vmem:[%s29] sm:$0x1]
    %31 = vrot.lane.b32.xlu0 %v30, 88
    %v32 = vpop.permute.xlu0 %31
    %vm33 = vcmask 786112
    %34 = vst.msk [vmem:[#allocation0] sm:$0x1] %vm33, %v32
    %s35 = scalar_lea.vmem %s0, 10
    %v36 = vld [vmem:[%s35] sm:$0x1]
    %37 = vrot.lane.b32.xlu0 %v36, 80
    %v38 = vpop.permute.xlu0 %37
    %vm39 = vcmask 720512
    %40 = vst.msk [vmem:[#allocation0] sm:$0x1] %vm39, %v38
    %s41 = scalar_lea.vmem %s0, 9
    %v42 = vld [vmem:[%s41] sm:$0x1]
    %43 = vrot.lane.b32.xlu0 %v42, 72
    %v44 = vpop.permute.xlu0 %43
    %vm45 = vcmask 654912
    %46 = vst.msk [vmem:[#allocation0] sm:$0x1] %vm45, %v44
    %s47 = scalar_lea.vmem %s0, 8
    %v48 = vld [vmem:[%s47] sm:$0x1]
    %49 = vrot.lane.b32.xlu0 %v48, 64
    %v50 = vpop.permute.xlu0 %49
    %vm51 = vcmask 589312
    %52 = vst.msk [vmem:[#allocation0] sm:$0x1] %vm51, %v50
    %s53 = scalar_lea.vmem %s0, 7
    %v54 = vld [vmem:[%s53] sm:$0x1]
    %55 = vrot.lane.b32.xlu0 %v54, 56
    %v56 = vpop.permute.xlu0 %55
    %vm57 = vcmask 523712
    %58 = vst.msk [vmem:[#allocation0] sm:$0x1] %vm57, %v56
    %s59 = scalar_lea.vmem %s0, 6
    %v60 = vld [vmem:[%s59] sm:$0x1]
    %61 = vrot.lane.b32.xlu0 %v60, 48
    %v62 = vpop.permute.xlu0 %61
    %vm63 = vcmask 458112
    %64 = vst.msk [vmem:[#allocation0] sm:$0x1] %vm63, %v62
    %s65 = scalar_lea.vmem %s0, 5
    %v66 = vld [vmem:[%s65] sm:$0x1]
    %67 = vrot.lane.b32.xlu0 %v66, 40
    %v68 = vpop.permute.xlu0 %67
    %vm69 = vcmask 392512
    %70 = vst.msk [vmem:[#allocation0] sm:$0x1] %vm69, %v68
    %s71 = scalar_lea.vmem %s0, 4
    %v72 = vld [vmem:[%s71] sm:$0x1]
    %73 = vrot.lane.b32.xlu0 %v72, 32
    %v74 = vpop.permute.xlu0 %73
    %vm75 = vcmask 326912
    %76 = vst.msk [vmem:[#allocation0] sm:$0x1] %vm75, %v74
    %s77 = scalar_lea.vmem %s0, 3
    %v78 = vld [vmem:[%s77] sm:$0x1]
    %79 = vrot.lane.b32.xlu0 %v78, 24
    %v80 = vpop.permute.xlu0 %79
    %vm81 = vcmask 261312
    %82 = vst.msk [vmem:[#allocation0] sm:$0x1] %vm81, %v80
    %s83 = scalar_lea.vmem %s0, 2
    %v84 = vld [vmem:[%s83] sm:$0x1]
    %85 = vrot.lane.b32.xlu0 %v84, 16
    %v86 = vpop.permute.xlu0 %85
    %vm87 = vcmask 195712
    %88 = vst.msk [vmem:[#allocation0] sm:$0x1] %vm87, %v86
    %s89 = scalar_lea.vmem %s0, 1
    %v90 = vld [vmem:[%s89] sm:$0x1]
    %91 = vrot.lane.b32.xlu0 %v90, 8
    %v92 = vpop.permute.xlu0 %91
    %vm93 = vcmask 130112
    %94 = vst.msk [vmem:[#allocation0] sm:$0x1] %vm93, %v92
    %s96 = ssub.s32 2, 1
    %v97 = vld [vmem:[#allocation0] sm:%s96]
    %s99 = ssub.s32 2, 1
    %100 = vst [vmem:[%s1] sm:%s99] %v97

// kernel: _vgg_block_fwd.3
$region0: #{_vgg_block_fwd.3}
  #allocation0 [shape = 'u32[]', space=smem, size = 0x4, offset = 0x4, fixed_abs, tag = 'smem constant byte address 0x4 - core index']
  #allocation1 [shape = 'u32[72,128]{1,0:T(1,128)}', space=vmem, size = 0x9000, scoped, tag = 'internal scratch']
  %s0 = inlined_call_operand.vmem [shape: f32[2,16,128], index: 0, kind: input, shape index: {}, may-alias: {0,3}]
  %s1 = inlined_call_operand.vmem [shape: f32[1,128], index: 1, kind: input, shape index: {}]
  %s2 = inlined_call_operand.vmem [shape: f32[1,128], index: 2, kind: input, shape index: {}]
  %s3 = inlined_call_operand.vmem [shape: f32[2,16,128], index: 3, kind: output, shape index: {}, may-alias: {0,3}]
  %s4 = sld [smem:[#allocation0]]
  $region45: #{_vgg_block_fwd.3} parent=0
    _
  %s6 = ssub.s32 1, %s4
  %s7 = scalar_select 0, %s6, %s4
  loop: start=0, step=1, limit=4
  $region2: #{_vgg_block_fwd.3} parent=0 // loop_pre_header
    _
  $region3: #{_vgg_block_fwd.3} parent=0 // loop_header
    %s9 = sphi 0, %s13
    %p10 = scmp.ge.s32.totalorder %s9, 4
    %s19 = sphi 0, %s21
    %s22 = sphi 0, %s19
    %s23 = sphi 0, %s22
    %s39 = sphi 0, %s23
    %s43 = sphi 0, %s43
    %s45 = sphi 0, %s43
    %s46 = sphi 0, %s45
    %s60 = sphi 0, %s46
    %s64 = sphi 0, %s64
    %s66 = sphi 0, %s64
    %s67 = sphi 0, %s66
    %s81 = sphi 0, %s67
    %s87 = sphi 0, %s89
    %s90 = sphi 0, %s87
    %s91 = sphi 0, %s90
    %s107 = sphi 0, %s91
  $region4: #{_vgg_block_fwd.3} parent=0 // loop_header_branch
    %12 = sbr.rel (%p10) target = $region8
  $region5: #{_vgg_block_fwd.3} parent=0 // loop_body
    %s14 = ssub.s32 %s9, 1
    %s15 = ssub.s32 %s9, 2
    %s16 = sadd.s32 %s9, 1
    %s17 = ssub.s32 %s9, %s16
    %p18 = scmp.eq.s32.totalorder %s17, 0
    %s20 = sadd.s32 %s19, 1
    %s21 = scalar_select %p18, %s19, %s20
    %p24 = pneg %p18
    %p25 = scmp.eq.s32.totalorder %s9, 1
    %p26 = por %p24, %p25
    %p27 = scmp.ne.s32.totalorder %s19, %s22
    %p28 = scmp.eq.s32.totalorder %s9, 0
    %p29 = por %p27, %p28
    %p30 = scmp.ne.s32.totalorder %s19, %s22
    %p31 = scmp.eq.s32.totalorder %s14, 1
    %p32 = por %p30, %p31
    %p33 = scmp.ne.s32.totalorder %s22, %s23
    %p34 = scmp.eq.s32.totalorder %s14, 0
    %p35 = por %p33, %p34
    %p36 = scmp.ne.s32.totalorder %s22, %s23
    %p37 = scmp.eq.s32.totalorder %s15, 1
    %p38 = por %p36, %p37
    %p40 = scmp.ne.s32.totalorder %s23, %s39
    %p41 = scmp.eq.s32.totalorder %s15, 0
    %p42 = por %p40, %p41
    %s44 = sadd.s32 %s43, 1
    %p47 = scmp.eq.s32.totalorder %s9, 1
    %p48 = scmp.ne.s32.totalorder %s43, %s45
    %p49 = scmp.eq.s32.totalorder %s9, 0
    %p50 = por %p48, %p49
    %p51 = scmp.ne.s32.totalorder %s43, %s45
    %p52 = scmp.eq.s32.totalorder %s14, 1
    %p53 = por %p51, %p52
    %p54 = scmp.ne.s32.totalorder %s45, %s46
    %p55 = scmp.eq.s32.totalorder %s14, 0
    %p56 = por %p54, %p55
    %p57 = scmp.ne.s32.totalorder %s45, %s46
    %p58 = scmp.eq.s32.totalorder %s15, 1
    %p59 = por %p57, %p58
    %p61 = scmp.ne.s32.totalorder %s46, %s60
    %p62 = scmp.eq.s32.totalorder %s15, 0
    %p63 = por %p61, %p62
    %s65 = sadd.s32 %s64, 1
    %p68 = scmp.eq.s32.totalorder %s9, 1
    %p69 = scmp.ne.s32.totalorder %s64, %s66
    %p70 = scmp.eq.s32.totalorder %s9, 0
    %p71 = por %p69, %p70
    %p72 = scmp.ne.s32.totalorder %s64, %s66
    %p73 = scmp.eq.s32.totalorder %s14, 1
    %p74 = por %p72, %p73
    %p75 = scmp.ne.s32.totalorder %s66, %s67
    %p76 = scmp.eq.s32.totalorder %s14, 0
    %p77 = por %p75, %p76
    %p78 = scmp.ne.s32.totalorder %s66, %s67
    %p79 = scmp.eq.s32.totalorder %s15, 1
    %p80 = por %p78, %p79
    %p82 = scmp.ne.s32.totalorder %s67, %s81
    %p83 = scmp.eq.s32.totalorder %s15, 0
    %p84 = por %p82, %p83
    %s85 = ssub.s32 %s9, %s16
    %p86 = scmp.eq.s32.totalorder %s85, 0
    %s88 = sadd.s32 %s87, 1
    %s89 = scalar_select %p86, %s87, %s88
    %p92 = pneg %p86
    %p93 = scmp.eq.s32.totalorder %s9, 1
    %p94 = por %p92, %p93
    %p95 = scmp.ne.s32.totalorder %s87, %s90
    %p96 = scmp.eq.s32.totalorder %s9, 0
    %p97 = por %p95, %p96
    %p98 = scmp.ne.s32.totalorder %s87, %s90
    %p99 = scmp.eq.s32.totalorder %s14, 1
    %p100 = por %p98, %p99
    %p101 = scmp.ne.s32.totalorder %s90, %s91
    %p102 = scmp.eq.s32.totalorder %s14, 0
    %p103 = por %p101, %p102
    %p104 = scmp.ne.s32.totalorder %s90, %s91
    %p105 = scmp.eq.s32.totalorder %s15, 1
    %p106 = por %p104, %p105
    %p108 = scmp.ne.s32.totalorder %s91, %s107
    %p109 = scmp.eq.s32.totalorder %s15, 0
    %p110 = por %p108, %p109
    %p111 = scmp.le.s32.totalorder 1, %s9
    %p112 = scmp.lt.s32.totalorder %s9, 3
    %p113 = pnand %p111, %p112
    %p114 = pneg %p113
    // Predicated region
    $region9: #{_vgg_block_fwd.3} parent=5 // pred_check
      _
    $region10: #{_vgg_block_fwd.3} parent=5 // pred_check_branch
      %116 = sbr.rel (%p113) target = $region12
    $region11: #{_vgg_block_fwd.3} parent=5 // pred_region
      %s117 = ssub.s32 %s9, 1
      // Predicated region
      $region13: #{_vgg_block_fwd.3} parent=11 // pred_check
        %p118 = pneg %p56
      $region14: #{_vgg_block_fwd.3} parent=11 // pred_check_branch
        %120 = sbr.rel (%p118) target = $region16
      $region15: #{_vgg_block_fwd.3} parent=11 // pred_region
        _
      $region16: #{_vgg_block_fwd.3} parent=11 // pred_fallthru
        _
      // Predicated region
      $region17: #{_vgg_block_fwd.3} parent=11 // pred_check
        %p121 = pneg %p77
      $region18: #{_vgg_block_fwd.3} parent=11 // pred_check_branch
        %123 = sbr.rel (%p121) target = $region20
      $region19: #{_vgg_block_fwd.3} parent=11 // pred_region
        _
      $region20: #{_vgg_block_fwd.3} parent=11 // pred_fallthru
        _
    $region12: #{_vgg_block_fwd.3} parent=5 // pred_fallthru
      _
    %p124 = scmp.lt.s32.totalorder %s9, 2
    // Predicated region
    $region21: #{_vgg_block_fwd.3} parent=5 // pred_check
      %p125 = pneg %p124
    $region22: #{_vgg_block_fwd.3} parent=5 // pred_check_branch
      %127 = sbr.rel (%p125) target = $region24
    $region23: #{_vgg_block_fwd.3} parent=5 // pred_region
      // Predicated region
      $region25: #{_vgg_block_fwd.3} parent=23 // pred_check
        %p128 = pneg %p29
      $region26: #{_vgg_block_fwd.3} parent=23 // pred_check_branch
        %130 = sbr.rel (%p128) target = $region28
      $region27: #{_vgg_block_fwd.3} parent=23 // pred_region
        %p131 = scmp.lt.s32.totalorder %s9, 1
        %s132 = scalar_select %p131, %s9, 1
        %s133 = smul.addr %s132, 2
        %s134 = smul.addr %s133, 8
        %s135 = scalar_lea.vmem %s0, %s134
      $region28: #{_vgg_block_fwd.3} parent=23 // pred_fallthru
        _
    $region24: #{_vgg_block_fwd.3} parent=5 // pred_fallthru
      _
    %p136 = scmp.le.s32.totalorder 1, %s9
    %p137 = scmp.lt.s32.totalorder %s9, 3
    %p138 = pnand %p136, %p137
    %p139 = pneg %p138
    // Predicated region
    $region29: #{_vgg_block_fwd.3} parent=5 // pred_check
      _
    $region30: #{_vgg_block_fwd.3} parent=5 // pred_check_branch
      %141 = sbr.rel (%p138) target = $region32
    $region31: #{_vgg_block_fwd.3} parent=5 // pred_region
      %s142 = ssub.s32 %s9, 1
      %p143 = scmp.lt.s32.totalorder %s14, 1
      %s144 = scalar_select %p143, %s14, 1
      %s145 = smul.addr %s144, 2
      %s146 = smul.addr %s145, 8
      %s147 = scalar_lea.vmem %s0, %s146
      %p148 = pneg %p35
      %p149 = pneg %p32
      %p150 = pneg %p56
      %p151 = pneg %p53
      %p152 = pneg %p77
      %p153 = pneg %p74
      %p154 = pneg %p103
      %p155 = pneg %p100
      %p156 = scmp.lt.s32.totalorder %s14, 1
      %s157 = scalar_select %p156, %s14, 1
      %s158 = smul.addr %s157, 2
      %s159 = smul.addr %s158, 8
      %s160 = scalar_lea.vmem %s3, %s159
      %p161 = scmp.lt.s32.totalorder %s14, 1
      %s162 = scalar_select %p161, %s14, 1
      %s163 = smul.addr %s162, 2
      %s164 = smul.addr %s163, 8
      %s165 = scalar_lea.vmem %s0, %s164
      %p166 = scmp.lt.s32.totalorder %s14, 1
      %s167 = scalar_select %p166, %s14, 1
      %s168 = smul.addr %s167, 2
      %s169 = smul.addr %s168, 8
      %s170 = scalar_lea.vmem %s3, %s169
      %v171 = vld [vmem:[%s165] sm:$0xff]
      %v172 = vld [vmem:[%s165 + $0x8] sm:$0xff]
      %v173 = vld [vmem:[%s1] sm:$0x1]
      %v175 = vperm.slane %v173, 0
      %v177 = vmul.f32 %v171, %v175
      %v178 = vmul.f32 %v172, %v175
      %v179 = vld [vmem:[%s2] sm:$0x1]
      %v181 = vperm.slane %v179, 0
      %v183 = vadd.f32 %v177, %v181
      %v184 = vadd.f32 %v178, %v181
      %v185 = vmax.f32 %v183, 0.0
      %v186 = vmax.f32 %v184, 0.0
      %187 = vst [vmem:[%s170] sm:$0xff] %v185
      %188 = vst [vmem:[%s170 + $0x8] sm:$0xff] %v186
      %p189 = scmp.lt.s32.totalorder %s14, 1
      %s190 = scalar_select %p189, %s14, 1
      %s191 = smul.addr %s190, 2
      %s192 = smul.addr %s191, 8
      %s193 = scalar_lea.vmem %s3, %s192
      // Predicated region
      $region33: #{_vgg_block_fwd.3} parent=31 // pred_check
        %p194 = pneg %p100
      $region34: #{_vgg_block_fwd.3} parent=31 // pred_check_branch
        %196 = sbr.rel (%p194) target = $region36
      $region35: #{_vgg_block_fwd.3} parent=31 // pred_region
        _
      $region36: #{_vgg_block_fwd.3} parent=31 // pred_fallthru
        _
    $region32: #{_vgg_block_fwd.3} parent=5 // pred_fallthru
      _
    %p197 = scmp.le.s32.totalorder 2, %s9
    // Predicated region
    $region37: #{_vgg_block_fwd.3} parent=5 // pred_check
      %p198 = pneg %p197
    $region38: #{_vgg_block_fwd.3} parent=5 // pred_check_branch
      %200 = sbr.rel (%p198) target = $region40
    $region39: #{_vgg_block_fwd.3} parent=5 // pred_region
      %s201 = ssub.s32 %s9, 2
      // Predicated region
      $region41: #{_vgg_block_fwd.3} parent=39 // pred_check
        %p202 = pneg %p106
      $region42: #{_vgg_block_fwd.3} parent=39 // pred_check_branch
        %204 = sbr.rel (%p202) target = $region44
      $region43: #{_vgg_block_fwd.3} parent=39 // pred_region
        %p205 = scmp.lt.s32.totalorder %s15, 1
        %s206 = scalar_select %p205, %s15, 1
        %s207 = smul.addr %s206, 2
        %s208 = smul.addr %s207, 8
        %s209 = scalar_lea.vmem %s3, %s208
      $region44: #{_vgg_block_fwd.3} parent=39 // pred_fallthru
        _
    $region40: #{_vgg_block_fwd.3} parent=5 // pred_fallthru
      _
  $region6: #{_vgg_block_fwd.3} parent=0 // loop_footer
    %s13 = sadd.s32 1, %s9
  $region7: #{_vgg_block_fwd.3} parent=0 // loop_footer_branch
    %8 = sbr.rel target = $region3
  $region8: #{_vgg_block_fwd.3} parent=0 // loop_exit
    _

// kernel: _vgg_block_fwd.2
$region0: #{_vgg_block_fwd.2}
  #allocation0 [shape = 'u32[]', space=smem, size = 0x4, offset = 0x4, fixed_abs, tag = 'smem constant byte address 0x4 - core index']
  #allocation1 [shape = 'u32[72,128]{1,0:T(1,128)}', space=vmem, size = 0x9000, scoped, tag = 'internal scratch']
  #allocation2 [shape = 'bf16[256,36]{1,0:T(8,128)(2,1)}', space=vmem, size = 0x10000, scoped, tag = 'scratch operand']
  %s0 = inlined_call_operand.vmem [shape: bf16[2,18,18,4], index: 0, kind: input, shape index: {}]
  %s1 = inlined_call_operand.vmem [shape: bf16[36,8], index: 1, kind: input, shape index: {}]
  %s2 = inlined_call_operand.vmem [shape: f32[2,16,16,8], index: 2, kind: output, shape index: {0}]
  %s3 = inlined_call_operand.vmem [shape: f32[2,1,8], index: 3, kind: output, shape index: {1}]
  %s4 = inlined_call_operand.vmem [shape: f32[2,1,8], index: 4, kind: output, shape index: {2}]
  %5 = xla_tuple %s2, %s3, %s4
  %s6 = sld [smem:[#allocation0]]
  $region57: #{_vgg_block_fwd.2} parent=0
    _
  %s8 = ssub.s32 1, %s6
  %s9 = scalar_select 0, %s8, %s6
  loop: start=0, step=1, limit=4
  $region2: #{_vgg_block_fwd.2} parent=0 // loop_pre_header
    _
  $region3: #{_vgg_block_fwd.2} parent=0 // loop_header
    %s11 = sphi 0, %s15
    %p12 = scmp.ge.s32.totalorder %s11, 4
    %s21 = sphi 0, %s23
    %s24 = sphi 0, %s21
    %s25 = sphi 0, %s24
    %s41 = sphi 0, %s25
    %s45 = sphi 0, %s45
    %s47 = sphi 0, %s45
    %s48 = sphi 0, %s47
    %s62 = sphi 0, %s48
    %s68 = sphi 0, %s70
    %s71 = sphi 0, %s68
    %s72 = sphi 0, %s71
    %s88 = sphi 0, %s72
    %s94 = sphi 0, %s96
    %s97 = sphi 0, %s94
    %s98 = sphi 0, %s97
    %s114 = sphi 0, %s98
    %s120 = sphi 0, %s122
    %s123 = sphi 0, %s120
    %s124 = sphi 0, %s123
    %s140 = sphi 0, %s124
  $region4: #{_vgg_block_fwd.2} parent=0 // loop_header_branch
    %14 = sbr.rel (%p12) target = $region8
  $region5: #{_vgg_block_fwd.2} parent=0 // loop_body
    %s16 = ssub.s32 %s11, 1
    %s17 = ssub.s32 %s11, 2
    %s18 = sadd.s32 %s11, 1
    %s19 = ssub.s32 %s11, %s18
    %p20 = scmp.eq.s32.totalorder %s19, 0
    %s22 = sadd.s32 %s21, 1
    %s23 = scalar_select %p20, %s21, %s22
    %p26 = pneg %p20
    %p27 = scmp.eq.s32.totalorder %s11, 1
    %p28 = por %p26, %p27
    %p29 = scmp.ne.s32.totalorder %s21, %s24
    %p30 = scmp.eq.s32.totalorder %s11, 0
    %p31 = por %p29, %p30
    %p32 = scmp.ne.s32.totalorder %s21, %s24
    %p33 = scmp.eq.s32.totalorder %s16, 1
    %p34 = por %p32, %p33
    %p35 = scmp.ne.s32.totalorder %s24, %s25
    %p36 = scmp.eq.s32.totalorder %s16, 0
    %p37 = por %p35, %p36
    %p38 = scmp.ne.s32.totalorder %s24, %s25
    %p39 = scmp.eq.s32.totalorder %s17, 1
    %p40 = por %p38, %p39
    %p42 = scmp.ne.s32.totalorder %s25, %s41
    %p43 = scmp.eq.s32.totalorder %s17, 0
    %p44 = por %p42, %p43
    %s46 = sadd.s32 %s45, 1
    %p49 = scmp.eq.s32.totalorder %s11, 1
    %p50 = scmp.ne.s32.totalorder %s45, %s47
    %p51 = scmp.eq.s32.totalorder %s11, 0
    %p52 = por %p50, %p51
    %p53 = scmp.ne.s32.totalorder %s45, %s47
    %p54 = scmp.eq.s32.totalorder %s16, 1
    %p55 = por %p53, %p54
    %p56 = scmp.ne.s32.totalorder %s47, %s48
    %p57 = scmp.eq.s32.totalorder %s16, 0
    %p58 = por %p56, %p57
    %p59 = scmp.ne.s32.totalorder %s47, %s48
    %p60 = scmp.eq.s32.totalorder %s17, 1
    %p61 = por %p59, %p60
    %p63 = scmp.ne.s32.totalorder %s48, %s62
    %p64 = scmp.eq.s32.totalorder %s17, 0
    %p65 = por %p63, %p64
    %s66 = ssub.s32 %s11, %s18
    %p67 = scmp.eq.s32.totalorder %s66, 0
    %s69 = sadd.s32 %s68, 1
    %s70 = scalar_select %p67, %s68, %s69
    %p73 = pneg %p67
    %p74 = scmp.eq.s32.totalorder %s11, 1
    %p75 = por %p73, %p74
    %p76 = scmp.ne.s32.totalorder %s68, %s71
    %p77 = scmp.eq.s32.totalorder %s11, 0
    %p78 = por %p76, %p77
    %p79 = scmp.ne.s32.totalorder %s68, %s71
    %p80 = scmp.eq.s32.totalorder %s16, 1
    %p81 = por %p79, %p80
    %p82 = scmp.ne.s32.totalorder %s71, %s72
    %p83 = scmp.eq.s32.totalorder %s16, 0
    %p84 = por %p82, %p83
    %p85 = scmp.ne.s32.totalorder %s71, %s72
    %p86 = scmp.eq.s32.totalorder %s17, 1
    %p87 = por %p85, %p86
    %p89 = scmp.ne.s32.totalorder %s72, %s88
    %p90 = scmp.eq.s32.totalorder %s17, 0
    %p91 = por %p89, %p90
    %s92 = ssub.s32 %s11, %s18
    %p93 = scmp.eq.s32.totalorder %s92, 0
    %s95 = sadd.s32 %s94, 1
    %s96 = scalar_select %p93, %s94, %s95
    %p99 = pneg %p93
    %p100 = scmp.eq.s32.totalorder %s11, 1
    %p101 = por %p99, %p100
    %p102 = scmp.ne.s32.totalorder %s94, %s97
    %p103 = scmp.eq.s32.totalorder %s11, 0
    %p104 = por %p102, %p103
    %p105 = scmp.ne.s32.totalorder %s94, %s97
    %p106 = scmp.eq.s32.totalorder %s16, 1
    %p107 = por %p105, %p106
    %p108 = scmp.ne.s32.totalorder %s97, %s98
    %p109 = scmp.eq.s32.totalorder %s16, 0
    %p110 = por %p108, %p109
    %p111 = scmp.ne.s32.totalorder %s97, %s98
    %p112 = scmp.eq.s32.totalorder %s17, 1
    %p113 = por %p111, %p112
    %p115 = scmp.ne.s32.totalorder %s98, %s114
    %p116 = scmp.eq.s32.totalorder %s17, 0
    %p117 = por %p115, %p116
    %s118 = ssub.s32 %s11, %s18
    %p119 = scmp.eq.s32.totalorder %s118, 0
    %s121 = sadd.s32 %s120, 1
    %s122 = scalar_select %p119, %s120, %s121
    %p125 = pneg %p119
    %p126 = scmp.eq.s32.totalorder %s11, 1
    %p127 = por %p125, %p126
    %p128 = scmp.ne.s32.totalorder %s120, %s123
    %p129 = scmp.eq.s32.totalorder %s11, 0
    %p130 = por %p128, %p129
    %p131 = scmp.ne.s32.totalorder %s120, %s123
    %p132 = scmp.eq.s32.totalorder %s16, 1
    %p133 = por %p131, %p132
    %p134 = scmp.ne.s32.totalorder %s123, %s124
    %p135 = scmp.eq.s32.totalorder %s16, 0
    %p136 = por %p134, %p135
    %p137 = scmp.ne.s32.totalorder %s123, %s124
    %p138 = scmp.eq.s32.totalorder %s17, 1
    %p139 = por %p137, %p138
    %p141 = scmp.ne.s32.totalorder %s124, %s140
    %p142 = scmp.eq.s32.totalorder %s17, 0
    %p143 = por %p141, %p142
    %p144 = scmp.le.s32.totalorder 1, %s11
    %p145 = scmp.lt.s32.totalorder %s11, 3
    %p146 = pnand %p144, %p145
    %p147 = pneg %p146
    // Predicated region
    $region9: #{_vgg_block_fwd.2} parent=5 // pred_check
      _
    $region10: #{_vgg_block_fwd.2} parent=5 // pred_check_branch
      %149 = sbr.rel (%p146) target = $region12
    $region11: #{_vgg_block_fwd.2} parent=5 // pred_region
      %s150 = ssub.s32 %s11, 1
      // Predicated region
      $region13: #{_vgg_block_fwd.2} parent=11 // pred_check
        %p151 = pneg %p58
      $region14: #{_vgg_block_fwd.2} parent=11 // pred_check_branch
        %153 = sbr.rel (%p151) target = $region16
      $region15: #{_vgg_block_fwd.2} parent=11 // pred_region
        _
      $region16: #{_vgg_block_fwd.2} parent=11 // pred_fallthru
        _
    $region12: #{_vgg_block_fwd.2} parent=5 // pred_fallthru
      _
    %p154 = scmp.lt.s32.totalorder %s11, 2
    // Predicated region
    $region17: #{_vgg_block_fwd.2} parent=5 // pred_check
      %p155 = pneg %p154
    $region18: #{_vgg_block_fwd.2} parent=5 // pred_check_branch
      %157 = sbr.rel (%p155) target = $region20
    $region19: #{_vgg_block_fwd.2} parent=5 // pred_region
      // Predicated region
      $region21: #{_vgg_block_fwd.2} parent=19 // pred_check
        %p158 = pneg %p31
      $region22: #{_vgg_block_fwd.2} parent=19 // pred_check_branch
        %160 = sbr.rel (%p158) target = $region24
      $region23: #{_vgg_block_fwd.2} parent=19 // pred_region
        %p161 = scmp.lt.s32.totalorder %s11, 1
        %s162 = scalar_select %p161, %s11, 1
        %s163 = smul.addr %s162, 54
        %s164 = smul.addr %s163, 4
        %s165 = scalar_lea.vmem %s0, %s164
      $region24: #{_vgg_block_fwd.2} parent=19 // pred_fallthru
        _
    $region20: #{_vgg_block_fwd.2} parent=5 // pred_fallthru
      _
    %p166 = scmp.le.s32.totalorder 1, %s11
    %p167 = scmp.lt.s32.totalorder %s11, 3
    %p168 = pnand %p166, %p167
    %p169 = pneg %p168
    // Predicated region
    $region25: #{_vgg_block_fwd.2} parent=5 // pred_check
      _
    $region26: #{_vgg_block_fwd.2} parent=5 // pred_check_branch
      %171 = sbr.rel (%p168) target = $region28
    $region27: #{_vgg_block_fwd.2} parent=5 // pred_region
      %s172 = ssub.s32 %s11, 1
      %p173 = scmp.lt.s32.totalorder %s16, 1
      %s174 = scalar_select %p173, %s16, 1
      %s175 = smul.addr %s174, 54
      %s176 = smul.addr %s175, 4
      %s177 = scalar_lea.vmem %s0, %s176
      %p178 = pneg %p37
      %p179 = pneg %p34
      %p180 = pneg %p58
      %p181 = pneg %p55
      %p182 = pneg %p84
      %p183 = pneg %p81
      %p184 = scmp.lt.s32.totalorder %s16, 1
      %s185 = scalar_select %p184, %s16, 1
      %s186 = smul.addr %s185, 32
      %s187 = smul.addr %s186, 8
      %s188 = scalar_lea.vmem %s2, %s187
      %p189 = pneg %p110
      %p190 = pneg %p107
      %p191 = scmp.lt.s32.totalorder %s16, 1
      %s192 = scalar_select %p191, %s16, 1
      %s193 = scalar_lea.vmem %s3, %s192
      %p194 = pneg %p136
      %p195 = pneg %p133
      %p196 = scmp.lt.s32.totalorder %s16, 1
      %s197 = scalar_select %p196, %s16, 1
      %s198 = scalar_lea.vmem %s4, %s197
      %p199 = scmp.lt.s32.totalorder %s16, 1
      %s200 = scalar_select %p199, %s16, 1
      %s201 = smul.addr %s200, 54
      %s202 = smul.addr %s201, 4
      %s203 = scalar_lea.vmem %s0, %s202
      %p204 = scmp.lt.s32.totalorder %s16, 1
      %s205 = scalar_select %p204, %s16, 1
      %s206 = smul.addr %s205, 32
      %s207 = smul.addr %s206, 8
      %s208 = scalar_lea.vmem %s2, %s207
      %p209 = scmp.lt.s32.totalorder %s16, 1
      %s210 = scalar_select %p209, %s16, 1
      %s211 = scalar_lea.vmem %s3, %s210
      %p212 = scmp.lt.s32.totalorder %s16, 1
      %s213 = scalar_select %p212, %s16, 1
      %s214 = scalar_lea.vmem %s4, %s213
      %v216 = vld [vmem:[%s203] sm:$0xf]
      %v217 = vld [vmem:[%s203 + $0x4] sm:$0xf]
      %v218 = vld [vmem:[%s203 + $0xc] sm:$0xf]
      %v219 = vld [vmem:[%s203 + $0x10] sm:$0xf]
      %v220 = vld [vmem:[%s203 + $0x18] sm:$0xf]
      %v221 = vld [vmem:[%s203 + $0x1c] sm:$0xf]
      %v222 = vld [vmem:[%s203 + $0x24] sm:$0xf]
      %v223 = vld [vmem:[%s203 + $0x28] sm:$0xf]
      %v224 = vld [vmem:[%s203 + $0x30] sm:$0xf]
      %v225 = vld [vmem:[%s203 + $0x34] sm:$0xf]
      %v226 = vld [vmem:[%s203 + $0x3c] sm:$0xf]
      %v227 = vld [vmem:[%s203 + $0x40] sm:$0xf]
      %v228 = vld [vmem:[%s203 + $0x48] sm:$0xf]
      %v229 = vld [vmem:[%s203 + $0x4c] sm:$0xf]
      %v230 = vld [vmem:[%s203 + $0x54] sm:$0xf]
      %v231 = vld [vmem:[%s203 + $0x58] sm:$0xf]
      %v232 = vld [vmem:[%s203 + $0x60] sm:$0xf]
      %v233 = vld [vmem:[%s203 + $0x64] sm:$0xf]
      %v234 = vld [vmem:[%s203 + $0x6c] sm:$0xf]
      %v235 = vld [vmem:[%s203 + $0x70] sm:$0xf]
      %v236 = vld [vmem:[%s203 + $0x78] sm:$0xf]
      %v237 = vld [vmem:[%s203 + $0x7c] sm:$0xf]
      %v238 = vld [vmem:[%s203 + $0x84] sm:$0xf]
      %v239 = vld [vmem:[%s203 + $0x88] sm:$0xf]
      %v240 = vld [vmem:[%s203 + $0x90] sm:$0xf]
      %v241 = vld [vmem:[%s203 + $0x94] sm:$0xf]
      %v242 = vld [vmem:[%s203 + $0x9c] sm:$0xf]
      %v243 = vld [vmem:[%s203 + $0xa0] sm:$0xf]
      %v244 = vld [vmem:[%s203 + $0xa8] sm:$0xf]
      %v245 = vld [vmem:[%s203 + $0xac] sm:$0xf]
      %v246 = vld [vmem:[%s203 + $0xb4] sm:$0xf]
      %v247 = vld [vmem:[%s203 + $0xb8] sm:$0xf]
      %vm248 = vcmask 27648
      %249 = vst.msk [vmem:[#allocation2] sm:$0xf] %vm248, %v216
      %250 = vst.msk [vmem:[#allocation2 + $0x4] sm:$0xf] %vm248, %v217
      %251 = vst.msk [vmem:[#allocation2 + $0x8] sm:$0xf] %vm248, %v218
      %252 = vst.msk [vmem:[#allocation2 + $0xc] sm:$0xf] %vm248, %v219
      %253 = vst.msk [vmem:[#allocation2 + $0x10] sm:$0xf] %vm248, %v220
      %254 = vst.msk [vmem:[#allocation2 + $0x14] sm:$0xf] %vm248, %v221
      %255 = vst.msk [vmem:[#allocation2 + $0x18] sm:$0xf] %vm248, %v222
      %256 = vst.msk [vmem:[#allocation2 + $0x1c] sm:$0xf] %vm248, %v223
      %257 = vst.msk [vmem:[#allocation2 + $0x20] sm:$0xf] %vm248, %v224
      %258 = vst.msk [vmem:[#allocation2 + $0x24] sm:$0xf] %vm248, %v225
      %259 = vst.msk [vmem:[#allocation2 + $0x28] sm:$0xf] %vm248, %v226
      %260 = vst.msk [vmem:[#allocation2 + $0x2c] sm:$0xf] %vm248, %v227
      %261 = vst.msk [vmem:[#allocation2 + $0x30] sm:$0xf] %vm248, %v228
      %262 = vst.msk [vmem:[#allocation2 + $0x34] sm:$0xf] %vm248, %v229
      %263 = vst.msk [vmem:[#allocation2 + $0x38] sm:$0xf] %vm248, %v230
      %264 = vst.msk [vmem:[#allocation2 + $0x3c] sm:$0xf] %vm248, %v231
      %265 = vst.msk [vmem:[#allocation2 + $0x40] sm:$0xf] %vm248, %v232
      %266 = vst.msk [vmem:[#allocation2 + $0x44] sm:$0xf] %vm248, %v233
      %267 = vst.msk [vmem:[#allocation2 + $0x48] sm:$0xf] %vm248, %v234
      %268 = vst.msk [vmem:[#allocation2 + $0x4c] sm:$0xf] %vm248, %v235
      %269 = vst.msk [vmem:[#allocation2 + $0x50] sm:$0xf] %vm248, %v236
      %270 = vst.msk [vmem:[#allocation2 + $0x54] sm:$0xf] %vm248, %v237
      %271 = vst.msk [vmem:[#allocation2 + $0x58] sm:$0xf] %vm248, %v238
      %272 = vst.msk [vmem:[#allocation2 + $0x5c] sm:$0xf] %vm248, %v239
      %273 = vst.msk [vmem:[#allocation2 + $0x60] sm:$0xf] %vm248, %v240
      %274 = vst.msk [vmem:[#allocation2 + $0x64] sm:$0xf] %vm248, %v241
      %275 = vst.msk [vmem:[#allocation2 + $0x68] sm:$0xf] %vm248, %v242
      %276 = vst.msk [vmem:[#allocation2 + $0x6c] sm:$0xf] %vm248, %v243
      %277 = vst.msk [vmem:[#allocation2 + $0x70] sm:$0xf] %vm248, %v244
      %278 = vst.msk [vmem:[#allocation2 + $0x74] sm:$0xf] %vm248, %v245
      %279 = vst.msk [vmem:[#allocation2 + $0x78] sm:$0xf] %vm248, %v246
      %280 = vst.msk [vmem:[#allocation2 + $0x7c] sm:$0xf] %vm248, %v247
      %v281 = vld [vmem:[%s203] sm:$0xf]
      %v282 = vld [vmem:[%s203 + $0x4] sm:$0xf]
      %v283 = vld [vmem:[%s203 + $0x8] sm:$0x1]
      %v284 = vld [vmem:[%s203 + $0xc] sm:$0xf]
      %v285 = vld [vmem:[%s203 + $0x10] sm:$0xf]
      %v286 = vld [vmem:[%s203 + $0x14] sm:$0x1]
      %v287 = vld [vmem:[%s203 + $0x18] sm:$0xf]
      %v288 = vld [vmem:[%s203 + $0x1c] sm:$0xf]
      %v289 = vld [vmem:[%s203 + $0x20] sm:$0x1]
      %v290 = vld [vmem:[%s203 + $0x24] sm:$0xf]
      %v291 = vld [vmem:[%s203 + $0x28] sm:$0xf]
      %v292 = vld [vmem:[%s203 + $0x2c] sm:$0x1]
      %v293 = vld [vmem:[%s203 + $0x30] sm:$0xf]
      %v294 = vld [vmem:[%s203 + $0x34] sm:$0xf]
      %v295 = vld [vmem:[%s203 + $0x38] sm:$0x1]
      %v296 = vld [vmem:[%s203 + $0x3c] sm:$0xf]
      %v297 = vld [vmem:[%s203 + $0x40] sm:$0xf]
      %v298 = vld [vmem:[%s203 + $0x44] sm:$0x1]
      %v299 = vld [vmem:[%s203 + $0x48] sm:$0xf]
      %v300 = vld [vmem:[%s203 + $0x4c] sm:$0xf]
      %v301 = vld [vmem:[%s203 + $0x50] sm:$0x1]
      %v302 = vld [vmem:[%s203 + $0x54] sm:$0xf]
      %v303 = vld [vmem:[%s203 + $0x58] sm:$0xf]
      %v304 = vld [vmem:[%s203 + $0x5c] sm:$0x1]
      %v305 = vld [vmem:[%s203 + $0x60] sm:$0xf]
      %v306 = vld [vmem:[%s203 + $0x64] sm:$0xf]
      %v307 = vld [vmem:[%s203 + $0x68] sm:$0x1]
      %v308 = vld [vmem:[%s203 + $0x6c] sm:$0xf]
      %v309 = vld [vmem:[%s203 + $0x70] sm:$0xf]
      %v310 = vld [vmem:[%s203 + $0x74] sm:$0x1]
      %v311 = vld [vmem:[%s203 + $0x78] sm:$0xf]
      %v312 = vld [vmem:[%s203 + $0x7c] sm:$0xf]
      %v313 = vld [vmem:[%s203 + $0x80] sm:$0x1]
      %v314 = vld [vmem:[%s203 + $0x84] sm:$0xf]
      %v315 = vld [vmem:[%s203 + $0x88] sm:$0xf]
      %v316 = vld [vmem:[%s203 + $0x8c] sm:$0x1]
      %v317 = vld [vmem:[%s203 + $0x90] sm:$0xf]
      %v318 = vld [vmem:[%s203 + $0x94] sm:$0xf]
      %v319 = vld [vmem:[%s203 + $0x98] sm:$0x1]
      %v320 = vld [vmem:[%s203 + $0x9c] sm:$0xf]
      %v321 = vld [vmem:[%s203 + $0xa0] sm:$0xf]
      %v322 = vld [vmem:[%s203 + $0xa4] sm:$0x1]
      %v323 = vld [vmem:[%s203 + $0xa8] sm:$0xf]
      %v324 = vld [vmem:[%s203 + $0xac] sm:$0xf]
      %v325 = vld [vmem:[%s203 + $0xb0] sm:$0x1]
      %v326 = vld [vmem:[%s203 + $0xb4] sm:$0xf]
      %v327 = vld [vmem:[%s203 + $0xb8] sm:$0xf]
      %v328 = vld [vmem:[%s203 + $0xbc] sm:$0x1]
      %vm329 = vsmask.f32 3328
      %vm330 = vsmask.f32 7440
      %vm331 = vmor %vm329, %vm330
      %v333 = vshrl.u32 %v281, 16
      %v335 = vrot.slane %v333, 4
      %v336 = vshll.u32 %v281, 16
      %v338 = vrot.slane %v336, 5
      %v339 = vor.u32 %v335, %v338
      %v340 = vrot.slane %v339, 4
      %v342 = vshll.u32 %v282, 16
      %v344 = vrot.slane %v342, 5
      %v345 = vsel %vm331, %v340, %v344
      %v346 = vshrl.u32 %v282, 16
      %v348 = vrot.slane %v346, 4
      %v349 = vor.u32 %v348, %v344
      %v350 = vrot.slane %v349, 4
      %v352 = vshll.u32 %v283, 16
      %v354 = vrot.slane %v352, 5
      %v355 = vsel %vm331, %v350, %v354
      %v357 = vshrl.u32 %v284, 16
      %v359 = vrot.slane %v357, 4
      %v360 = vshll.u32 %v284, 16
      %v362 = vrot.slane %v360, 5
      %v363 = vor.u32 %v359, %v362
      %v364 = vrot.slane %v363, 4
      %v366 = vshll.u32 %v285, 16
      %v368 = vrot.slane %v366, 5
      %v369 = vsel %vm331, %v364, %v368
      %v370 = vshrl.u32 %v285, 16
      %v372 = vrot.slane %v370, 4
      %v373 = vor.u32 %v372, %v368
      %v374 = vrot.slane %v373, 4
      %v376 = vshll.u32 %v286, 16
      %v378 = vrot.slane %v376, 5
      %v379 = vsel %vm331, %v374, %v378
      %v381 = vshrl.u32 %v287, 16
      %v383 = vrot.slane %v381, 4
      %v384 = vshll.u32 %v287, 16
      %v386 = vrot.slane %v384, 5
      %v387 = vor.u32 %v383, %v386
      %v388 = vrot.slane %v387, 4
      %v390 = vshll.u32 %v288, 16
      %v392 = vrot.slane %v390, 5
      %v393 = vsel %vm331, %v388, %v392
      %v394 = vshrl.u32 %v288, 16
      %v396 = vrot.slane %v394, 4
      %v397 = vor.u32 %v396, %v392
      %v398 = vrot.slane %v397, 4
      %v400 = vshll.u32 %v289, 16
      %v402 = vrot.slane %v400, 5
      %v403 = vsel %vm331, %v398, %v402
      %v405 = vshrl.u32 %v290, 16
      %v407 = vrot.slane %v405, 4
      %v408 = vshll.u32 %v290, 16
      %v410 = vrot.slane %v408, 5
      %v411 = vor.u32 %v407, %v410
      %v412 = vrot.slane %v411, 4
      %v414 = vshll.u32 %v291, 16
      %v416 = vrot.slane %v414, 5
      %v417 = vsel %vm331, %v412, %v416
      %v418 = vshrl.u32 %v291, 16
      %v420 = vrot.slane %v418, 4
      %v421 = vor.u32 %v420, %v416
      %v422 = vrot.slane %v421, 4
      %v424 = vshll.u32 %v292, 16
      %v426 = vrot.slane %v424, 5
      %v427 = vsel %vm331, %v422, %v426
      %v429 = vshrl.u32 %v293, 16
      %v431 = vrot.slane %v429, 4
      %v432 = vshll.u32 %v293, 16
      %v434 = vrot.slane %v432, 5
      %v435 = vor.u32 %v431, %v434
      %v436 = vrot.slane %v435, 4
      %v438 = vshll.u32 %v294, 16
      %v440 = vrot.slane %v438, 5
      %v441 = vsel %vm331, %v436, %v440
      %v442 = vshrl.u32 %v294, 16
      %v444 = vrot.slane %v442, 4
      %v445 = vor.u32 %v444, %v440
      %v446 = vrot.slane %v445, 4
      %v448 = vshll.u32 %v295, 16
      %v450 = vrot.slane %v448, 5
      %v451 = vsel %vm331, %v446, %v450
      %v453 = vshrl.u32 %v296, 16
      %v455 = vrot.slane %v453, 4
      %v456 = vshll.u32 %v296, 16
      %v458 = vrot.slane %v456, 5
      %v459 = vor.u32 %v455, %v458
      %v460 = vrot.slane %v459, 4
      %v462 = vshll.u32 %v297, 16
      %v464 = vrot.slane %v462, 5
      %v465 = vsel %vm331, %v460, %v464
      %v466 = vshrl.u32 %v297, 16
      %v468 = vrot.slane %v466, 4
      %v469 = vor.u32 %v468, %v464
      %v470 = vrot.slane %v469, 4
      %v472 = vshll.u32 %v298, 16
      %v474 = vrot.slane %v472, 5
      %v475 = vsel %vm331, %v470, %v474
      %v477 = vshrl.u32 %v299, 16
      %v479 = vrot.slane %v477, 4
      %v480 = vshll.u32 %v299, 16
      %v482 = vrot.slane %v480, 5
      %v483 = vor.u32 %v479, %v482
      %v484 = vrot.slane %v483, 4
      %v486 = vshll.u32 %v300, 16
      %v488 = vrot.slane %v486, 5
      %v489 = vsel %vm331, %v484, %v488
      %v490 = vshrl.u32 %v300, 16
      %v492 = vrot.slane %v490, 4
      %v493 = vor.u32 %v492, %v488
      %v494 = vrot.slane %v493, 4
      %v496 = vshll.u32 %v301, 16
      %v498 = vrot.slane %v496, 5
      %v499 = vsel %vm331, %v494, %v498
      %v501 = vshrl.u32 %v302, 16
      %v503 = vrot.slane %v501, 4
      %v504 = vshll.u32 %v302, 16
      %v506 = vrot.slane %v504, 5
      %v507 = vor.u32 %v503, %v506
      %v508 = vrot.slane %v507, 4
      %v510 = vshll.u32 %v303, 16
      %v512 = vrot.slane %v510, 5
      %v513 = vsel %vm331, %v508, %v512
      %v514 = vshrl.u32 %v303, 16
      %v516 = vrot.slane %v514, 4
      %v517 = vor.u32 %v516, %v512
      %v518 = vrot.slane %v517, 4
      %v520 = vshll.u32 %v304, 16
      %v522 = vrot.slane %v520, 5
      %v523 = vsel %vm331, %v518, %v522
      %v525 = vshrl.u32 %v305, 16
      %v527 = vrot.slane %v525, 4
      %v528 = vshll.u32 %v305, 16
      %v530 = vrot.slane %v528, 5
      %v531 = vor.u32 %v527, %v530
      %v532 = vrot.slane %v531, 4
      %v534 = vshll.u32 %v306, 16
      %v536 = vrot.slane %v534, 5
      %v537 = vsel %vm331, %v532, %v536
      %v538 = vshrl.u32 %v306, 16
      %v540 = vrot.slane %v538, 4
      %v541 = vor.u32 %v540, %v536
      %v542 = vrot.slane %v541, 4
      %v544 = vshll.u32 %v307, 16
      %v546 = vrot.slane %v544, 5
      %v547 = vsel %vm331, %v542, %v546
      %v549 = vshrl.u32 %v308, 16
      %v551 = vrot.slane %v549, 4
      %v552 = vshll.u32 %v308, 16
      %v554 = vrot.slane %v552, 5
      %v555 = vor.u32 %v551, %v554
      %v556 = vrot.slane %v555, 4
      %v558 = vshll.u32 %v309, 16
      %v560 = vrot.slane %v558, 5
      %v561 = vsel %vm331, %v556, %v560
      %v562 = vshrl.u32 %v309, 16
      %v564 = vrot.slane %v562, 4
      %v565 = vor.u32 %v564, %v560
      %v566 = vrot.slane %v565, 4
      %v568 = vshll.u32 %v310, 16
      %v570 = vrot.slane %v568, 5
      %v571 = vsel %vm331, %v566, %v570
      %v573 = vshrl.u32 %v311, 16
      %v575 = vrot.slane %v573, 4
      %v576 = vshll.u32 %v311, 16
      %v578 = vrot.slane %v576, 5
      %v579 = vor.u32 %v575, %v578
      %v580 = vrot.slane %v579, 4
      %v582 = vshll.u32 %v312, 16
      %v584 = vrot.slane %v582, 5
      %v585 = vsel %vm331, %v580, %v584
      %v586 = vshrl.u32 %v312, 16
      %v588 = vrot.slane %v586, 4
      %v589 = vor.u32 %v588, %v584
      %v590 = vrot.slane %v589, 4
      %v592 = vshll.u32 %v313, 16
      %v594 = vrot.slane %v592, 5
      %v595 = vsel %vm331, %v590, %v594
      %v597 = vshrl.u32 %v314, 16
      %v599 = vrot.slane %v597, 4
      %v600 = vshll.u32 %v314, 16
      %v602 = vrot.slane %v600, 5
      %v603 = vor.u32 %v599, %v602
      %v604 = vrot.slane %v603, 4
      %v606 = vshll.u32 %v315, 16
      %v608 = vrot.slane %v606, 5
      %v609 = vsel %vm331, %v604, %v608
      %v610 = vshrl.u32 %v315, 16
      %v612 = vrot.slane %v610, 4
      %v613 = vor.u32 %v612, %v608
      %v614 = vrot.slane %v613, 4
      %v616 = vshll.u32 %v316, 16
      %v618 = vrot.slane %v616, 5
      %v619 = vsel %vm331, %v614, %v618
      %v621 = vshrl.u32 %v317, 16
      %v623 = vrot.slane %v621, 4
      %v624 = vshll.u32 %v317, 16
      %v626 = vrot.slane %v624, 5
      %v627 = vor.u32 %v623, %v626
      %v628 = vrot.slane %v627, 4
      %v630 = vshll.u32 %v318, 16
      %v632 = vrot.slane %v630, 5
      %v633 = vsel %vm331, %v628, %v632
      %v634 = vshrl.u32 %v318, 16
      %v636 = vrot.slane %v634, 4
      %v637 = vor.u32 %v636, %v632
      %v638 = vrot.slane %v637, 4
      %v640 = vshll.u32 %v319, 16
      %v642 = vrot.slane %v640, 5
      %v643 = vsel %vm331, %v638, %v642
      %v645 = vshrl.u32 %v320, 16
      %v647 = vrot.slane %v645, 4
      %v648 = vshll.u32 %v320, 16
      %v650 = vrot.slane %v648, 5
      %v651 = vor.u32 %v647, %v650
      %v652 = vrot.slane %v651, 4
      %v654 = vshll.u32 %v321, 16
      %v656 = vrot.slane %v654, 5
      %v657 = vsel %vm331, %v652, %v656
      %v658 = vshrl.u32 %v321, 16
      %v660 = vrot.slane %v658, 4
      %v661 = vor.u32 %v660, %v656
      %v662 = vrot.slane %v661, 4
      %v664 = vshll.u32 %v322, 16
      %v666 = vrot.slane %v664, 5
      %v667 = vsel %vm331, %v662, %v666
      %v669 = vshrl.u32 %v323, 16
      %v671 = vrot.slane %v669, 4
      %v672 = vshll.u32 %v323, 16
      %v674 = vrot.slane %v672, 5
      %v675 = vor.u32 %v671, %v674
      %v676 = vrot.slane %v675, 4
      %v678 = vshll.u32 %v324, 16
      %v680 = vrot.slane %v678, 5
      %v681 = vsel %vm331, %v676, %v680
      %v682 = vshrl.u32 %v324, 16
      %v684 = vrot.slane %v682, 4
      %v685 = vor.u32 %v684, %v680
      %v686 = vrot.slane %v685, 4
      %v688 = vshll.u32 %v325, 16
      %v690 = vrot.slane %v688, 5
      %v691 = vsel %vm331, %v686, %v690
      %v693 = vshrl.u32 %v326, 16
      %v695 = vrot.slane %v693, 4
      %v696 = vshll.u32 %v326, 16
      %v698 = vrot.slane %v696, 5
      %v699 = vor.u32 %v695, %v698
      %v700 = vrot.slane %v699, 4
      %v702 = vshll.u32 %v327, 16
      %v704 = vrot.slane %v702, 5
      %v705 = vsel %vm331, %v700, %v704
      %v706 = vshrl.u32 %v327, 16
      %v708 = vrot.slane %v706, 4
      %v709 = vor.u32 %v708, %v704
      %v710 = vrot.slane %v709, 4
      %v712 = vshll.u32 %v328, 16
      %v714 = vrot.slane %v712, 5
      %v715 = vsel %vm331, %v710, %v714
      %716 = vrot.lane.b32.xlu0 %v345, 4
      %v717 = vpop.permute.xlu0 %716
      %718 = vrot.lane.b32.xlu0 %v355, 4
      %v719 = vpop.permute.xlu0 %718
      %720 = vrot.lane.b32.xlu0 %v369, 4
      %v721 = vpop.permute.xlu0 %720
      %722 = vrot.lane.b32.xlu0 %v379, 4
      %v723 = vpop.permute.xlu0 %722
      %724 = vrot.lane.b32.xlu0 %v393, 4
      %v725 = vpop.permute.xlu0 %724
      %726 = vrot.lane.b32.xlu0 %v403, 4
      %v727 = vpop.permute.xlu0 %726
      %728 = vrot.lane.b32.xlu0 %v417, 4
      %v729 = vpop.permute.xlu0 %728
      %730 = vrot.lane.b32.xlu0 %v427, 4
      %v731 = vpop.permute.xlu0 %730
      %732 = vrot.lane.b32.xlu0 %v441, 4
      %v733 = vpop.permute.xlu0 %732
      %734 = vrot.lane.b32.xlu0 %v451, 4
      %v735 = vpop.permute.xlu0 %734
      %736 = vrot.lane.b32.xlu0 %v465, 4
      %v737 = vpop.permute.xlu0 %736
      %738 = vrot.lane.b32.xlu0 %v475, 4
      %v739 = vpop.permute.xlu0 %738
      %740 = vrot.lane.b32.xlu0 %v489, 4
      %v741 = vpop.permute.xlu0 %740
      %742 = vrot.lane.b32.xlu0 %v499, 4
      %v743 = vpop.permute.xlu0 %742
      %744 = vrot.lane.b32.xlu0 %v513, 4
      %v745 = vpop.permute.xlu0 %744
      %746 = vrot.lane.b32.xlu0 %v523, 4
      %v747 = vpop.permute.xlu0 %746
      %748 = vrot.lane.b32.xlu0 %v537, 4
      %v749 = vpop.permute.xlu0 %748
      %750 = vrot.lane.b32.xlu0 %v547, 4
      %v751 = vpop.permute.xlu0 %750
      %752 = vrot.lane.b32.xlu0 %v561, 4
      %v753 = vpop.permute.xlu0 %752
      %754 = vrot.lane.b32.xlu0 %v571, 4
      %v755 = vpop.permute.xlu0 %754
      %756 = vrot.lane.b32.xlu0 %v585, 4
      %v757 = vpop.permute.xlu0 %756
      %758 = vrot.lane.b32.xlu0 %v595, 4
      %v759 = vpop.permute.xlu0 %758
      %760 = vrot.lane.b32.xlu0 %v609, 4
      %v761 = vpop.permute.xlu0 %760
      %762 = vrot.lane.b32.xlu0 %v619, 4
      %v763 = vpop.permute.xlu0 %762
      %764 = vrot.lane.b32.xlu0 %v633, 4
      %v765 = vpop.permute.xlu0 %764
      %766 = vrot.lane.b32.xlu0 %v643, 4
      %v767 = vpop.permute.xlu0 %766
      %768 = vrot.lane.b32.xlu0 %v657, 4
      %v769 = vpop.permute.xlu0 %768
      %770 = vrot.lane.b32.xlu0 %v667, 4
      %v771 = vpop.permute.xlu0 %770
      %772 = vrot.lane.b32.xlu0 %v681, 4
      %v773 = vpop.permute.xlu0 %772
      %774 = vrot.lane.b32.xlu0 %v691, 4
      %v775 = vpop.permute.xlu0 %774
      %776 = vrot.lane.b32.xlu0 %v705, 4
      %v777 = vpop.permute.xlu0 %776
      %778 = vrot.lane.b32.xlu0 %v715, 4
      %v779 = vpop.permute.xlu0 %778
      %vm812 = vcmask 60448
      %813 = vst.msk [vmem:[#allocation2] sm:$0xf] %vm812, %v717
      %814 = vst.msk [vmem:[#allocation2 + $0x4] sm:$0xf] %vm812, %v719
      %815 = vst.msk [vmem:[#allocation2 + $0x8] sm:$0xf] %vm812, %v721
      %816 = vst.msk [vmem:[#allocation2 + $0xc] sm:$0xf] %vm812, %v723
      %817 = vst.msk [vmem:[#allocation2 + $0x10] sm:$0xf] %vm812, %v725
      %818 = vst.msk [vmem:[#allocation2 + $0x14] sm:$0xf] %vm812, %v727
      %819 = vst.msk [vmem:[#allocation2 + $0x18] sm:$0xf] %vm812, %v729
      %820 = vst.msk [vmem:[#allocation2 + $0x1c] sm:$0xf] %vm812, %v731
      %821 = vst.msk [vmem:[#allocation2 + $0x20] sm:$0xf] %vm812, %v733
      %822 = vst.msk [vmem:[#allocation2 + $0x24] sm:$0xf] %vm812, %v735
      %823 = vst.msk [vmem:[#allocation2 + $0x28] sm:$0xf] %vm812, %v737
      %824 = vst.msk [vmem:[#allocation2 + $0x2c] sm:$0xf] %vm812, %v739
      %825 = vst.msk [vmem:[#allocation2 + $0x30] sm:$0xf] %vm812, %v741
      %826 = vst.msk [vmem:[#allocation2 + $0x34] sm:$0xf] %vm812, %v743
      %827 = vst.msk [vmem:[#allocation2 + $0x38] sm:$0xf] %vm812, %v745
      %828 = vst.msk [vmem:[#allocation2 + $0x3c] sm:$0xf] %vm812, %v747
      %829 = vst.msk [vmem:[#allocation2 + $0x40] sm:$0xf] %vm812, %v749
      %830 = vst.msk [vmem:[#allocation2 + $0x44] sm:$0xf] %vm812, %v751
      %831 = vst.msk [vmem:[#allocation2 + $0x48] sm:$0xf] %vm812, %v753
      %832 = vst.msk [vmem:[#allocation2 + $0x4c] sm:$0xf] %vm812, %v755
      %833 = vst.msk [vmem:[#allocation2 + $0x50] sm:$0xf] %vm812, %v757
      %834 = vst.msk [vmem:[#allocation2 + $0x54] sm:$0xf] %vm812, %v759
      %835 = vst.msk [vmem:[#allocation2 + $0x58] sm:$0xf] %vm812, %v761
      %836 = vst.msk [vmem:[#allocation2 + $0x5c] sm:$0xf] %vm812, %v763
      %837 = vst.msk [vmem:[#allocation2 + $0x60] sm:$0xf] %vm812, %v765
      %838 = vst.msk [vmem:[#allocation2 + $0x64] sm:$0xf] %vm812, %v767
      %839 = vst.msk [vmem:[#allocation2 + $0x68] sm:$0xf] %vm812, %v769
      %840 = vst.msk [vmem:[#allocation2 + $0x6c] sm:$0xf] %vm812, %v771
      %841 = vst.msk [vmem:[#allocation2 + $0x70] sm:$0xf] %vm812, %v773
      %842 = vst.msk [vmem:[#allocation2 + $0x74] sm:$0xf] %vm812, %v775
      %843 = vst.msk [vmem:[#allocation2 + $0x78] sm:$0xf] %vm812, %v777
      %844 = vst.msk [vmem:[#allocation2 + $0x7c] sm:$0xf] %vm812, %v779
      %v845 = vld [vmem:[%s203] sm:$0xe]
      %v846 = vld [vmem:[%s203 + $0x4] sm:$0xf]
      %v847 = vld [vmem:[%s203 + $0x8] sm:$0x1]
      %v848 = vld [vmem:[%s203 + $0xc] sm:$0xe]
      %v849 = vld [vmem:[%s203 + $0x10] sm:$0xf]
      %v850 = vld [vmem:[%s203 + $0x14] sm:$0x1]
      %v851 = vld [vmem:[%s203 + $0x18] sm:$0xe]
      %v852 = vld [vmem:[%s203 + $0x1c] sm:$0xf]
      %v853 = vld [vmem:[%s203 + $0x20] sm:$0x1]
      %v854 = vld [vmem:[%s203 + $0x24] sm:$0xe]
      %v855 = vld [vmem:[%s203 + $0x28] sm:$0xf]
      %v856 = vld [vmem:[%s203 + $0x2c] sm:$0x1]
      %v857 = vld [vmem:[%s203 + $0x30] sm:$0xe]
      %v858 = vld [vmem:[%s203 + $0x34] sm:$0xf]
      %v859 = vld [vmem:[%s203 + $0x38] sm:$0x1]
      %v860 = vld [vmem:[%s203 + $0x3c] sm:$0xe]
      %v861 = vld [vmem:[%s203 + $0x40] sm:$0xf]
      %v862 = vld [vmem:[%s203 + $0x44] sm:$0x1]
      %v863 = vld [vmem:[%s203 + $0x48] sm:$0xe]
      %v864 = vld [vmem:[%s203 + $0x4c] sm:$0xf]
      %v865 = vld [vmem:[%s203 + $0x50] sm:$0x1]
      %v866 = vld [vmem:[%s203 + $0x54] sm:$0xe]
      %v867 = vld [vmem:[%s203 + $0x58] sm:$0xf]
      %v868 = vld [vmem:[%s203 + $0x5c] sm:$0x1]
      %v869 = vld [vmem:[%s203 + $0x60] sm:$0xe]
      %v870 = vld [vmem:[%s203 + $0x64] sm:$0xf]
      %v871 = vld [vmem:[%s203 + $0x68] sm:$0x1]
      %v872 = vld [vmem:[%s203 + $0x6c] sm:$0xe]
      %v873 = vld [vmem:[%s203 + $0x70] sm:$0xf]
      %v874 = vld [vmem:[%s203 + $0x74] sm:$0x1]
      %v875 = vld [vmem:[%s203 + $0x78] sm:$0xe]
      %v876 = vld [vmem:[%s203 + $0x7c] sm:$0xf]
      %v877 = vld [vmem:[%s203 + $0x80] sm:$0x1]
      %v878 = vld [vmem:[%s203 + $0x84] sm:$0xe]
      %v879 = vld [vmem:[%s203 + $0x88] sm:$0xf]
      %v880 = vld [vmem:[%s203 + $0x8c] sm:$0x1]
      %v881 = vld [vmem:[%s203 + $0x90] sm:$0xe]
      %v882 = vld [vmem:[%s203 + $0x94] sm:$0xf]
      %v883 = vld [vmem:[%s203 + $0x98] sm:$0x1]
      %v884 = vld [vmem:[%s203 + $0x9c] sm:$0xe]
      %v885 = vld [vmem:[%s203 + $0xa0] sm:$0xf]
      %v886 = vld [vmem:[%s203 + $0xa4] sm:$0x1]
      %v887 = vld [vmem:[%s203 + $0xa8] sm:$0xe]
      %v888 = vld [vmem:[%s203 + $0xac] sm:$0xf]
      %v889 = vld [vmem:[%s203 + $0xb0] sm:$0x1]
      %v890 = vld [vmem:[%s203 + $0xb4] sm:$0xe]
      %v891 = vld [vmem:[%s203 + $0xb8] sm:$0xf]
      %v892 = vld [vmem:[%s203 + $0xbc] sm:$0x1]
      %vm941 = vcmask 1042432
      %vm942 = vcmask 1046532
      %vm943 = vmor %vm941, %vm942
      %v944 = vrot.slane %v845, 5
      %v945 = vrot.slane %v944, 4
      %v946 = vrot.slane %v846, 5
      %v947 = vsel %vm943, %v945, %v946
      %v948 = vrot.slane %v946, 4
      %v949 = vrot.slane %v847, 5
      %v950 = vsel %vm943, %v948, %v949
      %v951 = vrot.slane %v848, 5
      %v952 = vrot.slane %v951, 4
      %v953 = vrot.slane %v849, 5
      %v954 = vsel %vm943, %v952, %v953
      %v955 = vrot.slane %v953, 4
      %v956 = vrot.slane %v850, 5
      %v957 = vsel %vm943, %v955, %v956
      %v958 = vrot.slane %v851, 5
      %v959 = vrot.slane %v958, 4
      %v960 = vrot.slane %v852, 5
      %v961 = vsel %vm943, %v959, %v960
      %v962 = vrot.slane %v960, 4
      %v963 = vrot.slane %v853, 5
      %v964 = vsel %vm943, %v962, %v963
      %v965 = vrot.slane %v854, 5
      %v966 = vrot.slane %v965, 4
      %v967 = vrot.slane %v855, 5
      %v968 = vsel %vm943, %v966, %v967
      %v969 = vrot.slane %v967, 4
      %v970 = vrot.slane %v856, 5
      %v971 = vsel %vm943, %v969, %v970
      %v972 = vrot.slane %v857, 5
      %v973 = vrot.slane %v972, 4
      %v974 = vrot.slane %v858, 5
      %v975 = vsel %vm943, %v973, %v974
      %v976 = vrot.slane %v974, 4
      %v977 = vrot.slane %v859, 5
      %v978 = vsel %vm943, %v976, %v977
      %v979 = vrot.slane %v860, 5
      %v980 = vrot.slane %v979, 4
      %v981 = vrot.slane %v861, 5
      %v982 = vsel %vm943, %v980, %v981
      %v983 = vrot.slane %v981, 4
      %v984 = vrot.slane %v862, 5
      %v985 = vsel %vm943, %v983, %v984
      %v986 = vrot.slane %v863, 5
      %v987 = vrot.slane %v986, 4
      %v988 = vrot.slane %v864, 5
      %v989 = vsel %vm943, %v987, %v988
      %v990 = vrot.slane %v988, 4
      %v991 = vrot.slane %v865, 5
      %v992 = vsel %vm943, %v990, %v991
      %v993 = vrot.slane %v866, 5
      %v994 = vrot.slane %v993, 4
      %v995 = vrot.slane %v867, 5
      %v996 = vsel %vm943, %v994, %v995
      %v997 = vrot.slane %v995, 4
      %v998 = vrot.slane %v868, 5
      %v999 = vsel %vm943, %v997, %v998
      %v1000 = vrot.slane %v869, 5
      %v1001 = vrot.slane %v1000, 4
      %v1002 = vrot.slane %v870, 5
      %v1003 = vsel %vm943, %v1001, %v1002
      %v1004 = vrot.slane %v1002, 4
      %v1005 = vrot.slane %v871, 5
      %v1006 = vsel %vm943, %v1004, %v1005
      %v1007 = vrot.slane %v872, 5
      %v1008 = vrot.slane %v1007, 4
      %v1009 = vrot.slane %v873, 5
      %v1010 = vsel %vm943, %v1008, %v1009
      %v1011 = vrot.slane %v1009, 4
      %v1012 = vrot.slane %v874, 5
      %v1013 = vsel %vm943, %v1011, %v1012
      %v1014 = vrot.slane %v875, 5
      %v1015 = vrot.slane %v1014, 4
      %v1016 = vrot.slane %v876, 5
      %v1017 = vsel %vm943, %v1015, %v1016
      %v1018 = vrot.slane %v1016, 4
      %v1019 = vrot.slane %v877, 5
      %v1020 = vsel %vm943, %v1018, %v1019
      %v1021 = vrot.slane %v878, 5
      %v1022 = vrot.slane %v1021, 4
      %v1023 = vrot.slane %v879, 5
      %v1024 = vsel %vm943, %v1022, %v1023
      %v1025 = vrot.slane %v1023, 4
      %v1026 = vrot.slane %v880, 5
      %v1027 = vsel %vm943, %v1025, %v1026
      %v1028 = vrot.slane %v881, 5
      %v1029 = vrot.slane %v1028, 4
      %v1030 = vrot.slane %v882, 5
      %v1031 = vsel %vm943, %v1029, %v1030
      %v1032 = vrot.slane %v1030, 4
      %v1033 = vrot.slane %v883, 5
      %v1034 = vsel %vm943, %v1032, %v1033
      %v1035 = vrot.slane %v884, 5
      %v1036 = vrot.slane %v1035, 4
      %v1037 = vrot.slane %v885, 5
      %v1038 = vsel %vm943, %v1036, %v1037
      %v1039 = vrot.slane %v1037, 4
      %v1040 = vrot.slane %v886, 5
      %v1041 = vsel %vm943, %v1039, %v1040
      %v1042 = vrot.slane %v887, 5
      %v1043 = vrot.slane %v1042, 4
      %v1044 = vrot.slane %v888, 5
      %v1045 = vsel %vm943, %v1043, %v1044
      %v1046 = vrot.slane %v1044, 4
      %v1047 = vrot.slane %v889, 5
      %v1048 = vsel %vm943, %v1046, %v1047
      %v1049 = vrot.slane %v890, 5
      %v1050 = vrot.slane %v1049, 4
      %v1051 = vrot.slane %v891, 5
      %v1052 = vsel %vm943, %v1050, %v1051
      %v1053 = vrot.slane %v1051, 4
      %v1054 = vrot.slane %v892, 5
      %v1055 = vsel %vm943, %v1053, %v1054
      %1056 = vrot.lane.b32.xlu0 %v947, 8
      %v1057 = vpop.permute.xlu0 %1056
      %1058 = vrot.lane.b32.xlu0 %v950, 8
      %v1059 = vpop.permute.xlu0 %1058
      %1060 = vrot.lane.b32.xlu0 %v954, 8
      %v1061 = vpop.permute.xlu0 %1060
      %1062 = vrot.lane.b32.xlu0 %v957, 8
      %v1063 = vpop.permute.xlu0 %1062
      %1064 = vrot.lane.b32.xlu0 %v961, 8
      %v1065 = vpop.permute.xlu0 %1064
      %1066 = vrot.lane.b32.xlu0 %v964, 8
      %v1067 = vpop.permute.xlu0 %1066
      %1068 = vrot.lane.b32.xlu0 %v968, 8
      %v1069 = vpop.permute.xlu0 %1068
      %1070 = vrot.lane.b32.xlu0 %v971, 8
      %v1071 = vpop.permute.xlu0 %1070
      %1072 = vrot.lane.b32.xlu0 %v975, 8
      %v1073 = vpop.permute.xlu0 %1072
      %1074 = vrot.lane.b32.xlu0 %v978, 8
      %v1075 = vpop.permute.xlu0 %1074
      %1076 = vrot.lane.b32.xlu0 %v982, 8
      %v1077 = vpop.permute.xlu0 %1076
      %1078 = vrot.lane.b32.xlu0 %v985, 8
      %v1079 = vpop.permute.xlu0 %1078
      %1080 = vrot.lane.b32.xlu0 %v989, 8
      %v1081 = vpop.permute.xlu0 %1080
      %1082 = vrot.lane.b32.xlu0 %v992, 8
      %v1083 = vpop.permute.xlu0 %1082
      %1084 = vrot.lane.b32.xlu0 %v996, 8
      %v1085 = vpop.permute.xlu0 %1084
      %1086 = vrot.lane.b32.xlu0 %v999, 8
      %v1087 = vpop.permute.xlu0 %1086
      %1088 = vrot.lane.b32.xlu0 %v1003, 8
      %v1089 = vpop.permute.xlu0 %1088
      %1090 = vrot.lane.b32.xlu0 %v1006, 8
      %v1091 = vpop.permute.xlu0 %1090
      %1092 = vrot.lane.b32.xlu0 %v1010, 8
      %v1093 = vpop.permute.xlu0 %1092
      %1094 = vrot.lane.b32.xlu0 %v1013, 8
      %v1095 = vpop.permute.xlu0 %1094
      %1096 = vrot.lane.b32.xlu0 %v1017, 8
      %v1097 = vpop.permute.xlu0 %1096
      %1098 = vrot.lane.b32.xlu0 %v1020, 8
      %v1099 = vpop.permute.xlu0 %1098
      %1100 = vrot.lane.b32.xlu0 %v1024, 8
      %v1101 = vpop.permute.xlu0 %1100
      %1102 = vrot.lane.b32.xlu0 %v1027, 8
      %v1103 = vpop.permute.xlu0 %1102
      %1104 = vrot.lane.b32.xlu0 %v1031, 8
      %v1105 = vpop.permute.xlu0 %1104
      %1106 = vrot.lane.b32.xlu0 %v1034, 8
      %v1107 = vpop.permute.xlu0 %1106
      %1108 = vrot.lane.b32.xlu0 %v1038, 8
      %v1109 = vpop.permute.xlu0 %1108
      %1110 = vrot.lane.b32.xlu0 %v1041, 8
      %v1111 = vpop.permute.xlu0 %1110
      %1112 = vrot.lane.b32.xlu0 %v1045, 8
      %v1113 = vpop.permute.xlu0 %1112
      %1114 = vrot.lane.b32.xlu0 %v1048, 8
      %v1115 = vpop.permute.xlu0 %1114
      %1116 = vrot.lane.b32.xlu0 %v1052, 8
      %v1117 = vpop.permute.xlu0 %1116
      %1118 = vrot.lane.b32.xlu0 %v1055, 8
      %v1119 = vpop.permute.xlu0 %1118
      %vm1152 = vcmask 93248
      %1153 = vst.msk [vmem:[#allocation2] sm:$0xf] %vm1152, %v1057
      %1154 = vst.msk [vmem:[#allocation2 + $0x4] sm:$0xf] %vm1152, %v1059
      %1155 = vst.msk [vmem:[#allocation2 + $0x8] sm:$0xf] %vm1152, %v1061
      %1156 = vst.msk [vmem:[#allocation2 + $0xc] sm:$0xf] %vm1152, %v1063
      %1157 = vst.msk [vmem:[#allocation2 + $0x10] sm:$0xf] %vm1152, %v1065
      %1158 = vst.msk [vmem:[#allocation2 + $0x14] sm:$0xf] %vm1152, %v1067
      %1159 = vst.msk [vmem:[#allocation2 + $0x18] sm:$0xf] %vm1152, %v1069
      %1160 = vst.msk [vmem:[#allocation2 + $0x1c] sm:$0xf] %vm1152, %v1071
      %1161 = vst.msk [vmem:[#allocation2 + $0x20] sm:$0xf] %vm1152, %v1073
      %1162 = vst.msk [vmem:[#allocation2 + $0x24] sm:$0xf] %vm1152, %v1075
      %1163 = vst.msk [vmem:[#allocation2 + $0x28] sm:$0xf] %vm1152, %v1077
      %1164 = vst.msk [vmem:[#allocation2 + $0x2c] sm:$0xf] %vm1152, %v1079
      %1165 = vst.msk [vmem:[#allocation2 + $0x30] sm:$0xf] %vm1152, %v1081
      %1166 = vst.msk [vmem:[#allocation2 + $0x34] sm:$0xf] %vm1152, %v1083
      %1167 = vst.msk [vmem:[#allocation2 + $0x38] sm:$0xf] %vm1152, %v1085
      %1168 = vst.msk [vmem:[#allocation2 + $0x3c] sm:$0xf] %vm1152, %v1087
      %1169 = vst.msk [vmem:[#allocation2 + $0x40] sm:$0xf] %vm1152, %v1089
      %1170 = vst.msk [vmem:[#allocation2 + $0x44] sm:$0xf] %vm1152, %v1091
      %1171 = vst.msk [vmem:[#allocation2 + $0x48] sm:$0xf] %vm1152, %v1093
      %1172 = vst.msk [vmem:[#allocation2 + $0x4c] sm:$0xf] %vm1152, %v1095
      %1173 = vst.msk [vmem:[#allocation2 + $0x50] sm:$0xf] %vm1152, %v1097
      %1174 = vst.msk [vmem:[#allocation2 + $0x54] sm:$0xf] %vm1152, %v1099
      %1175 = vst.msk [vmem:[#allocation2 + $0x58] sm:$0xf] %vm1152, %v1101
      %1176 = vst.msk [vmem:[#allocation2 + $0x5c] sm:$0xf] %vm1152, %v1103
      %1177 = vst.msk [vmem:[#allocation2 + $0x60] sm:$0xf] %vm1152, %v1105
      %1178 = vst.msk [vmem:[#allocation2 + $0x64] sm:$0xf] %vm1152, %v1107
      %1179 = vst.msk [vmem:[#allocation2 + $0x68] sm:$0xf] %vm1152, %v1109
      %1180 = vst.msk [vmem:[#allocation2 + $0x6c] sm:$0xf] %vm1152, %v1111
      %1181 = vst.msk [vmem:[#allocation2 + $0x70] sm:$0xf] %vm1152, %v1113
      %1182 = vst.msk [vmem:[#allocation2 + $0x74] sm:$0xf] %vm1152, %v1115
      %1183 = vst.msk [vmem:[#allocation2 + $0x78] sm:$0xf] %vm1152, %v1117
      %1184 = vst.msk [vmem:[#allocation2 + $0x7c] sm:$0xf] %vm1152, %v1119
      %s1185 = scalar_lea.vmem %s203, 12
      %v1186 = vld [vmem:[%s1185] sm:$0xf]
      %v1187 = vld [vmem:[%s1185 + $0x4] sm:$0xf]
      %v1188 = vld [vmem:[%s1185 + $0xc] sm:$0xf]
      %v1189 = vld [vmem:[%s1185 + $0x10] sm:$0xf]
      %v1190 = vld [vmem:[%s1185 + $0x18] sm:$0xf]
      %v1191 = vld [vmem:[%s1185 + $0x1c] sm:$0xf]
      %v1192 = vld [vmem:[%s1185 + $0x24] sm:$0xf]
      %v1193 = vld [vmem:[%s1185 + $0x28] sm:$0xf]
      %v1194 = vld [vmem:[%s1185 + $0x30] sm:$0xf]
      %v1195 = vld [vmem:[%s1185 + $0x34] sm:$0xf]
      %v1196 = vld [vmem:[%s1185 + $0x3c] sm:$0xf]
      %v1197 = vld [vmem:[%s1185 + $0x40] sm:$0xf]
      %v1198 = vld [vmem:[%s1185 + $0x48] sm:$0xf]
      %v1199 = vld [vmem:[%s1185 + $0x4c] sm:$0xf]
      %v1200 = vld [vmem:[%s1185 + $0x54] sm:$0xf]
      %v1201 = vld [vmem:[%s1185 + $0x58] sm:$0xf]
      %v1202 = vld [vmem:[%s1185 + $0x60] sm:$0xf]
      %v1203 = vld [vmem:[%s1185 + $0x64] sm:$0xf]
      %v1204 = vld [vmem:[%s1185 + $0x6c] sm:$0xf]
      %v1205 = vld [vmem:[%s1185 + $0x70] sm:$0xf]
      %v1206 = vld [vmem:[%s1185 + $0x78] sm:$0xf]
      %v1207 = vld [vmem:[%s1185 + $0x7c] sm:$0xf]
      %v1208 = vld [vmem:[%s1185 + $0x84] sm:$0xf]
      %v1209 = vld [vmem:[%s1185 + $0x88] sm:$0xf]
      %v1210 = vld [vmem:[%s1185 + $0x90] sm:$0xf]
      %v1211 = vld [vmem:[%s1185 + $0x94] sm:$0xf]
      %v1212 = vld [vmem:[%s1185 + $0x9c] sm:$0xf]
      %v1213 = vld [vmem:[%s1185 + $0xa0] sm:$0xf]
      %v1214 = vld [vmem:[%s1185 + $0xa8] sm:$0xf]
      %v1215 = vld [vmem:[%s1185 + $0xac] sm:$0xf]
      %v1216 = vld [vmem:[%s1185 + $0xb4] sm:$0xf]
      %v1217 = vld [vmem:[%s1185 + $0xb8] sm:$0xf]
      %1250 = vrot.lane.b32.xlu0 %v1186, 12
      %v1251 = vpop.permute.xlu0 %1250
      %1252 = vrot.lane.b32.xlu0 %v1187, 12
      %v1253 = vpop.permute.xlu0 %1252
      %1254 = vrot.lane.b32.xlu0 %v1188, 12
      %v1255 = vpop.permute.xlu0 %1254
      %1256 = vrot.lane.b32.xlu0 %v1189, 12
      %v1257 = vpop.permute.xlu0 %1256
      %1258 = vrot.lane.b32.xlu0 %v1190, 12
      %v1259 = vpop.permute.xlu0 %1258
      %1260 = vrot.lane.b32.xlu0 %v1191, 12
      %v1261 = vpop.permute.xlu0 %1260
      %1262 = vrot.lane.b32.xlu0 %v1192, 12
      %v1263 = vpop.permute.xlu0 %1262
      %1264 = vrot.lane.b32.xlu0 %v1193, 12
      %v1265 = vpop.permute.xlu0 %1264
      %1266 = vrot.lane.b32.xlu0 %v1194, 12
      %v1267 = vpop.permute.xlu0 %1266
      %1268 = vrot.lane.b32.xlu0 %v1195, 12
      %v1269 = vpop.permute.xlu0 %1268
      %1270 = vrot.lane.b32.xlu0 %v1196, 12
      %v1271 = vpop.permute.xlu0 %1270
      %1272 = vrot.lane.b32.xlu0 %v1197, 12
      %v1273 = vpop.permute.xlu0 %1272
      %1274 = vrot.lane.b32.xlu0 %v1198, 12
      %v1275 = vpop.permute.xlu0 %1274
      %1276 = vrot.lane.b32.xlu0 %v1199, 12
      %v1277 = vpop.permute.xlu0 %1276
      %1278 = vrot.lane.b32.xlu0 %v1200, 12
      %v1279 = vpop.permute.xlu0 %1278
      %1280 = vrot.lane.b32.xlu0 %v1201, 12
      %v1281 = vpop.permute.xlu0 %1280
      %1282 = vrot.lane.b32.xlu0 %v1202, 12
      %v1283 = vpop.permute.xlu0 %1282
      %1284 = vrot.lane.b32.xlu0 %v1203, 12
      %v1285 = vpop.permute.xlu0 %1284
      %1286 = vrot.lane.b32.xlu0 %v1204, 12
      %v1287 = vpop.permute.xlu0 %1286
      %1288 = vrot.lane.b32.xlu0 %v1205, 12
      %v1289 = vpop.permute.xlu0 %1288
      %1290 = vrot.lane.b32.xlu0 %v1206, 12
      %v1291 = vpop.permute.xlu0 %1290
      %1292 = vrot.lane.b32.xlu0 %v1207, 12
      %v1293 = vpop.permute.xlu0 %1292
      %1294 = vrot.lane.b32.xlu0 %v1208, 12
      %v1295 = vpop.permute.xlu0 %1294
      %1296 = vrot.lane.b32.xlu0 %v1209, 12
      %v1297 = vpop.permute.xlu0 %1296
      %1298 = vrot.lane.b32.xlu0 %v1210, 12
      %v1299 = vpop.permute.xlu0 %1298
      %1300 = vrot.lane.b32.xlu0 %v1211, 12
      %v1301 = vpop.permute.xlu0 %1300
      %1302 = vrot.lane.b32.xlu0 %v1212, 12
      %v1303 = vpop.permute.xlu0 %1302
      %1304 = vrot.lane.b32.xlu0 %v1213, 12
      %v1305 = vpop.permute.xlu0 %1304
      %1306 = vrot.lane.b32.xlu0 %v1214, 12
      %v1307 = vpop.permute.xlu0 %1306
      %1308 = vrot.lane.b32.xlu0 %v1215, 12
      %v1309 = vpop.permute.xlu0 %1308
      %1310 = vrot.lane.b32.xlu0 %v1216, 12
      %v1311 = vpop.permute.xlu0 %1310
      %1312 = vrot.lane.b32.xlu0 %v1217, 12
      %v1313 = vpop.permute.xlu0 %1312
      %vm1346 = vcmask 126048
      %1347 = vst.msk [vmem:[#allocation2] sm:$0xf] %vm1346, %v1251
      %1348 = vst.msk [vmem:[#allocation2 + $0x4] sm:$0xf] %vm1346, %v1253
      %1349 = vst.msk [vmem:[#allocation2 + $0x8] sm:$0xf] %vm1346, %v1255
      %1350 = vst.msk [vmem:[#allocation2 + $0xc] sm:$0xf] %vm1346, %v1257
      %1351 = vst.msk [vmem:[#allocation2 + $0x10] sm:$0xf] %vm1346, %v1259
      %1352 = vst.msk [vmem:[#allocation2 + $0x14] sm:$0xf] %vm1346, %v1261
      %1353 = vst.msk [vmem:[#allocation2 + $0x18] sm:$0xf] %vm1346, %v1263
      %1354 = vst.msk [vmem:[#allocation2 + $0x1c] sm:$0xf] %vm1346, %v1265
      %1355 = vst.msk [vmem:[#allocation2 + $0x20] sm:$0xf] %vm1346, %v1267
      %1356 = vst.msk [vmem:[#allocation2 + $0x24] sm:$0xf] %vm1346, %v1269
      %1357 = vst.msk [vmem:[#allocation2 + $0x28] sm:$0xf] %vm1346, %v1271
      %1358 = vst.msk [vmem:[#allocation2 + $0x2c] sm:$0xf] %vm1346, %v1273
      %1359 = vst.msk [vmem:[#allocation2 + $0x30] sm:$0xf] %vm1346, %v1275
      %1360 = vst.msk [vmem:[#allocation2 + $0x34] sm:$0xf] %vm1346, %v1277
      %1361 = vst.msk [vmem:[#allocation2 + $0x38] sm:$0xf] %vm1346, %v1279
      %1362 = vst.msk [vmem:[#allocation2 + $0x3c] sm:$0xf] %vm1346, %v1281
      %1363 = vst.msk [vmem:[#allocation2 + $0x40] sm:$0xf] %vm1346, %v1283
      %1364 = vst.msk [vmem:[#allocation2 + $0x44] sm:$0xf] %vm1346, %v1285
      %1365 = vst.msk [vmem:[#allocation2 + $0x48] sm:$0xf] %vm1346, %v1287
      %1366 = vst.msk [vmem:[#allocation2 + $0x4c] sm:$0xf] %vm1346, %v1289
      %1367 = vst.msk [vmem:[#allocation2 + $0x50] sm:$0xf] %vm1346, %v1291
      %1368 = vst.msk [vmem:[#allocation2 + $0x54] sm:$0xf] %vm1346, %v1293
      %1369 = vst.msk [vmem:[#allocation2 + $0x58] sm:$0xf] %vm1346, %v1295
      %1370 = vst.msk [vmem:[#allocation2 + $0x5c] sm:$0xf] %vm1346, %v1297
      %1371 = vst.msk [vmem:[#allocation2 + $0x60] sm:$0xf] %vm1346, %v1299
      %1372 = vst.msk [vmem:[#allocation2 + $0x64] sm:$0xf] %vm1346, %v1301
      %1373 = vst.msk [vmem:[#allocation2 + $0x68] sm:$0xf] %vm1346, %v1303
      %1374 = vst.msk [vmem:[#allocation2 + $0x6c] sm:$0xf] %vm1346, %v1305
      %1375 = vst.msk [vmem:[#allocation2 + $0x70] sm:$0xf] %vm1346, %v1307
      %1376 = vst.msk [vmem:[#allocation2 + $0x74] sm:$0xf] %vm1346, %v1309
      %1377 = vst.msk [vmem:[#allocation2 + $0x78] sm:$0xf] %vm1346, %v1311
      %1378 = vst.msk [vmem:[#allocation2 + $0x7c] sm:$0xf] %vm1346, %v1313
      %v1379 = vld [vmem:[%s1185] sm:$0xf]
      %v1380 = vld [vmem:[%s1185 + $0x4] sm:$0xf]
      %v1381 = vld [vmem:[%s1185 + $0x8] sm:$0x1]
      %v1382 = vld [vmem:[%s1185 + $0xc] sm:$0xf]
      %v1383 = vld [vmem:[%s1185 + $0x10] sm:$0xf]
      %v1384 = vld [vmem:[%s1185 + $0x14] sm:$0x1]
      %v1385 = vld [vmem:[%s1185 + $0x18] sm:$0xf]
      %v1386 = vld [vmem:[%s1185 + $0x1c] sm:$0xf]
      %v1387 = vld [vmem:[%s1185 + $0x20] sm:$0x1]
      %v1388 = vld [vmem:[%s1185 + $0x24] sm:$0xf]
      %v1389 = vld [vmem:[%s1185 + $0x28] sm:$0xf]
      %v1390 = vld [vmem:[%s1185 + $0x2c] sm:$0x1]
      %v1391 = vld [vmem:[%s1185 + $0x30] sm:$0xf]
      %v1392 = vld [vmem:[%s1185 + $0x34] sm:$0xf]
      %v1393 = vld [vmem:[%s1185 + $0x38] sm:$0x1]
      %v1394 = vld [vmem:[%s1185 + $0x3c] sm:$0xf]
      %v1395 = vld [vmem:[%s1185 + $0x40] sm:$0xf]
      %v1396 = vld [vmem:[%s1185 + $0x44] sm:$0x1]
      %v1397 = vld [vmem:[%s1185 + $0x48] sm:$0xf]
      %v1398 = vld [vmem:[%s1185 + $0x4c] sm:$0xf]
      %v1399 = vld [vmem:[%s1185 + $0x50] sm:$0x1]
      %v1400 = vld [vmem:[%s1185 + $0x54] sm:$0xf]
      %v1401 = vld [vmem:[%s1185 + $0x58] sm:$0xf]
      %v1402 = vld [vmem:[%s1185 + $0x5c] sm:$0x1]
      %v1403 = vld [vmem:[%s1185 + $0x60] sm:$0xf]
      %v1404 = vld [vmem:[%s1185 + $0x64] sm:$0xf]
      %v1405 = vld [vmem:[%s1185 + $0x68] sm:$0x1]
      %v1406 = vld [vmem:[%s1185 + $0x6c] sm:$0xf]
      %v1407 = vld [vmem:[%s1185 + $0x70] sm:$0xf]
      %v1408 = vld [vmem:[%s1185 + $0x74] sm:$0x1]
      %v1409 = vld [vmem:[%s1185 + $0x78] sm:$0xf]
      %v1410 = vld [vmem:[%s1185 + $0x7c] sm:$0xf]
      %v1411 = vld [vmem:[%s1185 + $0x80] sm:$0x1]
      %v1412 = vld [vmem:[%s1185 + $0x84] sm:$0xf]
      %v1413 = vld [vmem:[%s1185 + $0x88] sm:$0xf]
      %v1414 = vld [vmem:[%s1185 + $0x8c] sm:$0x1]
      %v1415 = vld [vmem:[%s1185 + $0x90] sm:$0xf]
      %v1416 = vld [vmem:[%s1185 + $0x94] sm:$0xf]
      %v1417 = vld [vmem:[%s1185 + $0x98] sm:$0x1]
      %v1418 = vld [vmem:[%s1185 + $0x9c] sm:$0xf]
      %v1419 = vld [vmem:[%s1185 + $0xa0] sm:$0xf]
      %v1420 = vld [vmem:[%s1185 + $0xa4] sm:$0x1]
      %v1421 = vld [vmem:[%s1185 + $0xa8] sm:$0xf]
      %v1422 = vld [vmem:[%s1185 + $0xac] sm:$0xf]
      %v1423 = vld [vmem:[%s1185 + $0xb0] sm:$0x1]
      %v1424 = vld [vmem:[%s1185 + $0xb4] sm:$0xf]
      %v1425 = vld [vmem:[%s1185 + $0xb8] sm:$0xf]
      %v1426 = vld [vmem:[%s1185 + $0xbc] sm:$0x1]
      %v1428 = vshrl.u32 %v1379, 16
      %v1430 = vrot.slane %v1428, 4
      %v1431 = vshll.u32 %v1379, 16
      %v1433 = vrot.slane %v1431, 5
      %v1434 = vor.u32 %v1430, %v1433
      %v1435 = vrot.slane %v1434, 4
      %v1437 = vshll.u32 %v1380, 16
      %v1439 = vrot.slane %v1437, 5
      %v1440 = vsel %vm331, %v1435, %v1439
      %v1441 = vshrl.u32 %v1380, 16
      %v1443 = vrot.slane %v1441, 4
      %v1444 = vor.u32 %v1443, %v1439
      %v1445 = vrot.slane %v1444, 4
      %v1447 = vshll.u32 %v1381, 16
      %v1449 = vrot.slane %v1447, 5
      %v1450 = vsel %vm331, %v1445, %v1449
      %v1452 = vshrl.u32 %v1382, 16
      %v1454 = vrot.slane %v1452, 4
      %v1455 = vshll.u32 %v1382, 16
      %v1457 = vrot.slane %v1455, 5
      %v1458 = vor.u32 %v1454, %v1457
      %v1459 = vrot.slane %v1458, 4
      %v1461 = vshll.u32 %v1383, 16
      %v1463 = vrot.slane %v1461, 5
      %v1464 = vsel %vm331, %v1459, %v1463
      %v1465 = vshrl.u32 %v1383, 16
      %v1467 = vrot.slane %v1465, 4
      %v1468 = vor.u32 %v1467, %v1463
      %v1469 = vrot.slane %v1468, 4
      %v1471 = vshll.u32 %v1384, 16
      %v1473 = vrot.slane %v1471, 5
      %v1474 = vsel %vm331, %v1469, %v1473
      %v1476 = vshrl.u32 %v1385, 16
      %v1478 = vrot.slane %v1476, 4
      %v1479 = vshll.u32 %v1385, 16
      %v1481 = vrot.slane %v1479, 5
      %v1482 = vor.u32 %v1478, %v1481
      %v1483 = vrot.slane %v1482, 4
      %v1485 = vshll.u32 %v1386, 16
      %v1487 = vrot.slane %v1485, 5
      %v1488 = vsel %vm331, %v1483, %v1487
      %v1489 = vshrl.u32 %v1386, 16
      %v1491 = vrot.slane %v1489, 4
      %v1492 = vor.u32 %v1491, %v1487
      %v1493 = vrot.slane %v1492, 4
      %v1495 = vshll.u32 %v1387, 16
      %v1497 = vrot.slane %v1495, 5
      %v1498 = vsel %vm331, %v1493, %v1497
      %v1500 = vshrl.u32 %v1388, 16
      %v1502 = vrot.slane %v1500, 4
      %v1503 = vshll.u32 %v1388, 16
      %v1505 = vrot.slane %v1503, 5
      %v1506 = vor.u32 %v1502, %v1505
      %v1507 = vrot.slane %v1506, 4
      %v1509 = vshll.u32 %v1389, 16
      %v1511 = vrot.slane %v1509, 5
      %v1512 = vsel %vm331, %v1507, %v1511
      %v1513 = vshrl.u32 %v1389, 16
      %v1515 = vrot.slane %v1513, 4
      %v1516 = vor.u32 %v1515, %v1511
      %v1517 = vrot.slane %v1516, 4
      %v1519 = vshll.u32 %v1390, 16
      %v1521 = vrot.slane %v1519, 5
      %v1522 = vsel %vm331, %v1517, %v1521
      %v1524 = vshrl.u32 %v1391, 16
      %v1526 = vrot.slane %v1524, 4
      %v1527 = vshll.u32 %v1391, 16
      %v1529 = vrot.slane %v1527, 5
      %v1530 = vor.u32 %v1526, %v1529
      %v1531 = vrot.slane %v1530, 4
      %v1533 = vshll.u32 %v1392, 16
      %v1535 = vrot.slane %v1533, 5
      %v1536 = vsel %vm331, %v1531, %v1535
      %v1537 = vshrl.u32 %v1392, 16
      %v1539 = vrot.slane %v1537, 4
      %v1540 = vor.u32 %v1539, %v1535
      %v1541 = vrot.slane %v1540, 4
      %v1543 = vshll.u32 %v1393, 16
      %v1545 = vrot.slane %v1543, 5
      %v1546 = vsel %vm331, %v1541, %v1545
      %v1548 = vshrl.u32 %v1394, 16
      %v1550 = vrot.slane %v1548, 4
      %v1551 = vshll.u32 %v1394, 16
      %v1553 = vrot.slane %v1551, 5
      %v1554 = vor.u32 %v1550, %v1553
      %v1555 = vrot.slane %v1554, 4
      %v1557 = vshll.u32 %v1395, 16
      %v1559 = vrot.slane %v1557, 5
      %v1560 = vsel %vm331, %v1555, %v1559
      %v1561 = vshrl.u32 %v1395, 16
      %v1563 = vrot.slane %v1561, 4
      %v1564 = vor.u32 %v1563, %v1559
      %v1565 = vrot.slane %v1564, 4
      %v1567 = vshll.u32 %v1396, 16
      %v1569 = vrot.slane %v1567, 5
      %v1570 = vsel %vm331, %v1565, %v1569
      %v1572 = vshrl.u32 %v1397, 16
      %v1574 = vrot.slane %v1572, 4
      %v1575 = vshll.u32 %v1397, 16
      %v1577 = vrot.slane %v1575, 5
      %v1578 = vor.u32 %v1574, %v1577
      %v1579 = vrot.slane %v1578, 4
      %v1581 = vshll.u32 %v1398, 16
      %v1583 = vrot.slane %v1581, 5
      %v1584 = vsel %vm331, %v1579, %v1583
      %v1585 = vshrl.u32 %v1398, 16
      %v1587 = vrot.slane %v1585, 4
      %v1588 = vor.u32 %v1587, %v1583
      %v1589 = vrot.slane %v1588, 4
      %v1591 = vshll.u32 %v1399, 16
      %v1593 = vrot.slane %v1591, 5
      %v1594 = vsel %vm331, %v1589, %v1593
      %v1596 = vshrl.u32 %v1400, 16
      %v1598 = vrot.slane %v1596, 4
      %v1599 = vshll.u32 %v1400, 16
      %v1601 = vrot.slane %v1599, 5
      %v1602 = vor.u32 %v1598, %v1601
      %v1603 = vrot.slane %v1602, 4
      %v1605 = vshll.u32 %v1401, 16
      %v1607 = vrot.slane %v1605, 5
      %v1608 = vsel %vm331, %v1603, %v1607
      %v1609 = vshrl.u32 %v1401, 16
      %v1611 = vrot.slane %v1609, 4
      %v1612 = vor.u32 %v1611, %v1607
      %v1613 = vrot.slane %v1612, 4
      %v1615 = vshll.u32 %v1402, 16
      %v1617 = vrot.slane %v1615, 5
      %v1618 = vsel %vm331, %v1613, %v1617
      %v1620 = vshrl.u32 %v1403, 16
      %v1622 = vrot.slane %v1620, 4
      %v1623 = vshll.u32 %v1403, 16
      %v1625 = vrot.slane %v1623, 5
      %v1626 = vor.u32 %v1622, %v1625
      %v1627 = vrot.slane %v1626, 4
      %v1629 = vshll.u32 %v1404, 16
      %v1631 = vrot.slane %v1629, 5
      %v1632 = vsel %vm331, %v1627, %v1631
      %v1633 = vshrl.u32 %v1404, 16
      %v1635 = vrot.slane %v1633, 4
      %v1636 = vor.u32 %v1635, %v1631
      %v1637 = vrot.slane %v1636, 4
      %v1639 = vshll.u32 %v1405, 16
      %v1641 = vrot.slane %v1639, 5
      %v1642 = vsel %vm331, %v1637, %v1641
      %v1644 = vshrl.u32 %v1406, 16
      %v1646 = vrot.slane %v1644, 4
      %v1647 = vshll.u32 %v1406, 16
      %v1649 = vrot.slane %v1647, 5
      %v1650 = vor.u32 %v1646, %v1649
      %v1651 = vrot.slane %v1650, 4
      %v1653 = vshll.u32 %v1407, 16
      %v1655 = vrot.slane %v1653, 5
      %v1656 = vsel %vm331, %v1651, %v1655
      %v1657 = vshrl.u32 %v1407, 16
      %v1659 = vrot.slane %v1657, 4
      %v1660 = vor.u32 %v1659, %v1655
      %v1661 = vrot.slane %v1660, 4
      %v1663 = vshll.u32 %v1408, 16
      %v1665 = vrot.slane %v1663, 5
      %v1666 = vsel %vm331, %v1661, %v1665
      %v1668 = vshrl.u32 %v1409, 16
      %v1670 = vrot.slane %v1668, 4
      %v1671 = vshll.u32 %v1409, 16
      %v1673 = vrot.slane %v1671, 5
      %v1674 = vor.u32 %v1670, %v1673
      %v1675 = vrot.slane %v1674, 4
      %v1677 = vshll.u32 %v1410, 16
      %v1679 = vrot.slane %v1677, 5
      %v1680 = vsel %vm331, %v1675, %v1679
      %v1681 = vshrl.u32 %v1410, 16
      %v1683 = vrot.slane %v1681, 4
      %v1684 = vor.u32 %v1683, %v1679
      %v1685 = vrot.slane %v1684, 4
      %v1687 = vshll.u32 %v1411, 16
      %v1689 = vrot.slane %v1687, 5
      %v1690 = vsel %vm331, %v1685, %v1689
      %v1692 = vshrl.u32 %v1412, 16
      %v1694 = vrot.slane %v1692, 4
      %v1695 = vshll.u32 %v1412, 16
      %v1697 = vrot.slane %v1695, 5
      %v1698 = vor.u32 %v1694, %v1697
      %v1699 = vrot.slane %v1698, 4
      %v1701 = vshll.u32 %v1413, 16
      %v1703 = vrot.slane %v1701, 5
      %v1704 = vsel %vm331, %v1699, %v1703
      %v1705 = vshrl.u32 %v1413, 16
      %v1707 = vrot.slane %v1705, 4
      %v1708 = vor.u32 %v1707, %v1703
      %v1709 = vrot.slane %v1708, 4
      %v1711 = vshll.u32 %v1414, 16
      %v1713 = vrot.slane %v1711, 5
      %v1714 = vsel %vm331, %v1709, %v1713
      %v1716 = vshrl.u32 %v1415, 16
      %v1718 = vrot.slane %v1716, 4
      %v1719 = vshll.u32 %v1415, 16
      %v1721 = vrot.slane %v1719, 5
      %v1722 = vor.u32 %v1718, %v1721
      %v1723 = vrot.slane %v1722, 4
      %v1725 = vshll.u32 %v1416, 16
      %v1727 = vrot.slane %v1725, 5
      %v1728 = vsel %vm331, %v1723, %v1727
      %v1729 = vshrl.u32 %v1416, 16
      %v1731 = vrot.slane %v1729, 4
      %v1732 = vor.u32 %v1731, %v1727
      %v1733 = vrot.slane %v1732, 4
      %v1735 = vshll.u32 %v1417, 16
      %v1737 = vrot.slane %v1735, 5
      %v1738 = vsel %vm331, %v1733, %v1737
      %v1740 = vshrl.u32 %v1418, 16
      %v1742 = vrot.slane %v1740, 4
      %v1743 = vshll.u32 %v1418, 16
      %v1745 = vrot.slane %v1743, 5
      %v1746 = vor.u32 %v1742, %v1745
      %v1747 = vrot.slane %v1746, 4
      %v1749 = vshll.u32 %v1419, 16
      %v1751 = vrot.slane %v1749, 5
      %v1752 = vsel %vm331, %v1747, %v1751
      %v1753 = vshrl.u32 %v1419, 16
      %v1755 = vrot.slane %v1753, 4
      %v1756 = vor.u32 %v1755, %v1751
      %v1757 = vrot.slane %v1756, 4
      %v1759 = vshll.u32 %v1420, 16
      %v1761 = vrot.slane %v1759, 5
      %v1762 = vsel %vm331, %v1757, %v1761
      %v1764 = vshrl.u32 %v1421, 16
      %v1766 = vrot.slane %v1764, 4
      %v1767 = vshll.u32 %v1421, 16
      %v1769 = vrot.slane %v1767, 5
      %v1770 = vor.u32 %v1766, %v1769
      %v1771 = vrot.slane %v1770, 4
      %v1773 = vshll.u32 %v1422, 16
      %v1775 = vrot.slane %v1773, 5
      %v1776 = vsel %vm331, %v1771, %v1775
      %v1777 = vshrl.u32 %v1422, 16
      %v1779 = vrot.slane %v1777, 4
      %v1780 = vor.u32 %v1779, %v1775
      %v1781 = vrot.slane %v1780, 4
      %v1783 = vshll.u32 %v1423, 16
      %v1785 = vrot.slane %v1783, 5
      %v1786 = vsel %vm331, %v1781, %v1785
      %v1788 = vshrl.u32 %v1424, 16
      %v1790 = vrot.slane %v1788, 4
      %v1791 = vshll.u32 %v1424, 16
      %v1793 = vrot.slane %v1791, 5
      %v1794 = vor.u32 %v1790, %v1793
      %v1795 = vrot.slane %v1794, 4
      %v1797 = vshll.u32 %v1425, 16
      %v1799 = vrot.slane %v1797, 5
      %v1800 = vsel %vm331, %v1795, %v1799
      %v1801 = vshrl.u32 %v1425, 16
      %v1803 = vrot.slane %v1801, 4
      %v1804 = vor.u32 %v1803, %v1799
      %v1805 = vrot.slane %v1804, 4
      %v1807 = vshll.u32 %v1426, 16
      %v1809 = vrot.slane %v1807, 5
      %v1810 = vsel %vm331, %v1805, %v1809
      %1811 = vrot.lane.b32.xlu0 %v1440, 16
      %v1812 = vpop.permute.xlu0 %1811
      %1813 = vrot.lane.b32.xlu0 %v1450, 16
      %v1814 = vpop.permute.xlu0 %1813
      %1815 = vrot.lane.b32.xlu0 %v1464, 16
      %v1816 = vpop.permute.xlu0 %1815
      %1817 = vrot.lane.b32.xlu0 %v1474, 16
      %v1818 = vpop.permute.xlu0 %1817
      %1819 = vrot.lane.b32.xlu0 %v1488, 16
      %v1820 = vpop.permute.xlu0 %1819
      %1821 = vrot.lane.b32.xlu0 %v1498, 16
      %v1822 = vpop.permute.xlu0 %1821
      %1823 = vrot.lane.b32.xlu0 %v1512, 16
      %v1824 = vpop.permute.xlu0 %1823
      %1825 = vrot.lane.b32.xlu0 %v1522, 16
      %v1826 = vpop.permute.xlu0 %1825
      %1827 = vrot.lane.b32.xlu0 %v1536, 16
      %v1828 = vpop.permute.xlu0 %1827
      %1829 = vrot.lane.b32.xlu0 %v1546, 16
      %v1830 = vpop.permute.xlu0 %1829
      %1831 = vrot.lane.b32.xlu0 %v1560, 16
      %v1832 = vpop.permute.xlu0 %1831
      %1833 = vrot.lane.b32.xlu0 %v1570, 16
      %v1834 = vpop.permute.xlu0 %1833
      %1835 = vrot.lane.b32.xlu0 %v1584, 16
      %v1836 = vpop.permute.xlu0 %1835
      %1837 = vrot.lane.b32.xlu0 %v1594, 16
      %v1838 = vpop.permute.xlu0 %1837
      %1839 = vrot.lane.b32.xlu0 %v1608, 16
      %v1840 = vpop.permute.xlu0 %1839
      %1841 = vrot.lane.b32.xlu0 %v1618, 16
      %v1842 = vpop.permute.xlu0 %1841
      %1843 = vrot.lane.b32.xlu0 %v1632, 16
      %v1844 = vpop.permute.xlu0 %1843
      %1845 = vrot.lane.b32.xlu0 %v1642, 16
      %v1846 = vpop.permute.xlu0 %1845
      %1847 = vrot.lane.b32.xlu0 %v1656, 16
      %v1848 = vpop.permute.xlu0 %1847
      %1849 = vrot.lane.b32.xlu0 %v1666, 16
      %v1850 = vpop.permute.xlu0 %1849
      %1851 = vrot.lane.b32.xlu0 %v1680, 16
      %v1852 = vpop.permute.xlu0 %1851
      %1853 = vrot.lane.b32.xlu0 %v1690, 16
      %v1854 = vpop.permute.xlu0 %1853
      %1855 = vrot.lane.b32.xlu0 %v1704, 16
      %v1856 = vpop.permute.xlu0 %1855
      %1857 = vrot.lane.b32.xlu0 %v1714, 16
      %v1858 = vpop.permute.xlu0 %1857
      %1859 = vrot.lane.b32.xlu0 %v1728, 16
      %v1860 = vpop.permute.xlu0 %1859
      %1861 = vrot.lane.b32.xlu0 %v1738, 16
      %v1862 = vpop.permute.xlu0 %1861
      %1863 = vrot.lane.b32.xlu0 %v1752, 16
      %v1864 = vpop.permute.xlu0 %1863
      %1865 = vrot.lane.b32.xlu0 %v1762, 16
      %v1866 = vpop.permute.xlu0 %1865
      %1867 = vrot.lane.b32.xlu0 %v1776, 16
      %v1868 = vpop.permute.xlu0 %1867
      %1869 = vrot.lane.b32.xlu0 %v1786, 16
      %v1870 = vpop.permute.xlu0 %1869
      %1871 = vrot.lane.b32.xlu0 %v1800, 16
      %v1872 = vpop.permute.xlu0 %1871
      %1873 = vrot.lane.b32.xlu0 %v1810, 16
      %v1874 = vpop.permute.xlu0 %1873
      %vm1907 = vcmask 158848
      %1908 = vst.msk [vmem:[#allocation2] sm:$0xf] %vm1907, %v1812
      %1909 = vst.msk [vmem:[#allocation2 + $0x4] sm:$0xf] %vm1907, %v1814
      %1910 = vst.msk [vmem:[#allocation2 + $0x8] sm:$0xf] %vm1907, %v1816
      %1911 = vst.msk [vmem:[#allocation2 + $0xc] sm:$0xf] %vm1907, %v1818
      %1912 = vst.msk [vmem:[#allocation2 + $0x10] sm:$0xf] %vm1907, %v1820
      %1913 = vst.msk [vmem:[#allocation2 + $0x14] sm:$0xf] %vm1907, %v1822
      %1914 = vst.msk [vmem:[#allocation2 + $0x18] sm:$0xf] %vm1907, %v1824
      %1915 = vst.msk [vmem:[#allocation2 + $0x1c] sm:$0xf] %vm1907, %v1826
      %1916 = vst.msk [vmem:[#allocation2 + $0x20] sm:$0xf] %vm1907, %v1828
      %1917 = vst.msk [vmem:[#allocation2 + $0x24] sm:$0xf] %vm1907, %v1830
      %1918 = vst.msk [vmem:[#allocation2 + $0x28] sm:$0xf] %vm1907, %v1832
      %1919 = vst.msk [vmem:[#allocation2 + $0x2c] sm:$0xf] %vm1907, %v1834
      %1920 = vst.msk [vmem:[#allocation2 + $0x30] sm:$0xf] %vm1907, %v1836
      %1921 = vst.msk [vmem:[#allocation2 + $0x34] sm:$0xf] %vm1907, %v1838
      %1922 = vst.msk [vmem:[#allocation2 + $0x38] sm:$0xf] %vm1907, %v1840
      %1923 = vst.msk [vmem:[#allocation2 + $0x3c] sm:$0xf] %vm1907, %v1842
      %1924 = vst.msk [vmem:[#allocation2 + $0x40] sm:$0xf] %vm1907, %v1844
      %1925 = vst.msk [vmem:[#allocation2 + $0x44] sm:$0xf] %vm1907, %v1846
      %1926 = vst.msk [vmem:[#allocation2 + $0x48] sm:$0xf] %vm1907, %v1848
      %1927 = vst.msk [vmem:[#allocation2 + $0x4c] sm:$0xf] %vm1907, %v1850
      %1928 = vst.msk [vmem:[#allocation2 + $0x50] sm:$0xf] %vm1907, %v1852
      %1929 = vst.msk [vmem:[#allocation2 + $0x54] sm:$0xf] %vm1907, %v1854
      %1930 = vst.msk [vmem:[#allocation2 + $0x58] sm:$0xf] %vm1907, %v1856
      %1931 = vst.msk [vmem:[#allocation2 + $0x5c] sm:$0xf] %vm1907, %v1858
      %1932 = vst.msk [vmem:[#allocation2 + $0x60] sm:$0xf] %vm1907, %v1860
      %1933 = vst.msk [vmem:[#allocation2 + $0x64] sm:$0xf] %vm1907, %v1862
      %1934 = vst.msk [vmem:[#allocation2 + $0x68] sm:$0xf] %vm1907, %v1864
      %1935 = vst.msk [vmem:[#allocation2 + $0x6c] sm:$0xf] %vm1907, %v1866
      %1936 = vst.msk [vmem:[#allocation2 + $0x70] sm:$0xf] %vm1907, %v1868
      %1937 = vst.msk [vmem:[#allocation2 + $0x74] sm:$0xf] %vm1907, %v1870
      %1938 = vst.msk [vmem:[#allocation2 + $0x78] sm:$0xf] %vm1907, %v1872
      %1939 = vst.msk [vmem:[#allocation2 + $0x7c] sm:$0xf] %vm1907, %v1874
      %v1940 = vld [vmem:[%s1185] sm:$0xe]
      %v1941 = vld [vmem:[%s1185 + $0x4] sm:$0xf]
      %v1942 = vld [vmem:[%s1185 + $0x8] sm:$0x1]
      %v1943 = vld [vmem:[%s1185 + $0xc] sm:$0xe]
      %v1944 = vld [vmem:[%s1185 + $0x10] sm:$0xf]
      %v1945 = vld [vmem:[%s1185 + $0x14] sm:$0x1]
      %v1946 = vld [vmem:[%s1185 + $0x18] sm:$0xe]
      %v1947 = vld [vmem:[%s1185 + $0x1c] sm:$0xf]
      %v1948 = vld [vmem:[%s1185 + $0x20] sm:$0x1]
      %v1949 = vld [vmem:[%s1185 + $0x24] sm:$0xe]
      %v1950 = vld [vmem:[%s1185 + $0x28] sm:$0xf]
      %v1951 = vld [vmem:[%s1185 + $0x2c] sm:$0x1]
      %v1952 = vld [vmem:[%s1185 + $0x30] sm:$0xe]
      %v1953 = vld [vmem:[%s1185 + $0x34] sm:$0xf]
      %v1954 = vld [vmem:[%s1185 + $0x38] sm:$0x1]
      %v1955 = vld [vmem:[%s1185 + $0x3c] sm:$0xe]
      %v1956 = vld [vmem:[%s1185 + $0x40] sm:$0xf]
      %v1957 = vld [vmem:[%s1185 + $0x44] sm:$0x1]
      %v1958 = vld [vmem:[%s1185 + $0x48] sm:$0xe]
      %v1959 = vld [vmem:[%s1185 + $0x4c] sm:$0xf]
      %v1960 = vld [vmem:[%s1185 + $0x50] sm:$0x1]
      %v1961 = vld [vmem:[%s1185 + $0x54] sm:$0xe]
      %v1962 = vld [vmem:[%s1185 + $0x58] sm:$0xf]
      %v1963 = vld [vmem:[%s1185 + $0x5c] sm:$0x1]
      %v1964 = vld [vmem:[%s1185 + $0x60] sm:$0xe]
      %v1965 = vld [vmem:[%s1185 + $0x64] sm:$0xf]
      %v1966 = vld [vmem:[%s1185 + $0x68] sm:$0x1]
      %v1967 = vld [vmem:[%s1185 + $0x6c] sm:$0xe]
      %v1968 = vld [vmem:[%s1185 + $0x70] sm:$0xf]
      %v1969 = vld [vmem:[%s1185 + $0x74] sm:$0x1]
      %v1970 = vld [vmem:[%s1185 + $0x78] sm:$0xe]
      %v1971 = vld [vmem:[%s1185 + $0x7c] sm:$0xf]
      %v1972 = vld [vmem:[%s1185 + $0x80] sm:$0x1]
      %v1973 = vld [vmem:[%s1185 + $0x84] sm:$0xe]
      %v1974 = vld [vmem:[%s1185 + $0x88] sm:$0xf]
      %v1975 = vld [vmem:[%s1185 + $0x8c] sm:$0x1]
      %v1976 = vld [vmem:[%s1185 + $0x90] sm:$0xe]
      %v1977 = vld [vmem:[%s1185 + $0x94] sm:$0xf]
      %v1978 = vld [vmem:[%s1185 + $0x98] sm:$0x1]
      %v1979 = vld [vmem:[%s1185 + $0x9c] sm:$0xe]
      %v1980 = vld [vmem:[%s1185 + $0xa0] sm:$0xf]
      %v1981 = vld [vmem:[%s1185 + $0xa4] sm:$0x1]
      %v1982 = vld [vmem:[%s1185 + $0xa8] sm:$0xe]
      %v1983 = vld [vmem:[%s1185 + $0xac] sm:$0xf]
      %v1984 = vld [vmem:[%s1185 + $0xb0] sm:$0x1]
      %v1985 = vld [vmem:[%s1185 + $0xb4] sm:$0xe]
      %v1986 = vld [vmem:[%s1185 + $0xb8] sm:$0xf]
      %v1987 = vld [vmem:[%s1185 + $0xbc] sm:$0x1]
      %v2036 = vrot.slane %v1940, 5
      %v2037 = vrot.slane %v2036, 4
      %v2038 = vrot.slane %v1941, 5
      %v2039 = vsel %vm943, %v2037, %v2038
      %v2040 = vrot.slane %v2038, 4
      %v2041 = vrot.slane %v1942, 5
      %v2042 = vsel %vm943, %v2040, %v2041
      %v2043 = vrot.slane %v1943, 5
      %v2044 = vrot.slane %v2043, 4
      %v2045 = vrot.slane %v1944, 5
      %v2046 = vsel %vm943, %v2044, %v2045
      %v2047 = vrot.slane %v2045, 4
      %v2048 = vrot.slane %v1945, 5
      %v2049 = vsel %vm943, %v2047, %v2048
      %v2050 = vrot.slane %v1946, 5
      %v2051 = vrot.slane %v2050, 4
      %v2052 = vrot.slane %v1947, 5
      %v2053 = vsel %vm943, %v2051, %v2052
      %v2054 = vrot.slane %v2052, 4
      %v2055 = vrot.slane %v1948, 5
      %v2056 = vsel %vm943, %v2054, %v2055
      %v2057 = vrot.slane %v1949, 5
      %v2058 = vrot.slane %v2057, 4
      %v2059 = vrot.slane %v1950, 5
      %v2060 = vsel %vm943, %v2058, %v2059
      %v2061 = vrot.slane %v2059, 4
      %v2062 = vrot.slane %v1951, 5
      %v2063 = vsel %vm943, %v2061, %v2062
      %v2064 = vrot.slane %v1952, 5
      %v2065 = vrot.slane %v2064, 4
      %v2066 = vrot.slane %v1953, 5
      %v2067 = vsel %vm943, %v2065, %v2066
      %v2068 = vrot.slane %v2066, 4
      %v2069 = vrot.slane %v1954, 5
      %v2070 = vsel %vm943, %v2068, %v2069
      %v2071 = vrot.slane %v1955, 5
      %v2072 = vrot.slane %v2071, 4
      %v2073 = vrot.slane %v1956, 5
      %v2074 = vsel %vm943, %v2072, %v2073
      %v2075 = vrot.slane %v2073, 4
      %v2076 = vrot.slane %v1957, 5
      %v2077 = vsel %vm943, %v2075, %v2076
      %v2078 = vrot.slane %v1958, 5
      %v2079 = vrot.slane %v2078, 4
      %v2080 = vrot.slane %v1959, 5
      %v2081 = vsel %vm943, %v2079, %v2080
      %v2082 = vrot.slane %v2080, 4
      %v2083 = vrot.slane %v1960, 5
      %v2084 = vsel %vm943, %v2082, %v2083
      %v2085 = vrot.slane %v1961, 5
      %v2086 = vrot.slane %v2085, 4
      %v2087 = vrot.slane %v1962, 5
      %v2088 = vsel %vm943, %v2086, %v2087
      %v2089 = vrot.slane %v2087, 4
      %v2090 = vrot.slane %v1963, 5
      %v2091 = vsel %vm943, %v2089, %v2090
      %v2092 = vrot.slane %v1964, 5
      %v2093 = vrot.slane %v2092, 4
      %v2094 = vrot.slane %v1965, 5
      %v2095 = vsel %vm943, %v2093, %v2094
      %v2096 = vrot.slane %v2094, 4
      %v2097 = vrot.slane %v1966, 5
      %v2098 = vsel %vm943, %v2096, %v2097
      %v2099 = vrot.slane %v1967, 5
      %v2100 = vrot.slane %v2099, 4
      %v2101 = vrot.slane %v1968, 5
      %v2102 = vsel %vm943, %v2100, %v2101
      %v2103 = vrot.slane %v2101, 4
      %v2104 = vrot.slane %v1969, 5
      %v2105 = vsel %vm943, %v2103, %v2104
      %v2106 = vrot.slane %v1970, 5
      %v2107 = vrot.slane %v2106, 4
      %v2108 = vrot.slane %v1971, 5
      %v2109 = vsel %vm943, %v2107, %v2108
      %v2110 = vrot.slane %v2108, 4
      %v2111 = vrot.slane %v1972, 5
      %v2112 = vsel %vm943, %v2110, %v2111
      %v2113 = vrot.slane %v1973, 5
      %v2114 = vrot.slane %v2113, 4
      %v2115 = vrot.slane %v1974, 5
      %v2116 = vsel %vm943, %v2114, %v2115
      %v2117 = vrot.slane %v2115, 4
      %v2118 = vrot.slane %v1975, 5
      %v2119 = vsel %vm943, %v2117, %v2118
      %v2120 = vrot.slane %v1976, 5
      %v2121 = vrot.slane %v2120, 4
      %v2122 = vrot.slane %v1977, 5
      %v2123 = vsel %vm943, %v2121, %v2122
      %v2124 = vrot.slane %v2122, 4
      %v2125 = vrot.slane %v1978, 5
      %v2126 = vsel %vm943, %v2124, %v2125
      %v2127 = vrot.slane %v1979, 5
      %v2128 = vrot.slane %v2127, 4
      %v2129 = vrot.slane %v1980, 5
      %v2130 = vsel %vm943, %v2128, %v2129
      %v2131 = vrot.slane %v2129, 4
      %v2132 = vrot.slane %v1981, 5
      %v2133 = vsel %vm943, %v2131, %v2132
      %v2134 = vrot.slane %v1982, 5
      %v2135 = vrot.slane %v2134, 4
      %v2136 = vrot.slane %v1983, 5
      %v2137 = vsel %vm943, %v2135, %v2136
      %v2138 = vrot.slane %v2136, 4
      %v2139 = vrot.slane %v1984, 5
      %v2140 = vsel %vm943, %v2138, %v2139
      %v2141 = vrot.slane %v1985, 5
      %v2142 = vrot.slane %v2141, 4
      %v2143 = vrot.slane %v1986, 5
      %v2144 = vsel %vm943, %v2142, %v2143
      %v2145 = vrot.slane %v2143, 4
      %v2146 = vrot.slane %v1987, 5
      %v2147 = vsel %vm943, %v2145, %v2146
      %2148 = vrot.lane.b32.xlu0 %v2039, 20
      %v2149 = vpop.permute.xlu0 %2148
      %2150 = vrot.lane.b32.xlu0 %v2042, 20
      %v2151 = vpop.permute.xlu0 %2150
      %2152 = vrot.lane.b32.xlu0 %v2046, 20
      %v2153 = vpop.permute.xlu0 %2152
      %2154 = vrot.lane.b32.xlu0 %v2049, 20
      %v2155 = vpop.permute.xlu0 %2154
      %2156 = vrot.lane.b32.xlu0 %v2053, 20
      %v2157 = vpop.permute.xlu0 %2156
      %2158 = vrot.lane.b32.xlu0 %v2056, 20
      %v2159 = vpop.permute.xlu0 %2158
      %2160 = vrot.lane.b32.xlu0 %v2060, 20
      %v2161 = vpop.permute.xlu0 %2160
      %2162 = vrot.lane.b32.xlu0 %v2063, 20
      %v2163 = vpop.permute.xlu0 %2162
      %2164 = vrot.lane.b32.xlu0 %v2067, 20
      %v2165 = vpop.permute.xlu0 %2164
      %2166 = vrot.lane.b32.xlu0 %v2070, 20
      %v2167 = vpop.permute.xlu0 %2166
      %2168 = vrot.lane.b32.xlu0 %v2074, 20
      %v2169 = vpop.permute.xlu0 %2168
      %2170 = vrot.lane.b32.xlu0 %v2077, 20
      %v2171 = vpop.permute.xlu0 %2170
      %2172 = vrot.lane.b32.xlu0 %v2081, 20
      %v2173 = vpop.permute.xlu0 %2172
      %2174 = vrot.lane.b32.xlu0 %v2084, 20
      %v2175 = vpop.permute.xlu0 %2174
      %2176 = vrot.lane.b32.xlu0 %v2088, 20
      %v2177 = vpop.permute.xlu0 %2176
      %2178 = vrot.lane.b32.xlu0 %v2091, 20
      %v2179 = vpop.permute.xlu0 %2178
      %2180 = vrot.lane.b32.xlu0 %v2095, 20
      %v2181 = vpop.permute.xlu0 %2180
      %2182 = vrot.lane.b32.xlu0 %v2098, 20
      %v2183 = vpop.permute.xlu0 %2182
      %2184 = vrot.lane.b32.xlu0 %v2102, 20
      %v2185 = vpop.permute.xlu0 %2184
      %2186 = vrot.lane.b32.xlu0 %v2105, 20
      %v2187 = vpop.permute.xlu0 %2186
      %2188 = vrot.lane.b32.xlu0 %v2109, 20
      %v2189 = vpop.permute.xlu0 %2188
      %2190 = vrot.lane.b32.xlu0 %v2112, 20
      %v2191 = vpop.permute.xlu0 %2190
      %2192 = vrot.lane.b32.xlu0 %v2116, 20
      %v2193 = vpop.permute.xlu0 %2192
      %2194 = vrot.lane.b32.xlu0 %v2119, 20
      %v2195 = vpop.permute.xlu0 %2194
      %2196 = vrot.lane.b32.xlu0 %v2123, 20
      %v2197 = vpop.permute.xlu0 %2196
      %2198 = vrot.lane.b32.xlu0 %v2126, 20
      %v2199 = vpop.permute.xlu0 %2198
      %2200 = vrot.lane.b32.xlu0 %v2130, 20
      %v2201 = vpop.permute.xlu0 %2200
      %2202 = vrot.lane.b32.xlu0 %v2133, 20
      %v2203 = vpop.permute.xlu0 %2202
      %2204 = vrot.lane.b32.xlu0 %v2137, 20
      %v2205 = vpop.permute.xlu0 %2204
      %2206 = vrot.lane.b32.xlu0 %v2140, 20
      %v2207 = vpop.permute.xlu0 %2206
      %2208 = vrot.lane.b32.xlu0 %v2144, 20
      %v2209 = vpop.permute.xlu0 %2208
      %2210 = vrot.lane.b32.xlu0 %v2147, 20
      %v2211 = vpop.permute.xlu0 %2210
      %vm2244 = vcmask 191648
      %2245 = vst.msk [vmem:[#allocation2] sm:$0xf] %vm2244, %v2149
      %2246 = vst.msk [vmem:[#allocation2 + $0x4] sm:$0xf] %vm2244, %v2151
      %2247 = vst.msk [vmem:[#allocation2 + $0x8] sm:$0xf] %vm2244, %v2153
      %2248 = vst.msk [vmem:[#allocation2 + $0xc] sm:$0xf] %vm2244, %v2155
      %2249 = vst.msk [vmem:[#allocation2 + $0x10] sm:$0xf] %vm2244, %v2157
      %2250 = vst.msk [vmem:[#allocation2 + $0x14] sm:$0xf] %vm2244, %v2159
      %2251 = vst.msk [vmem:[#allocation2 + $0x18] sm:$0xf] %vm2244, %v2161
      %2252 = vst.msk [vmem:[#allocation2 + $0x1c] sm:$0xf] %vm2244, %v2163
      %2253 = vst.msk [vmem:[#allocation2 + $0x20] sm:$0xf] %vm2244, %v2165
      %2254 = vst.msk [vmem:[#allocation2 + $0x24] sm:$0xf] %vm2244, %v2167
      %2255 = vst.msk [vmem:[#allocation2 + $0x28] sm:$0xf] %vm2244, %v2169
      %2256 = vst.msk [vmem:[#allocation2 + $0x2c] sm:$0xf] %vm2244, %v2171
      %2257 = vst.msk [vmem:[#allocation2 + $0x30] sm:$0xf] %vm2244, %v2173
      %2258 = vst.msk [vmem:[#allocation2 + $0x34] sm:$0xf] %vm2244, %v2175
      %2259 = vst.msk [vmem:[#allocation2 + $0x38] sm:$0xf] %vm2244, %v2177
      %2260 = vst.msk [vmem:[#allocation2 + $0x3c] sm:$0xf] %vm2244, %v2179
      %2261 = vst.msk [vmem:[#allocation2 + $0x40] sm:$0xf] %vm2244, %v2181
      %2262 = vst.msk [vmem:[#allocation2 + $0x44] sm:$0xf] %vm2244, %v2183
      %2263 = vst.msk [vmem:[#allocation2 + $0x48] sm:$0xf] %vm2244, %v2185
      %2264 = vst.msk [vmem:[#allocation2 + $0x4c] sm:$0xf] %vm2244, %v2187
      %2265 = vst.msk [vmem:[#allocation2 + $0x50] sm:$0xf] %vm2244, %v2189
      %2266 = vst.msk [vmem:[#allocation2 + $0x54] sm:$0xf] %vm2244, %v2191
      %2267 = vst.msk [vmem:[#allocation2 + $0x58] sm:$0xf] %vm2244, %v2193
      %2268 = vst.msk [vmem:[#allocation2 + $0x5c] sm:$0xf] %vm2244, %v2195
      %2269 = vst.msk [vmem:[#allocation2 + $0x60] sm:$0xf] %vm2244, %v2197
      %2270 = vst.msk [vmem:[#allocation2 + $0x64] sm:$0xf] %vm2244, %v2199
      %2271 = vst.msk [vmem:[#allocation2 + $0x68] sm:$0xf] %vm2244, %v2201
      %2272 = vst.msk [vmem:[#allocation2 + $0x6c] sm:$0xf] %vm2244, %v2203
      %2273 = vst.msk [vmem:[#allocation2 + $0x70] sm:$0xf] %vm2244, %v2205
      %2274 = vst.msk [vmem:[#allocation2 + $0x74] sm:$0xf] %vm2244, %v2207
      %2275 = vst.msk [vmem:[#allocation2 + $0x78] sm:$0xf] %vm2244, %v2209
      %2276 = vst.msk [vmem:[#allocation2 + $0x7c] sm:$0xf] %vm2244, %v2211
      %s2277 = scalar_lea.vmem %s203, 24
      %v2278 = vld [vmem:[%s2277] sm:$0xf]
      %v2279 = vld [vmem:[%s2277 + $0x4] sm:$0xf]
      %v2280 = vld [vmem:[%s2277 + $0xc] sm:$0xf]
      %v2281 = vld [vmem:[%s2277 + $0x10] sm:$0xf]
      %v2282 = vld [vmem:[%s2277 + $0x18] sm:$0xf]
      %v2283 = vld [vmem:[%s2277 + $0x1c] sm:$0xf]
      %v2284 = vld [vmem:[%s2277 + $0x24] sm:$0xf]
      %v2285 = vld [vmem:[%s2277 + $0x28] sm:$0xf]
      %v2286 = vld [vmem:[%s2277 + $0x30] sm:$0xf]
      %v2287 = vld [vmem:[%s2277 + $0x34] sm:$0xf]
      %v2288 = vld [vmem:[%s2277 + $0x3c] sm:$0xf]
      %v2289 = vld [vmem:[%s2277 + $0x40] sm:$0xf]
      %v2290 = vld [vmem:[%s2277 + $0x48] sm:$0xf]
      %v2291 = vld [vmem:[%s2277 + $0x4c] sm:$0xf]
      %v2292 = vld [vmem:[%s2277 + $0x54] sm:$0xf]
      %v2293 = vld [vmem:[%s2277 + $0x58] sm:$0xf]
      %v2294 = vld [vmem:[%s2277 + $0x60] sm:$0xf]
      %v2295 = vld [vmem:[%s2277 + $0x64] sm:$0xf]
      %v2296 = vld [vmem:[%s2277 + $0x6c] sm:$0xf]
      %v2297 = vld [vmem:[%s2277 + $0x70] sm:$0xf]
      %v2298 = vld [vmem:[%s2277 + $0x78] sm:$0xf]
      %v2299 = vld [vmem:[%s2277 + $0x7c] sm:$0xf]
      %v2300 = vld [vmem:[%s2277 + $0x84] sm:$0xf]
      %v2301 = vld [vmem:[%s2277 + $0x88] sm:$0xf]
      %v2302 = vld [vmem:[%s2277 + $0x90] sm:$0xf]
      %v2303 = vld [vmem:[%s2277 + $0x94] sm:$0xf]
      %v2304 = vld [vmem:[%s2277 + $0x9c] sm:$0xf]
      %v2305 = vld [vmem:[%s2277 + $0xa0] sm:$0xf]
      %v2306 = vld [vmem:[%s2277 + $0xa8] sm:$0xf]
      %v2307 = vld [vmem:[%s2277 + $0xac] sm:$0xf]
      %v2308 = vld [vmem:[%s2277 + $0xb4] sm:$0xf]
      %v2309 = vld [vmem:[%s2277 + $0xb8] sm:$0xf]
      %2342 = vrot.lane.b32.xlu0 %v2278, 24
      %v2343 = vpop.permute.xlu0 %2342
      %2344 = vrot.lane.b32.xlu0 %v2279, 24
      %v2345 = vpop.permute.xlu0 %2344
      %2346 = vrot.lane.b32.xlu0 %v2280, 24
      %v2347 = vpop.permute.xlu0 %2346
      %2348 = vrot.lane.b32.xlu0 %v2281, 24
      %v2349 = vpop.permute.xlu0 %2348
      %2350 = vrot.lane.b32.xlu0 %v2282, 24
      %v2351 = vpop.permute.xlu0 %2350
      %2352 = vrot.lane.b32.xlu0 %v2283, 24
      %v2353 = vpop.permute.xlu0 %2352
      %2354 = vrot.lane.b32.xlu0 %v2284, 24
      %v2355 = vpop.permute.xlu0 %2354
      %2356 = vrot.lane.b32.xlu0 %v2285, 24
      %v2357 = vpop.permute.xlu0 %2356
      %2358 = vrot.lane.b32.xlu0 %v2286, 24
      %v2359 = vpop.permute.xlu0 %2358
      %2360 = vrot.lane.b32.xlu0 %v2287, 24
      %v2361 = vpop.permute.xlu0 %2360
      %2362 = vrot.lane.b32.xlu0 %v2288, 24
      %v2363 = vpop.permute.xlu0 %2362
      %2364 = vrot.lane.b32.xlu0 %v2289, 24
      %v2365 = vpop.permute.xlu0 %2364
      %2366 = vrot.lane.b32.xlu0 %v2290, 24
      %v2367 = vpop.permute.xlu0 %2366
      %2368 = vrot.lane.b32.xlu0 %v2291, 24
      %v2369 = vpop.permute.xlu0 %2368
      %2370 = vrot.lane.b32.xlu0 %v2292, 24
      %v2371 = vpop.permute.xlu0 %2370
      %2372 = vrot.lane.b32.xlu0 %v2293, 24
      %v2373 = vpop.permute.xlu0 %2372
      %2374 = vrot.lane.b32.xlu0 %v2294, 24
      %v2375 = vpop.permute.xlu0 %2374
      %2376 = vrot.lane.b32.xlu0 %v2295, 24
      %v2377 = vpop.permute.xlu0 %2376
      %2378 = vrot.lane.b32.xlu0 %v2296, 24
      %v2379 = vpop.permute.xlu0 %2378
      %2380 = vrot.lane.b32.xlu0 %v2297, 24
      %v2381 = vpop.permute.xlu0 %2380
      %2382 = vrot.lane.b32.xlu0 %v2298, 24
      %v2383 = vpop.permute.xlu0 %2382
      %2384 = vrot.lane.b32.xlu0 %v2299, 24
      %v2385 = vpop.permute.xlu0 %2384
      %2386 = vrot.lane.b32.xlu0 %v2300, 24
      %v2387 = vpop.permute.xlu0 %2386
      %2388 = vrot.lane.b32.xlu0 %v2301, 24
      %v2389 = vpop.permute.xlu0 %2388
      %2390 = vrot.lane.b32.xlu0 %v2302, 24
      %v2391 = vpop.permute.xlu0 %2390
      %2392 = vrot.lane.b32.xlu0 %v2303, 24
      %v2393 = vpop.permute.xlu0 %2392
      %2394 = vrot.lane.b32.xlu0 %v2304, 24
      %v2395 = vpop.permute.xlu0 %2394
      %2396 = vrot.lane.b32.xlu0 %v2305, 24
      %v2397 = vpop.permute.xlu0 %2396
      %2398 = vrot.lane.b32.xlu0 %v2306, 24
      %v2399 = vpop.permute.xlu0 %2398
      %2400 = vrot.lane.b32.xlu0 %v2307, 24
      %v2401 = vpop.permute.xlu0 %2400
      %2402 = vrot.lane.b32.xlu0 %v2308, 24
      %v2403 = vpop.permute.xlu0 %2402
      %2404 = vrot.lane.b32.xlu0 %v2309, 24
      %v2405 = vpop.permute.xlu0 %2404
      %vm2438 = vcmask 224448
      %2439 = vst.msk [vmem:[#allocation2] sm:$0xf] %vm2438, %v2343
      %2440 = vst.msk [vmem:[#allocation2 + $0x4] sm:$0xf] %vm2438, %v2345
      %2441 = vst.msk [vmem:[#allocation2 + $0x8] sm:$0xf] %vm2438, %v2347
      %2442 = vst.msk [vmem:[#allocation2 + $0xc] sm:$0xf] %vm2438, %v2349
      %2443 = vst.msk [vmem:[#allocation2 + $0x10] sm:$0xf] %vm2438, %v2351
      %2444 = vst.msk [vmem:[#allocation2 + $0x14] sm:$0xf] %vm2438, %v2353
      %2445 = vst.msk [vmem:[#allocation2 + $0x18] sm:$0xf] %vm2438, %v2355
      %2446 = vst.msk [vmem:[#allocation2 + $0x1c] sm:$0xf] %vm2438, %v2357
      %2447 = vst.msk [vmem:[#allocation2 + $0x20] sm:$0xf] %vm2438, %v2359
      %2448 = vst.msk [vmem:[#allocation2 + $0x24] sm:$0xf] %vm2438, %v2361
      %2449 = vst.msk [vmem:[#allocation2 + $0x28] sm:$0xf] %vm2438, %v2363
      %2450 = vst.msk [vmem:[#allocation2 + $0x2c] sm:$0xf] %vm2438, %v2365
      %2451 = vst.msk [vmem:[#allocation2 + $0x30] sm:$0xf] %vm2438, %v2367
      %2452 = vst.msk [vmem:[#allocation2 + $0x34] sm:$0xf] %vm2438, %v2369
      %2453 = vst.msk [vmem:[#allocation2 + $0x38] sm:$0xf] %vm2438, %v2371
      %2454 = vst.msk [vmem:[#allocation2 + $0x3c] sm:$0xf] %vm2438, %v2373
      %2455 = vst.msk [vmem:[#allocation2 + $0x40] sm:$0xf] %vm2438, %v2375
      %2456 = vst.msk [vmem:[#allocation2 + $0x44] sm:$0xf] %vm2438, %v2377
      %2457 = vst.msk [vmem:[#allocation2 + $0x48] sm:$0xf] %vm2438, %v2379
      %2458 = vst.msk [vmem:[#allocation2 + $0x4c] sm:$0xf] %vm2438, %v2381
      %2459 = vst.msk [vmem:[#allocation2 + $0x50] sm:$0xf] %vm2438, %v2383
      %2460 = vst.msk [vmem:[#allocation2 + $0x54] sm:$0xf] %vm2438, %v2385
      %2461 = vst.msk [vmem:[#allocation2 + $0x58] sm:$0xf] %vm2438, %v2387
      %2462 = vst.msk [vmem:[#allocation2 + $0x5c] sm:$0xf] %vm2438, %v2389
      %2463 = vst.msk [vmem:[#allocation2 + $0x60] sm:$0xf] %vm2438, %v2391
      %2464 = vst.msk [vmem:[#allocation2 + $0x64] sm:$0xf] %vm2438, %v2393
      %2465 = vst.msk [vmem:[#allocation2 + $0x68] sm:$0xf] %vm2438, %v2395
      %2466 = vst.msk [vmem:[#allocation2 + $0x6c] sm:$0xf] %vm2438, %v2397
      %2467 = vst.msk [vmem:[#allocation2 + $0x70] sm:$0xf] %vm2438, %v2399
      %2468 = vst.msk [vmem:[#allocation2 + $0x74] sm:$0xf] %vm2438, %v2401
      %2469 = vst.msk [vmem:[#allocation2 + $0x78] sm:$0xf] %vm2438, %v2403
      %2470 = vst.msk [vmem:[#allocation2 + $0x7c] sm:$0xf] %vm2438, %v2405
      %v2471 = vld [vmem:[%s2277] sm:$0xf]
      %v2472 = vld [vmem:[%s2277 + $0x4] sm:$0xf]
      %v2473 = vld [vmem:[%s2277 + $0x8] sm:$0x1]
      %v2474 = vld [vmem:[%s2277 + $0xc] sm:$0xf]
      %v2475 = vld [vmem:[%s2277 + $0x10] sm:$0xf]
      %v2476 = vld [vmem:[%s2277 + $0x14] sm:$0x1]
      %v2477 = vld [vmem:[%s2277 + $0x18] sm:$0xf]
      %v2478 = vld [vmem:[%s2277 + $0x1c] sm:$0xf]
      %v2479 = vld [vmem:[%s2277 + $0x20] sm:$0x1]
      %v2480 = vld [vmem:[%s2277 + $0x24] sm:$0xf]
      %v2481 = vld [vmem:[%s2277 + $0x28] sm:$0xf]
      %v2482 = vld [vmem:[%s2277 + $0x2c] sm:$0x1]
      %v2483 = vld [vmem:[%s2277 + $0x30] sm:$0xf]
      %v2484 = vld [vmem:[%s2277 + $0x34] sm:$0xf]
      %v2485 = vld [vmem:[%s2277 + $0x38] sm:$0x1]
      %v2486 = vld [vmem:[%s2277 + $0x3c] sm:$0xf]
      %v2487 = vld [vmem:[%s2277 + $0x40] sm:$0xf]
      %v2488 = vld [vmem:[%s2277 + $0x44] sm:$0x1]
      %v2489 = vld [vmem:[%s2277 + $0x48] sm:$0xf]
      %v2490 = vld [vmem:[%s2277 + $0x4c] sm:$0xf]
      %v2491 = vld [vmem:[%s2277 + $0x50] sm:$0x1]
      %v2492 = vld [vmem:[%s2277 + $0x54] sm:$0xf]
      %v2493 = vld [vmem:[%s2277 + $0x58] sm:$0xf]
      %v2494 = vld [vmem:[%s2277 + $0x5c] sm:$0x1]
      %v2495 = vld [vmem:[%s2277 + $0x60] sm:$0xf]
      %v2496 = vld [vmem:[%s2277 + $0x64] sm:$0xf]
      %v2497 = vld [vmem:[%s2277 + $0x68] sm:$0x1]
      %v2498 = vld [vmem:[%s2277 + $0x6c] sm:$0xf]
      %v2499 = vld [vmem:[%s2277 + $0x70] sm:$0xf]
      %v2500 = vld [vmem:[%s2277 + $0x74] sm:$0x1]
      %v2501 = vld [vmem:[%s2277 + $0x78] sm:$0xf]
      %v2502 = vld [vmem:[%s2277 + $0x7c] sm:$0xf]
      %v2503 = vld [vmem:[%s2277 + $0x80] sm:$0x1]
      %v2504 = vld [vmem:[%s2277 + $0x84] sm:$0xf]
      %v2505 = vld [vmem:[%s2277 + $0x88] sm:$0xf]
      %v2506 = vld [vmem:[%s2277 + $0x8c] sm:$0x1]
      %v2507 = vld [vmem:[%s2277 + $0x90] sm:$0xf]
      %v2508 = vld [vmem:[%s2277 + $0x94] sm:$0xf]
      %v2509 = vld [vmem:[%s2277 + $0x98] sm:$0x1]
      %v2510 = vld [vmem:[%s2277 + $0x9c] sm:$0xf]
      %v2511 = vld [vmem:[%s2277 + $0xa0] sm:$0xf]
      %v2512 = vld [vmem:[%s2277 + $0xa4] sm:$0x1]
      %v2513 = vld [vmem:[%s2277 + $0xa8] sm:$0xf]
      %v2514 = vld [vmem:[%s2277 + $0xac] sm:$0xf]
      %v2515 = vld [vmem:[%s2277 + $0xb0] sm:$0x1]
      %v2516 = vld [vmem:[%s2277 + $0xb4] sm:$0xf]
      %v2517 = vld [vmem:[%s2277 + $0xb8] sm:$0xf]
      %v2518 = vld [vmem:[%s2277 + $0xbc] sm:$0x1]
      %v2520 = vshrl.u32 %v2471, 16
      %v2522 = vrot.slane %v2520, 4
      %v2523 = vshll.u32 %v2471, 16
      %v2525 = vrot.slane %v2523, 5
      %v2526 = vor.u32 %v2522, %v2525
      %v2527 = vrot.slane %v2526, 4
      %v2529 = vshll.u32 %v2472, 16
      %v2531 = vrot.slane %v2529, 5
      %v2532 = vsel %vm331, %v2527, %v2531
      %v2533 = vshrl.u32 %v2472, 16
      %v2535 = vrot.slane %v2533, 4
      %v2536 = vor.u32 %v2535, %v2531
      %v2537 = vrot.slane %v2536, 4
      %v2539 = vshll.u32 %v2473, 16
      %v2541 = vrot.slane %v2539, 5
      %v2542 = vsel %vm331, %v2537, %v2541
      %v2544 = vshrl.u32 %v2474, 16
      %v2546 = vrot.slane %v2544, 4
      %v2547 = vshll.u32 %v2474, 16
      %v2549 = vrot.slane %v2547, 5
      %v2550 = vor.u32 %v2546, %v2549
      %v2551 = vrot.slane %v2550, 4
      %v2553 = vshll.u32 %v2475, 16
      %v2555 = vrot.slane %v2553, 5
      %v2556 = vsel %vm331, %v2551, %v2555
      %v2557 = vshrl.u32 %v2475, 16
      %v2559 = vrot.slane %v2557, 4
      %v2560 = vor.u32 %v2559, %v2555
      %v2561 = vrot.slane %v2560, 4
      %v2563 = vshll.u32 %v2476, 16
      %v2565 = vrot.slane %v2563, 5
      %v2566 = vsel %vm331, %v2561, %v2565
      %v2568 = vshrl.u32 %v2477, 16
      %v2570 = vrot.slane %v2568, 4
      %v2571 = vshll.u32 %v2477, 16
      %v2573 = vrot.slane %v2571, 5
      %v2574 = vor.u32 %v2570, %v2573
      %v2575 = vrot.slane %v2574, 4
      %v2577 = vshll.u32 %v2478, 16
      %v2579 = vrot.slane %v2577, 5
      %v2580 = vsel %vm331, %v2575, %v2579
      %v2581 = vshrl.u32 %v2478, 16
      %v2583 = vrot.slane %v2581, 4
      %v2584 = vor.u32 %v2583, %v2579
      %v2585 = vrot.slane %v2584, 4
      %v2587 = vshll.u32 %v2479, 16
      %v2589 = vrot.slane %v2587, 5
      %v2590 = vsel %vm331, %v2585, %v2589
      %v2592 = vshrl.u32 %v2480, 16
      %v2594 = vrot.slane %v2592, 4
      %v2595 = vshll.u32 %v2480, 16
      %v2597 = vrot.slane %v2595, 5
      %v2598 = vor.u32 %v2594, %v2597
      %v2599 = vrot.slane %v2598, 4
      %v2601 = vshll.u32 %v2481, 16
      %v2603 = vrot.slane %v2601, 5
      %v2604 = vsel %vm331, %v2599, %v2603
      %v2605 = vshrl.u32 %v2481, 16
      %v2607 = vrot.slane %v2605, 4
      %v2608 = vor.u32 %v2607, %v2603
      %v2609 = vrot.slane %v2608, 4
      %v2611 = vshll.u32 %v2482, 16
      %v2613 = vrot.slane %v2611, 5
      %v2614 = vsel %vm331, %v2609, %v2613
      %v2616 = vshrl.u32 %v2483, 16
      %v2618 = vrot.slane %v2616, 4
      %v2619 = vshll.u32 %v2483, 16
      %v2621 = vrot.slane %v2619, 5
      %v2622 = vor.u32 %v2618, %v2621
      %v2623 = vrot.slane %v2622, 4
      %v2625 = vshll.u32 %v2484, 16
      %v2627 = vrot.slane %v2625, 5
      %v2628 = vsel %vm331, %v2623, %v2627
      %v2629 = vshrl.u32 %v2484, 16
      %v2631 = vrot.slane %v2629, 4
      %v2632 = vor.u32 %v2631, %v2627
      %v2633 = vrot.slane %v2632, 4
      %v2635 = vshll.u32 %v2485, 16
      %v2637 = vrot.slane %v2635, 5
      %v2638 = vsel %vm331, %v2633, %v2637
      %v2640 = vshrl.u32 %v2486, 16
      %v2642 = vrot.slane %v2640, 4
      %v2643 = vshll.u32 %v2486, 16
      %v2645 = vrot.slane %v2643, 5
      %v2646 = vor.u32 %v2642, %v2645
      %v2647 = vrot.slane %v2646, 4
      %v2649 = vshll.u32 %v2487, 16
      %v2651 = vrot.slane %v2649, 5
      %v2652 = vsel %vm331, %v2647, %v2651
      %v2653 = vshrl.u32 %v2487, 16
      %v2655 = vrot.slane %v2653, 4
      %v2656 = vor.u32 %v2655, %v2651
      %v2657 = vrot.slane %v2656, 4
      %v2659 = vshll.u32 %v2488, 16
      %v2661 = vrot.slane %v2659, 5
      %v2662 = vsel %vm331, %v2657, %v2661
      %v2664 = vshrl.u32 %v2489, 16
      %v2666 = vrot.slane %v2664, 4
      %v2667 = vshll.u32 %v2489, 16
      %v2669 = vrot.slane %v2667, 5
      %v2670 = vor.u32 %v2666, %v2669
      %v2671 = vrot.slane %v2670, 4
      %v2673 = vshll.u32 %v2490, 16
      %v2675 = vrot.slane %v2673, 5
      %v2676 = vsel %vm331, %v2671, %v2675
      %v2677 = vshrl.u32 %v2490, 16
      %v2679 = vrot.slane %v2677, 4
      %v2680 = vor.u32 %v2679, %v2675
      %v2681 = vrot.slane %v2680, 4
      %v2683 = vshll.u32 %v2491, 16
      %v2685 = vrot.slane %v2683, 5
      %v2686 = vsel %vm331, %v2681, %v2685
      %v2688 = vshrl.u32 %v2492, 16
      %v2690 = vrot.slane %v2688, 4
      %v2691 = vshll.u32 %v2492, 16
      %v2693 = vrot.slane %v2691, 5
      %v2694 = vor.u32 %v2690, %v2693
      %v2695 = vrot.slane %v2694, 4
      %v2697 = vshll.u32 %v2493, 16
      %v2699 = vrot.slane %v2697, 5
      %v2700 = vsel %vm331, %v2695, %v2699
      %v2701 = vshrl.u32 %v2493, 16
      %v2703 = vrot.slane %v2701, 4
      %v2704 = vor.u32 %v2703, %v2699
      %v2705 = vrot.slane %v2704, 4
      %v2707 = vshll.u32 %v2494, 16
      %v2709 = vrot.slane %v2707, 5
      %v2710 = vsel %vm331, %v2705, %v2709
      %v2712 = vshrl.u32 %v2495, 16
      %v2714 = vrot.slane %v2712, 4
      %v2715 = vshll.u32 %v2495, 16
      %v2717 = vrot.slane %v2715, 5
      %v2718 = vor.u32 %v2714, %v2717
      %v2719 = vrot.slane %v2718, 4
      %v2721 = vshll.u32 %v2496, 16
      %v2723 = vrot.slane %v2721, 5
      %v2724 = vsel %vm331, %v2719, %v2723
      %v2725 = vshrl.u32 %v2496, 16
      %v2727 = vrot.slane %v2725, 4
      %v2728 = vor.u32 %v2727, %v2723
      %v2729 = vrot.slane %v2728, 4
      %v2731 = vshll.u32 %v2497, 16
      %v2733 = vrot.slane %v2731, 5
      %v2734 = vsel %vm331, %v2729, %v2733
      %v2736 = vshrl.u32 %v2498, 16
      %v2738 = vrot.slane %v2736, 4
      %v2739 = vshll.u32 %v2498, 16
      %v2741 = vrot.slane %v2739, 5
      %v2742 = vor.u32 %v2738, %v2741
      %v2743 = vrot.slane %v2742, 4
      %v2745 = vshll.u32 %v2499, 16
      %v2747 = vrot.slane %v2745, 5
      %v2748 = vsel %vm331, %v2743, %v2747
      %v2749 = vshrl.u32 %v2499, 16
      %v2751 = vrot.slane %v2749, 4
      %v2752 = vor.u32 %v2751, %v2747
      %v2753 = vrot.slane %v2752, 4
      %v2755 = vshll.u32 %v2500, 16
      %v2757 = vrot.slane %v2755, 5
      %v2758 = vsel %vm331, %v2753, %v2757
      %v2760 = vshrl.u32 %v2501, 16
      %v2762 = vrot.slane %v2760, 4
      %v2763 = vshll.u32 %v2501, 16
      %v2765 = vrot.slane %v2763, 5
      %v2766 = vor.u32 %v2762, %v2765
      %v2767 = vrot.slane %v2766, 4
      %v2769 = vshll.u32 %v2502, 16
      %v2771 = vrot.slane %v2769, 5
      %v2772 = vsel %vm331, %v2767, %v2771
      %v2773 = vshrl.u32 %v2502, 16
      %v2775 = vrot.slane %v2773, 4
      %v2776 = vor.u32 %v2775, %v2771
      %v2777 = vrot.slane %v2776, 4
      %v2779 = vshll.u32 %v2503, 16
      %v2781 = vrot.slane %v2779, 5
      %v2782 = vsel %vm331, %v2777, %v2781
      %v2784 = vshrl.u32 %v2504, 16
      %v2786 = vrot.slane %v2784, 4
      %v2787 = vshll.u32 %v2504, 16
      %v2789 = vrot.slane %v2787, 5
      %v2790 = vor.u32 %v2786, %v2789
      %v2791 = vrot.slane %v2790, 4
      %v2793 = vshll.u32 %v2505, 16
      %v2795 = vrot.slane %v2793, 5
      %v2796 = vsel %vm331, %v2791, %v2795
      %v2797 = vshrl.u32 %v2505, 16
      %v2799 = vrot.slane %v2797, 4
      %v2800 = vor.u32 %v2799, %v2795
      %v2801 = vrot.slane %v2800, 4
      %v2803 = vshll.u32 %v2506, 16
      %v2805 = vrot.slane %v2803, 5
      %v2806 = vsel %vm331, %v2801, %v2805
      %v2808 = vshrl.u32 %v2507, 16
      %v2810 = vrot.slane %v2808, 4
      %v2811 = vshll.u32 %v2507, 16
      %v2813 = vrot.slane %v2811, 5
      %v2814 = vor.u32 %v2810, %v2813
      %v2815 = vrot.slane %v2814, 4
      %v2817 = vshll.u32 %v2508, 16
      %v2819 = vrot.slane %v2817, 5
      %v2820 = vsel %vm331, %v2815, %v2819
      %v2821 = vshrl.u32 %v2508, 16
      %v2823 = vrot.slane %v2821, 4
      %v2824 = vor.u32 %v2823, %v2819
      %v2825 = vrot.slane %v2824, 4
      %v2827 = vshll.u32 %v2509, 16
      %v2829 = vrot.slane %v2827, 5
      %v2830 = vsel %vm331, %v2825, %v2829
      %v2832 = vshrl.u32 %v2510, 16
      %v2834 = vrot.slane %v2832, 4
      %v2835 = vshll.u32 %v2510, 16
      %v2837 = vrot.slane %v2835, 5
      %v2838 = vor.u32 %v2834, %v2837
      %v2839 = vrot.slane %v2838, 4
      %v2841 = vshll.u32 %v2511, 16
      %v2843 = vrot.slane %v2841, 5
      %v2844 = vsel %vm331, %v2839, %v2843
      %v2845 = vshrl.u32 %v2511, 16
      %v2847 = vrot.slane %v2845, 4
      %v2848 = vor.u32 %v2847, %v2843
      %v2849 = vrot.slane %v2848, 4
      %v2851 = vshll.u32 %v2512, 16
      %v2853 = vrot.slane %v2851, 5
      %v2854 = vsel %vm331, %v2849, %v2853
      %v2856 = vshrl.u32 %v2513, 16
      %v2858 = vrot.slane %v2856, 4
      %v2859 = vshll.u32 %v2513, 16
      %v2861 = vrot.slane %v2859, 5
      %v2862 = vor.u32 %v2858, %v2861
      %v2863 = vrot.slane %v2862, 4
      %v2865 = vshll.u32 %v2514, 16
      %v2867 = vrot.slane %v2865, 5
      %v2868 = vsel %vm331, %v2863, %v2867
      %v2869 = vshrl.u32 %v2514, 16
      %v2871 = vrot.slane %v2869, 4
      %v2872 = vor.u32 %v2871, %v2867
      %v2873 = vrot.slane %v2872, 4
      %v2875 = vshll.u32 %v2515, 16
      %v2877 = vrot.slane %v2875, 5
      %v2878 = vsel %vm331, %v2873, %v2877
      %v2880 = vshrl.u32 %v2516, 16
      %v2882 = vrot.slane %v2880, 4
      %v2883 = vshll.u32 %v2516, 16
      %v2885 = vrot.slane %v2883, 5
      %v2886 = vor.u32 %v2882, %v2885
      %v2887 = vrot.slane %v2886, 4
      %v2889 = vshll.u32 %v2517, 16
      %v2891 = vrot.slane %v2889, 5
      %v2892 = vsel %vm331, %v2887, %v2891
      %v2893 = vshrl.u32 %v2517, 16
      %v2895 = vrot.slane %v2893, 4
      %v2896 = vor.u32 %v2895, %v2891
      %v2897 = vrot.slane %v2896, 4
      %v2899 = vshll.u32 %v2518, 16
      %v2901 = vrot.slane %v2899, 5
      %v2902 = vsel %vm331, %v2897, %v2901
      %2903 = vrot.lane.b32.xlu0 %v2532, 28
      %v2904 = vpop.permute.xlu0 %2903
      %2905 = vrot.lane.b32.xlu0 %v2542, 28
      %v2906 = vpop.permute.xlu0 %2905
      %2907 = vrot.lane.b32.xlu0 %v2556, 28
      %v2908 = vpop.permute.xlu0 %2907
      %2909 = vrot.lane.b32.xlu0 %v2566, 28
      %v2910 = vpop.permute.xlu0 %2909
      %2911 = vrot.lane.b32.xlu0 %v2580, 28
      %v2912 = vpop.permute.xlu0 %2911
      %2913 = vrot.lane.b32.xlu0 %v2590, 28
      %v2914 = vpop.permute.xlu0 %2913
      %2915 = vrot.lane.b32.xlu0 %v2604, 28
      %v2916 = vpop.permute.xlu0 %2915
      %2917 = vrot.lane.b32.xlu0 %v2614, 28
      %v2918 = vpop.permute.xlu0 %2917
      %2919 = vrot.lane.b32.xlu0 %v2628, 28
      %v2920 = vpop.permute.xlu0 %2919
      %2921 = vrot.lane.b32.xlu0 %v2638, 28
      %v2922 = vpop.permute.xlu0 %2921
      %2923 = vrot.lane.b32.xlu0 %v2652, 28
      %v2924 = vpop.permute.xlu0 %2923
      %2925 = vrot.lane.b32.xlu0 %v2662, 28
      %v2926 = vpop.permute.xlu0 %2925
      %2927 = vrot.lane.b32.xlu0 %v2676, 28
      %v2928 = vpop.permute.xlu0 %2927
      %2929 = vrot.lane.b32.xlu0 %v2686, 28
      %v2930 = vpop.permute.xlu0 %2929
      %2931 = vrot.lane.b32.xlu0 %v2700, 28
      %v2932 = vpop.permute.xlu0 %2931
      %2933 = vrot.lane.b32.xlu0 %v2710, 28
      %v2934 = vpop.permute.xlu0 %2933
      %2935 = vrot.lane.b32.xlu0 %v2724, 28
      %v2936 = vpop.permute.xlu0 %2935
      %2937 = vrot.lane.b32.xlu0 %v2734, 28
      %v2938 = vpop.permute.xlu0 %2937
      %2939 = vrot.lane.b32.xlu0 %v2748, 28
      %v2940 = vpop.permute.xlu0 %2939
      %2941 = vrot.lane.b32.xlu0 %v2758, 28
      %v2942 = vpop.permute.xlu0 %2941
      %2943 = vrot.lane.b32.xlu0 %v2772, 28
      %v2944 = vpop.permute.xlu0 %2943
      %2945 = vrot.lane.b32.xlu0 %v2782, 28
      %v2946 = vpop.permute.xlu0 %2945
      %2947 = vrot.lane.b32.xlu0 %v2796, 28
      %v2948 = vpop.permute.xlu0 %2947
      %2949 = vrot.lane.b32.xlu0 %v2806, 28
      %v2950 = vpop.permute.xlu0 %2949
      %2951 = vrot.lane.b32.xlu0 %v2820, 28
      %v2952 = vpop.permute.xlu0 %2951
      %2953 = vrot.lane.b32.xlu0 %v2830, 28
      %v2954 = vpop.permute.xlu0 %2953
      %2955 = vrot.lane.b32.xlu0 %v2844, 28
      %v2956 = vpop.permute.xlu0 %2955
      %2957 = vrot.lane.b32.xlu0 %v2854, 28
      %v2958 = vpop.permute.xlu0 %2957
      %2959 = vrot.lane.b32.xlu0 %v2868, 28
      %v2960 = vpop.permute.xlu0 %2959
      %2961 = vrot.lane.b32.xlu0 %v2878, 28
      %v2962 = vpop.permute.xlu0 %2961
      %2963 = vrot.lane.b32.xlu0 %v2892, 28
      %v2964 = vpop.permute.xlu0 %2963
      %2965 = vrot.lane.b32.xlu0 %v2902, 28
      %v2966 = vpop.permute.xlu0 %2965
      %vm2999 = vcmask 257248
      %3000 = vst.msk [vmem:[#allocation2] sm:$0xf] %vm2999, %v2904
      %3001 = vst.msk [vmem:[#allocation2 + $0x4] sm:$0xf] %vm2999, %v2906
      %3002 = vst.msk [vmem:[#allocation2 + $0x8] sm:$0xf] %vm2999, %v2908
      %3003 = vst.msk [vmem:[#allocation2 + $0xc] sm:$0xf] %vm2999, %v2910
      %3004 = vst.msk [vmem:[#allocation2 + $0x10] sm:$0xf] %vm2999, %v2912
      %3005 = vst.msk [vmem:[#allocation2 + $0x14] sm:$0xf] %vm2999, %v2914
      %3006 = vst.msk [vmem:[#allocation2 + $0x18] sm:$0xf] %vm2999, %v2916
      %3007 = vst.msk [vmem:[#allocation2 + $0x1c] sm:$0xf] %vm2999, %v2918
      %3008 = vst.msk [vmem:[#allocation2 + $0x20] sm:$0xf] %vm2999, %v2920
      %3009 = vst.msk [vmem:[#allocation2 + $0x24] sm:$0xf] %vm2999, %v2922
      %3010 = vst.msk [vmem:[#allocation2 + $0x28] sm:$0xf] %vm2999, %v2924
      %3011 = vst.msk [vmem:[#allocation2 + $0x2c] sm:$0xf] %vm2999, %v2926
      %3012 = vst.msk [vmem:[#allocation2 + $0x30] sm:$0xf] %vm2999, %v2928
      %3013 = vst.msk [vmem:[#allocation2 + $0x34] sm:$0xf] %vm2999, %v2930
      %3014 = vst.msk [vmem:[#allocation2 + $0x38] sm:$0xf] %vm2999, %v2932
      %3015 = vst.msk [vmem:[#allocation2 + $0x3c] sm:$0xf] %vm2999, %v2934
      %3016 = vst.msk [vmem:[#allocation2 + $0x40] sm:$0xf] %vm2999, %v2936
      %3017 = vst.msk [vmem:[#allocation2 + $0x44] sm:$0xf] %vm2999, %v2938
      %3018 = vst.msk [vmem:[#allocation2 + $0x48] sm:$0xf] %vm2999, %v2940
      %3019 = vst.msk [vmem:[#allocation2 + $0x4c] sm:$0xf] %vm2999, %v2942
      %3020 = vst.msk [vmem:[#allocation2 + $0x50] sm:$0xf] %vm2999, %v2944
      %3021 = vst.msk [vmem:[#allocation2 + $0x54] sm:$0xf] %vm2999, %v2946
      %3022 = vst.msk [vmem:[#allocation2 + $0x58] sm:$0xf] %vm2999, %v2948
      %3023 = vst.msk [vmem:[#allocation2 + $0x5c] sm:$0xf] %vm2999, %v2950
      %3024 = vst.msk [vmem:[#allocation2 + $0x60] sm:$0xf] %vm2999, %v2952
      %3025 = vst.msk [vmem:[#allocation2 + $0x64] sm:$0xf] %vm2999, %v2954
      %3026 = vst.msk [vmem:[#allocation2 + $0x68] sm:$0xf] %vm2999, %v2956
      %3027 = vst.msk [vmem:[#allocation2 + $0x6c] sm:$0xf] %vm2999, %v2958
      %3028 = vst.msk [vmem:[#allocation2 + $0x70] sm:$0xf] %vm2999, %v2960
      %3029 = vst.msk [vmem:[#allocation2 + $0x74] sm:$0xf] %vm2999, %v2962
      %3030 = vst.msk [vmem:[#allocation2 + $0x78] sm:$0xf] %vm2999, %v2964
      %3031 = vst.msk [vmem:[#allocation2 + $0x7c] sm:$0xf] %vm2999, %v2966
      %v3032 = vld [vmem:[%s2277] sm:$0xe]
      %v3033 = vld [vmem:[%s2277 + $0x4] sm:$0xf]
      %v3034 = vld [vmem:[%s2277 + $0x8] sm:$0x1]
      %v3035 = vld [vmem:[%s2277 + $0xc] sm:$0xe]
      %v3036 = vld [vmem:[%s2277 + $0x10] sm:$0xf]
      %v3037 = vld [vmem:[%s2277 + $0x14] sm:$0x1]
      %v3038 = vld [vmem:[%s2277 + $0x18] sm:$0xe]
      %v3039 = vld [vmem:[%s2277 + $0x1c] sm:$0xf]
      %v3040 = vld [vmem:[%s2277 + $0x20] sm:$0x1]
      %v3041 = vld [vmem:[%s2277 + $0x24] sm:$0xe]
      %v3042 = vld [vmem:[%s2277 + $0x28] sm:$0xf]
      %v3043 = vld [vmem:[%s2277 + $0x2c] sm:$0x1]
      %v3044 = vld [vmem:[%s2277 + $0x30] sm:$0xe]
      %v3045 = vld [vmem:[%s2277 + $0x34] sm:$0xf]
      %v3046 = vld [vmem:[%s2277 + $0x38] sm:$0x1]
      %v3047 = vld [vmem:[%s2277 + $0x3c] sm:$0xe]
      %v3048 = vld [vmem:[%s2277 + $0x40] sm:$0xf]
      %v3049 = vld [vmem:[%s2277 + $0x44] sm:$0x1]
      %v3050 = vld [vmem:[%s2277 + $0x48] sm:$0xe]
      %v3051 = vld [vmem:[%s2277 + $0x4c] sm:$0xf]
      %v3052 = vld [vmem:[%s2277 + $0x50] sm:$0x1]
      %v3053 = vld [vmem:[%s2277 + $0x54] sm:$0xe]
      %v3054 = vld [vmem:[%s2277 + $0x58] sm:$0xf]
      %v3055 = vld [vmem:[%s2277 + $0x5c] sm:$0x1]
      %v3056 = vld [vmem:[%s2277 + $0x60] sm:$0xe]
      %v3057 = vld [vmem:[%s2277 + $0x64] sm:$0xf]
      %v3058 = vld [vmem:[%s2277 + $0x68] sm:$0x1]
      %v3059 = vld [vmem:[%s2277 + $0x6c] sm:$0xe]
      %v3060 = vld [vmem:[%s2277 + $0x70] sm:$0xf]
      %v3061 = vld [vmem:[%s2277 + $0x74] sm:$0x1]
      %v3062 = vld [vmem:[%s2277 + $0x78] sm:$0xe]
      %v3063 = vld [vmem:[%s2277 + $0x7c] sm:$0xf]
      %v3064 = vld [vmem:[%s2277 + $0x80] sm:$0x1]
      %v3065 = vld [vmem:[%s2277 + $0x84] sm:$0xe]
      %v3066 = vld [vmem:[%s2277 + $0x88] sm:$0xf]
      %v3067 = vld [vmem:[%s2277 + $0x8c] sm:$0x1]
      %v3068 = vld [vmem:[%s2277 + $0x90] sm:$0xe]
      %v3069 = vld [vmem:[%s2277 + $0x94] sm:$0xf]
      %v3070 = vld [vmem:[%s2277 + $0x98] sm:$0x1]
      %v3071 = vld [vmem:[%s2277 + $0x9c] sm:$0xe]
      %v3072 = vld [vmem:[%s2277 + $0xa0] sm:$0xf]
      %v3073 = vld [vmem:[%s2277 + $0xa4] sm:$0x1]
      %v3074 = vld [vmem:[%s2277 + $0xa8] sm:$0xe]
      %v3075 = vld [vmem:[%s2277 + $0xac] sm:$0xf]
      %v3076 = vld [vmem:[%s2277 + $0xb0] sm:$0x1]
      %v3077 = vld [vmem:[%s2277 + $0xb4] sm:$0xe]
      %v3078 = vld [vmem:[%s2277 + $0xb8] sm:$0xf]
      %v3079 = vld [vmem:[%s2277 + $0xbc] sm:$0x1]
      %v3128 = vrot.slane %v3032, 5
      %v3129 = vrot.slane %v3128, 4
      %v3130 = vrot.slane %v3033, 5
      %v3131 = vsel %vm943, %v3129, %v3130
      %v3132 = vrot.slane %v3130, 4
      %v3133 = vrot.slane %v3034, 5
      %v3134 = vsel %vm943, %v3132, %v3133
      %v3135 = vrot.slane %v3035, 5
      %v3136 = vrot.slane %v3135, 4
      %v3137 = vrot.slane %v3036, 5
      %v3138 = vsel %vm943, %v3136, %v3137
      %v3139 = vrot.slane %v3137, 4
      %v3140 = vrot.slane %v3037, 5
      %v3141 = vsel %vm943, %v3139, %v3140
      %v3142 = vrot.slane %v3038, 5
      %v3143 = vrot.slane %v3142, 4
      %v3144 = vrot.slane %v3039, 5
      %v3145 = vsel %vm943, %v3143, %v3144
      %v3146 = vrot.slane %v3144, 4
      %v3147 = vrot.slane %v3040, 5
      %v3148 = vsel %vm943, %v3146, %v3147
      %v3149 = vrot.slane %v3041, 5
      %v3150 = vrot.slane %v3149, 4
      %v3151 = vrot.slane %v3042, 5
      %v3152 = vsel %vm943, %v3150, %v3151
      %v3153 = vrot.slane %v3151, 4
      %v3154 = vrot.slane %v3043, 5
      %v3155 = vsel %vm943, %v3153, %v3154
      %v3156 = vrot.slane %v3044, 5
      %v3157 = vrot.slane %v3156, 4
      %v3158 = vrot.slane %v3045, 5
      %v3159 = vsel %vm943, %v3157, %v3158
      %v3160 = vrot.slane %v3158, 4
      %v3161 = vrot.slane %v3046, 5
      %v3162 = vsel %vm943, %v3160, %v3161
      %v3163 = vrot.slane %v3047, 5
      %v3164 = vrot.slane %v3163, 4
      %v3165 = vrot.slane %v3048, 5
      %v3166 = vsel %vm943, %v3164, %v3165
      %v3167 = vrot.slane %v3165, 4
      %v3168 = vrot.slane %v3049, 5
      %v3169 = vsel %vm943, %v3167, %v3168
      %v3170 = vrot.slane %v3050, 5
      %v3171 = vrot.slane %v3170, 4
      %v3172 = vrot.slane %v3051, 5
      %v3173 = vsel %vm943, %v3171, %v3172
      %v3174 = vrot.slane %v3172, 4
      %v3175 = vrot.slane %v3052, 5
      %v3176 = vsel %vm943, %v3174, %v3175
      %v3177 = vrot.slane %v3053, 5
      %v3178 = vrot.slane %v3177, 4
      %v3179 = vrot.slane %v3054, 5
      %v3180 = vsel %vm943, %v3178, %v3179
      %v3181 = vrot.slane %v3179, 4
      %v3182 = vrot.slane %v3055, 5
      %v3183 = vsel %vm943, %v3181, %v3182
      %v3184 = vrot.slane %v3056, 5
      %v3185 = vrot.slane %v3184, 4
      %v3186 = vrot.slane %v3057, 5
      %v3187 = vsel %vm943, %v3185, %v3186
      %v3188 = vrot.slane %v3186, 4
      %v3189 = vrot.slane %v3058, 5
      %v3190 = vsel %vm943, %v3188, %v3189
      %v3191 = vrot.slane %v3059, 5
      %v3192 = vrot.slane %v3191, 4
      %v3193 = vrot.slane %v3060, 5
      %v3194 = vsel %vm943, %v3192, %v3193
      %v3195 = vrot.slane %v3193, 4
      %v3196 = vrot.slane %v3061, 5
      %v3197 = vsel %vm943, %v3195, %v3196
      %v3198 = vrot.slane %v3062, 5
      %v3199 = vrot.slane %v3198, 4
      %v3200 = vrot.slane %v3063, 5
      %v3201 = vsel %vm943, %v3199, %v3200
      %v3202 = vrot.slane %v3200, 4
      %v3203 = vrot.slane %v3064, 5
      %v3204 = vsel %vm943, %v3202, %v3203
      %v3205 = vrot.slane %v3065, 5
      %v3206 = vrot.slane %v3205, 4
      %v3207 = vrot.slane %v3066, 5
      %v3208 = vsel %vm943, %v3206, %v3207
      %v3209 = vrot.slane %v3207, 4
      %v3210 = vrot.slane %v3067, 5
      %v3211 = vsel %vm943, %v3209, %v3210
      %v3212 = vrot.slane %v3068, 5
      %v3213 = vrot.slane %v3212, 4
      %v3214 = vrot.slane %v3069, 5
      %v3215 = vsel %vm943, %v3213, %v3214
      %v3216 = vrot.slane %v3214, 4
      %v3217 = vrot.slane %v3070, 5
      %v3218 = vsel %vm943, %v3216, %v3217
      %v3219 = vrot.slane %v3071, 5
      %v3220 = vrot.slane %v3219, 4
      %v3221 = vrot.slane %v3072, 5
      %v3222 = vsel %vm943, %v3220, %v3221
      %v3223 = vrot.slane %v3221, 4
      %v3224 = vrot.slane %v3073, 5
      %v3225 = vsel %vm943, %v3223, %v3224
      %v3226 = vrot.slane %v3074, 5
      %v3227 = vrot.slane %v3226, 4
      %v3228 = vrot.slane %v3075, 5
      %v3229 = vsel %vm943, %v3227, %v3228
      %v3230 = vrot.slane %v3228, 4
      %v3231 = vrot.slane %v3076, 5
      %v3232 = vsel %vm943, %v3230, %v3231
      %v3233 = vrot.slane %v3077, 5
      %v3234 = vrot.slane %v3233, 4
      %v3235 = vrot.slane %v3078, 5
      %v3236 = vsel %vm943, %v3234, %v3235
      %v3237 = vrot.slane %v3235, 4
      %v3238 = vrot.slane %v3079, 5
      %v3239 = vsel %vm943, %v3237, %v3238
      %3240 = vrot.lane.b32.xlu0 %v3131, 32
      %v3241 = vpop.permute.xlu0 %3240
      %3242 = vrot.lane.b32.xlu0 %v3134, 32
      %v3243 = vpop.permute.xlu0 %3242
      %3244 = vrot.lane.b32.xlu0 %v3138, 32
      %v3245 = vpop.permute.xlu0 %3244
      %3246 = vrot.lane.b32.xlu0 %v3141, 32
      %v3247 = vpop.permute.xlu0 %3246
      %3248 = vrot.lane.b32.xlu0 %v3145, 32
      %v3249 = vpop.permute.xlu0 %3248
      %3250 = vrot.lane.b32.xlu0 %v3148, 32
      %v3251 = vpop.permute.xlu0 %3250
      %3252 = vrot.lane.b32.xlu0 %v3152, 32
      %v3253 = vpop.permute.xlu0 %3252
      %3254 = vrot.lane.b32.xlu0 %v3155, 32
      %v3255 = vpop.permute.xlu0 %3254
      %3256 = vrot.lane.b32.xlu0 %v3159, 32
      %v3257 = vpop.permute.xlu0 %3256
      %3258 = vrot.lane.b32.xlu0 %v3162, 32
      %v3259 = vpop.permute.xlu0 %3258
      %3260 = vrot.lane.b32.xlu0 %v3166, 32
      %v3261 = vpop.permute.xlu0 %3260
      %3262 = vrot.lane.b32.xlu0 %v3169, 32
      %v3263 = vpop.permute.xlu0 %3262
      %3264 = vrot.lane.b32.xlu0 %v3173, 32
      %v3265 = vpop.permute.xlu0 %3264
      %3266 = vrot.lane.b32.xlu0 %v3176, 32
      %v3267 = vpop.permute.xlu0 %3266
      %3268 = vrot.lane.b32.xlu0 %v3180, 32
      %v3269 = vpop.permute.xlu0 %3268
      %3270 = vrot.lane.b32.xlu0 %v3183, 32
      %v3271 = vpop.permute.xlu0 %3270
      %3272 = vrot.lane.b32.xlu0 %v3187, 32
      %v3273 = vpop.permute.xlu0 %3272
      %3274 = vrot.lane.b32.xlu0 %v3190, 32
      %v3275 = vpop.permute.xlu0 %3274
      %3276 = vrot.lane.b32.xlu0 %v3194, 32
      %v3277 = vpop.permute.xlu0 %3276
      %3278 = vrot.lane.b32.xlu0 %v3197, 32
      %v3279 = vpop.permute.xlu0 %3278
      %3280 = vrot.lane.b32.xlu0 %v3201, 32
      %v3281 = vpop.permute.xlu0 %3280
      %3282 = vrot.lane.b32.xlu0 %v3204, 32
      %v3283 = vpop.permute.xlu0 %3282
      %3284 = vrot.lane.b32.xlu0 %v3208, 32
      %v3285 = vpop.permute.xlu0 %3284
      %3286 = vrot.lane.b32.xlu0 %v3211, 32
      %v3287 = vpop.permute.xlu0 %3286
      %3288 = vrot.lane.b32.xlu0 %v3215, 32
      %v3289 = vpop.permute.xlu0 %3288
      %3290 = vrot.lane.b32.xlu0 %v3218, 32
      %v3291 = vpop.permute.xlu0 %3290
      %3292 = vrot.lane.b32.xlu0 %v3222, 32
      %v3293 = vpop.permute.xlu0 %3292
      %3294 = vrot.lane.b32.xlu0 %v3225, 32
      %v3295 = vpop.permute.xlu0 %3294
      %3296 = vrot.lane.b32.xlu0 %v3229, 32
      %v3297 = vpop.permute.xlu0 %3296
      %3298 = vrot.lane.b32.xlu0 %v3232, 32
      %v3299 = vpop.permute.xlu0 %3298
      %3300 = vrot.lane.b32.xlu0 %v3236, 32
      %v3301 = vpop.permute.xlu0 %3300
      %3302 = vrot.lane.b32.xlu0 %v3239, 32
      %v3303 = vpop.permute.xlu0 %3302
      %vm3336 = vcmask 290048
      %3337 = vst.msk [vmem:[#allocation2] sm:$0xf] %vm3336, %v3241
      %3338 = vst.msk [vmem:[#allocation2 + $0x4] sm:$0xf] %vm3336, %v3243
      %3339 = vst.msk [vmem:[#allocation2 + $0x8] sm:$0xf] %vm3336, %v3245
      %3340 = vst.msk [vmem:[#allocation2 + $0xc] sm:$0xf] %vm3336, %v3247
      %3341 = vst.msk [vmem:[#allocation2 + $0x10] sm:$0xf] %vm3336, %v3249
      %3342 = vst.msk [vmem:[#allocation2 + $0x14] sm:$0xf] %vm3336, %v3251
      %3343 = vst.msk [vmem:[#allocation2 + $0x18] sm:$0xf] %vm3336, %v3253
      %3344 = vst.msk [vmem:[#allocation2 + $0x1c] sm:$0xf] %vm3336, %v3255
      %3345 = vst.msk [vmem:[#allocation2 + $0x20] sm:$0xf] %vm3336, %v3257
      %3346 = vst.msk [vmem:[#allocation2 + $0x24] sm:$0xf] %vm3336, %v3259
      %3347 = vst.msk [vmem:[#allocation2 + $0x28] sm:$0xf] %vm3336, %v3261
      %3348 = vst.msk [vmem:[#allocation2 + $0x2c] sm:$0xf] %vm3336, %v3263
      %3349 = vst.msk [vmem:[#allocation2 + $0x30] sm:$0xf] %vm3336, %v3265
      %3350 = vst.msk [vmem:[#allocation2 + $0x34] sm:$0xf] %vm3336, %v3267
      %3351 = vst.msk [vmem:[#allocation2 + $0x38] sm:$0xf] %vm3336, %v3269
      %3352 = vst.msk [vmem:[#allocation2 + $0x3c] sm:$0xf] %vm3336, %v3271
      %3353 = vst.msk [vmem:[#allocation2 + $0x40] sm:$0xf] %vm3336, %v3273
      %3354 = vst.msk [vmem:[#allocation2 + $0x44] sm:$0xf] %vm3336, %v3275
      %3355 = vst.msk [vmem:[#allocation2 + $0x48] sm:$0xf] %vm3336, %v3277
      %3356 = vst.msk [vmem:[#allocation2 + $0x4c] sm:$0xf] %vm3336, %v3279
      %3357 = vst.msk [vmem:[#allocation2 + $0x50] sm:$0xf] %vm3336, %v3281
      %3358 = vst.msk [vmem:[#allocation2 + $0x54] sm:$0xf] %vm3336, %v3283
      %3359 = vst.msk [vmem:[#allocation2 + $0x58] sm:$0xf] %vm3336, %v3285
      %3360 = vst.msk [vmem:[#allocation2 + $0x5c] sm:$0xf] %vm3336, %v3287
      %3361 = vst.msk [vmem:[#allocation2 + $0x60] sm:$0xf] %vm3336, %v3289
      %3362 = vst.msk [vmem:[#allocation2 + $0x64] sm:$0xf] %vm3336, %v3291
      %3363 = vst.msk [vmem:[#allocation2 + $0x68] sm:$0xf] %vm3336, %v3293
      %3364 = vst.msk [vmem:[#allocation2 + $0x6c] sm:$0xf] %vm3336, %v3295
      %3365 = vst.msk [vmem:[#allocation2 + $0x70] sm:$0xf] %vm3336, %v3297
      %3366 = vst.msk [vmem:[#allocation2 + $0x74] sm:$0xf] %vm3336, %v3299
      %3367 = vst.msk [vmem:[#allocation2 + $0x78] sm:$0xf] %vm3336, %v3301
      %3368 = vst.msk [vmem:[#allocation2 + $0x7c] sm:$0xf] %vm3336, %v3303
      %v3369 = vld [vmem:[#allocation2] sm:$0xf]
      %v3370 = vld [vmem:[#allocation2 + $0x4] sm:$0xf]
      %v3371 = vld [vmem:[#allocation2 + $0x8] sm:$0xf]
      %v3372 = vld [vmem:[#allocation2 + $0xc] sm:$0xf]
      %v3373 = vld [vmem:[#allocation2 + $0x10] sm:$0xf]
      %v3374 = vld [vmem:[#allocation2 + $0x14] sm:$0xf]
      %v3375 = vld [vmem:[#allocation2 + $0x18] sm:$0xf]
      %v3376 = vld [vmem:[#allocation2 + $0x1c] sm:$0xf]
      %v3377 = vld [vmem:[#allocation2 + $0x20] sm:$0xf]
      %v3378 = vld [vmem:[#allocation2 + $0x24] sm:$0xf]
      %v3379 = vld [vmem:[#allocation2 + $0x28] sm:$0xf]
      %v3380 = vld [vmem:[#allocation2 + $0x2c] sm:$0xf]
      %v3381 = vld [vmem:[#allocation2 + $0x30] sm:$0xf]
      %v3382 = vld [vmem:[#allocation2 + $0x34] sm:$0xf]
      %v3383 = vld [vmem:[#allocation2 + $0x38] sm:$0xf]
      %v3384 = vld [vmem:[#allocation2 + $0x3c] sm:$0xf]
      %v3385 = vld [vmem:[#allocation2 + $0x40] sm:$0xf]
      %v3386 = vld [vmem:[#allocation2 + $0x44] sm:$0xf]
      %v3387 = vld [vmem:[#allocation2 + $0x48] sm:$0xf]
      %v3388 = vld [vmem:[#allocation2 + $0x4c] sm:$0xf]
      %v3389 = vld [vmem:[#allocation2 + $0x50] sm:$0xf]
      %v3390 = vld [vmem:[#allocation2 + $0x54] sm:$0xf]
      %v3391 = vld [vmem:[#allocation2 + $0x58] sm:$0xf]
      %v3392 = vld [vmem:[#allocation2 + $0x5c] sm:$0xf]
      %v3393 = vld [vmem:[#allocation2 + $0x60] sm:$0xf]
      %v3394 = vld [vmem:[#allocation2 + $0x64] sm:$0xf]
      %v3395 = vld [vmem:[#allocation2 + $0x68] sm:$0xf]
      %v3396 = vld [vmem:[#allocation2 + $0x6c] sm:$0xf]
      %v3397 = vld [vmem:[#allocation2 + $0x70] sm:$0xf]
      %v3398 = vld [vmem:[#allocation2 + $0x74] sm:$0xf]
      %v3399 = vld [vmem:[#allocation2 + $0x78] sm:$0xf]
      %v3400 = vld [vmem:[#allocation2 + $0x7c] sm:$0xf]
      %v3401 = vld [vmem:[%s1] sm:$0xf]
      %v3402 = vld [vmem:[%s1 + $0x4] sm:$0xf]
      %v3403 = vld [vmem:[%s1 + $0x8] sm:$0xf]
      %v3404 = vld [vmem:[%s1 + $0xc] sm:$0xf]
      %v3405 = vld [vmem:[%s1 + $0x10] sm:$0x3]
      %v3438 = vunpack.c.l.b16 %v3369
      %v3439 = vunpack.c.l.b16 %v3370
      %v3440 = vunpack.c.l.b16 %v3371
      %v3441 = vunpack.c.l.b16 %v3372
      %v3442 = vunpack.c.l.b16 %v3373
      %v3443 = vunpack.c.l.b16 %v3374
      %v3444 = vunpack.c.l.b16 %v3375
      %v3445 = vunpack.c.l.b16 %v3376
      %v3446 = vunpack.c.l.b16 %v3377
      %v3447 = vunpack.c.l.b16 %v3378
      %v3448 = vunpack.c.l.b16 %v3379
      %v3449 = vunpack.c.l.b16 %v3380
      %v3450 = vunpack.c.l.b16 %v3381
      %v3451 = vunpack.c.l.b16 %v3382
      %v3452 = vunpack.c.l.b16 %v3383
      %v3453 = vunpack.c.l.b16 %v3384
      %v3454 = vunpack.c.l.b16 %v3385
      %v3455 = vunpack.c.l.b16 %v3386
      %v3456 = vunpack.c.l.b16 %v3387
      %v3457 = vunpack.c.l.b16 %v3388
      %v3458 = vunpack.c.l.b16 %v3389
      %v3459 = vunpack.c.l.b16 %v3390
      %v3460 = vunpack.c.l.b16 %v3391
      %v3461 = vunpack.c.l.b16 %v3392
      %v3462 = vunpack.c.l.b16 %v3393
      %v3463 = vunpack.c.l.b16 %v3394
      %v3464 = vunpack.c.l.b16 %v3395
      %v3465 = vunpack.c.l.b16 %v3396
      %v3466 = vunpack.c.l.b16 %v3397
      %v3467 = vunpack.c.l.b16 %v3398
      %v3468 = vunpack.c.l.b16 %v3399
      %v3469 = vunpack.c.l.b16 %v3400
      %v3470 = vpack.c.b16 %v3439, %v3438
      %v3471 = vpack.c.b16 %v3441, %v3440
      %v3472 = vpack.c.b16 %v3443, %v3442
      %v3473 = vpack.c.b16 %v3445, %v3444
      %v3474 = vpack.c.b16 %v3447, %v3446
      %v3475 = vpack.c.b16 %v3449, %v3448
      %v3476 = vpack.c.b16 %v3451, %v3450
      %v3477 = vpack.c.b16 %v3453, %v3452
      %v3478 = vpack.c.b16 %v3455, %v3454
      %v3479 = vpack.c.b16 %v3457, %v3456
      %v3480 = vpack.c.b16 %v3459, %v3458
      %v3481 = vpack.c.b16 %v3461, %v3460
      %v3482 = vpack.c.b16 %v3463, %v3462
      %v3483 = vpack.c.b16 %v3465, %v3464
      %v3484 = vpack.c.b16 %v3467, %v3466
      %v3485 = vpack.c.b16 %v3469, %v3468
      %v3491 = vunpack.c.l.b16 %v3401
      %v3492 = vunpack.c.l.b16 %v3402
      %v3493 = vunpack.c.l.b16 %v3403
      %v3494 = vunpack.c.l.b16 %v3404
      %v3495 = vunpack.c.l.b16 %v3405
      %v3496 = vpack.c.b16 %v3492, %v3491
      %v3497 = vpack.c.b16 %v3494, %v3493
      %v3498 = vpack.c.b16 %v3495, %v3495
      %vm3501 = vcmask 293888
      %v3503 = vsel %vm3501, %v3470, 0
      %v3506 = vsel %vm3501, %v3471, 0
      %v3509 = vsel %vm3501, %v3472, 0
      %v3512 = vsel %vm3501, %v3473, 0
      %v3515 = vsel %vm3501, %v3474, 0
      %v3518 = vsel %vm3501, %v3475, 0
      %v3521 = vsel %vm3501, %v3476, 0
      %v3524 = vsel %vm3501, %v3477, 0
      %v3527 = vsel %vm3501, %v3478, 0
      %v3530 = vsel %vm3501, %v3479, 0
      %v3533 = vsel %vm3501, %v3480, 0
      %v3536 = vsel %vm3501, %v3481, 0
      %v3539 = vsel %vm3501, %v3482, 0
      %v3542 = vsel %vm3501, %v3483, 0
      %v3545 = vsel %vm3501, %v3484, 0
      %v3548 = vsel %vm3501, %v3485, 0
      %vm3550 = vcmask 1041408
      %v3552 = vsel %vm3550, %v3498, 0
      %3554 = vmatpush.bf16.msra.mxu0 0
      %3555 = vmatpush.bf16.msra.mxu0 0
      %3556 = vmatpush.bf16.msra.mxu0 0
      %3557 = vmatpush.bf16.msra.mxu0 0
      %3558 = vmatpush.bf16.msra.mxu0 0
      %3559 = vmatpush.bf16.msra.mxu0 %v3552
      %3560 = vmatpush.bf16.msra.mxu0 %v3497
      %3561 = vmatpush.bf16.msra.mxu0 %v3496
      %3562 = vmatmul.bf16.gmra.mxu0 %v3503
      %v3563 = vpop.f32.mrf.mxu0
      %v3564 = vadd.f32 0.0, %v3563
      %v3565 = vpop.f32.mrf.mxu0
      %v3566 = vadd.f32 0.0, %v3565
      %3567 = vmatmul.bf16.gmra.mxu0 %v3506
      %v3568 = vpop.f32.mrf.mxu0
      %v3569 = vadd.f32 0.0, %v3568
      %v3570 = vpop.f32.mrf.mxu0
      %v3571 = vadd.f32 0.0, %v3570
      %3572 = vmatmul.bf16.gmra.mxu0 %v3509
      %v3573 = vpop.f32.mrf.mxu0
      %v3574 = vadd.f32 0.0, %v3573
      %v3575 = vpop.f32.mrf.mxu0
      %v3576 = vadd.f32 0.0, %v3575
      %3577 = vmatmul.bf16.gmra.mxu0 %v3512
      %v3578 = vpop.f32.mrf.mxu0
      %v3579 = vadd.f32 0.0, %v3578
      %v3580 = vpop.f32.mrf.mxu0
      %v3581 = vadd.f32 0.0, %v3580
      %3582 = vmatmul.bf16.gmra.mxu0 %v3515
      %v3583 = vpop.f32.mrf.mxu0
      %v3584 = vadd.f32 0.0, %v3583
      %v3585 = vpop.f32.mrf.mxu0
      %v3586 = vadd.f32 0.0, %v3585
      %3587 = vmatmul.bf16.gmra.mxu0 %v3518
      %v3588 = vpop.f32.mrf.mxu0
      %v3589 = vadd.f32 0.0, %v3588
      %v3590 = vpop.f32.mrf.mxu0
      %v3591 = vadd.f32 0.0, %v3590
      %3592 = vmatmul.bf16.gmra.mxu0 %v3521
      %v3593 = vpop.f32.mrf.mxu0
      %v3594 = vadd.f32 0.0, %v3593
      %v3595 = vpop.f32.mrf.mxu0
      %v3596 = vadd.f32 0.0, %v3595
      %3597 = vmatmul.bf16.gmra.mxu0 %v3524
      %v3598 = vpop.f32.mrf.mxu0
      %v3599 = vadd.f32 0.0, %v3598
      %v3600 = vpop.f32.mrf.mxu0
      %v3601 = vadd.f32 0.0, %v3600
      %3602 = vmatmul.bf16.gmra.mxu0 %v3527
      %v3603 = vpop.f32.mrf.mxu0
      %v3604 = vadd.f32 0.0, %v3603
      %v3605 = vpop.f32.mrf.mxu0
      %v3606 = vadd.f32 0.0, %v3605
      %3607 = vmatmul.bf16.gmra.mxu0 %v3530
      %v3608 = vpop.f32.mrf.mxu0
      %v3609 = vadd.f32 0.0, %v3608
      %v3610 = vpop.f32.mrf.mxu0
      %v3611 = vadd.f32 0.0, %v3610
      %3612 = vmatmul.bf16.gmra.mxu0 %v3533
      %v3613 = vpop.f32.mrf.mxu0
      %v3614 = vadd.f32 0.0, %v3613
      %v3615 = vpop.f32.mrf.mxu0
      %v3616 = vadd.f32 0.0, %v3615
      %3617 = vmatmul.bf16.gmra.mxu0 %v3536
      %v3618 = vpop.f32.mrf.mxu0
      %v3619 = vadd.f32 0.0, %v3618
      %v3620 = vpop.f32.mrf.mxu0
      %v3621 = vadd.f32 0.0, %v3620
      %3622 = vmatmul.bf16.gmra.mxu0 %v3539
      %v3623 = vpop.f32.mrf.mxu0
      %v3624 = vadd.f32 0.0, %v3623
      %v3625 = vpop.f32.mrf.mxu0
      %v3626 = vadd.f32 0.0, %v3625
      %3627 = vmatmul.bf16.gmra.mxu0 %v3542
      %v3628 = vpop.f32.mrf.mxu0
      %v3629 = vadd.f32 0.0, %v3628
      %v3630 = vpop.f32.mrf.mxu0
      %v3631 = vadd.f32 0.0, %v3630
      %3632 = vmatmul.bf16.gmra.mxu0 %v3545
      %v3633 = vpop.f32.mrf.mxu0
      %v3634 = vadd.f32 0.0, %v3633
      %v3635 = vpop.f32.mrf.mxu0
      %v3636 = vadd.f32 0.0, %v3635
      %3637 = vmatmul.bf16.gmra.mxu0 %v3548
      %v3638 = vpop.f32.mrf.mxu0
      %v3639 = vadd.f32 0.0, %v3638
      %v3640 = vpop.f32.mrf.mxu0
      %v3641 = vadd.f32 0.0, %v3640
      %3642 = vdwg.mxu0
      %vm3643 = vcmask 64512
      %v3644 = vsel %vm3643, %v3564, 0.0
      %v3645 = vsel %vm3643, %v3566, 0.0
      %v3646 = vadd.f32 %v3644, %v3645
      %v3647 = vsel %vm3643, %v3569, 0.0
      %v3648 = vadd.f32 %v3646, %v3647
      %v3649 = vsel %vm3643, %v3571, 0.0
      %v3650 = vadd.f32 %v3648, %v3649
      %v3651 = vsel %vm3643, %v3574, 0.0
      %v3652 = vadd.f32 %v3650, %v3651
      %v3653 = vsel %vm3643, %v3576, 0.0
      %v3654 = vadd.f32 %v3652, %v3653
      %v3655 = vsel %vm3643, %v3579, 0.0
      %v3656 = vadd.f32 %v3654, %v3655
      %v3657 = vsel %vm3643, %v3581, 0.0
      %v3658 = vadd.f32 %v3656, %v3657
      %v3659 = vsel %vm3643, %v3584, 0.0
      %v3660 = vadd.f32 %v3658, %v3659
      %v3661 = vsel %vm3643, %v3586, 0.0
      %v3662 = vadd.f32 %v3660, %v3661
      %v3663 = vsel %vm3643, %v3589, 0.0
      %v3664 = vadd.f32 %v3662, %v3663
      %v3665 = vsel %vm3643, %v3591, 0.0
      %v3666 = vadd.f32 %v3664, %v3665
      %v3667 = vsel %vm3643, %v3594, 0.0
      %v3668 = vadd.f32 %v3666, %v3667
      %v3669 = vsel %vm3643, %v3596, 0.0
      %v3670 = vadd.f32 %v3668, %v3669
      %v3671 = vsel %vm3643, %v3599, 0.0
      %v3672 = vadd.f32 %v3670, %v3671
      %v3673 = vsel %vm3643, %v3601, 0.0
      %v3674 = vadd.f32 %v3672, %v3673
      %v3675 = vsel %vm3643, %v3604, 0.0
      %v3676 = vadd.f32 %v3674, %v3675
      %v3677 = vsel %vm3643, %v3606, 0.0
      %v3678 = vadd.f32 %v3676, %v3677
      %v3679 = vsel %vm3643, %v3609, 0.0
      %v3680 = vadd.f32 %v3678, %v3679
      %v3681 = vsel %vm3643, %v3611, 0.0
      %v3682 = vadd.f32 %v3680, %v3681
      %v3683 = vsel %vm3643, %v3614, 0.0
      %v3684 = vadd.f32 %v3682, %v3683
      %v3685 = vsel %vm3643, %v3616, 0.0
      %v3686 = vadd.f32 %v3684, %v3685
      %v3687 = vsel %vm3643, %v3619, 0.0
      %v3688 = vadd.f32 %v3686, %v3687
      %v3689 = vsel %vm3643, %v3621, 0.0
      %v3690 = vadd.f32 %v3688, %v3689
      %v3691 = vsel %vm3643, %v3624, 0.0
      %v3692 = vadd.f32 %v3690, %v3691
      %v3693 = vsel %vm3643, %v3626, 0.0
      %v3694 = vadd.f32 %v3692, %v3693
      %v3695 = vsel %vm3643, %v3629, 0.0
      %v3696 = vadd.f32 %v3694, %v3695
      %v3697 = vsel %vm3643, %v3631, 0.0
      %v3698 = vadd.f32 %v3696, %v3697
      %v3699 = vsel %vm3643, %v3634, 0.0
      %v3700 = vadd.f32 %v3698, %v3699
      %v3701 = vsel %vm3643, %v3636, 0.0
      %v3702 = vadd.f32 %v3700, %v3701
      %v3703 = vsel %vm3643, %v3639, 0.0
      %v3704 = vadd.f32 %v3702, %v3703
      %v3705 = vsel %vm3643, %v3641, 0.0
      %v3706 = vadd.f32 %v3704, %v3705
      %v3707 = vrot.slane %v3706, 4
      %v3708 = vadd.f32 %v3706, %v3707
      %v3709 = vrot.slane %v3708, 2
      %v3710 = vadd.f32 %v3708, %v3709
      %v3711 = vrot.slane %v3710, 1
      %v3712 = vadd.f32 %v3710, %v3711
      %vm3713 = vcmask 57344
      %3714 = vst.msk [vmem:[%s211] sm:$0x1] %vm3713, %v3712
      %v3715 = vmul.f32 %v3564, %v3564
      %v3716 = vmul.f32 %v3566, %v3566
      %v3717 = vmul.f32 %v3569, %v3569
      %v3718 = vmul.f32 %v3571, %v3571
      %v3719 = vmul.f32 %v3574, %v3574
      %v3720 = vmul.f32 %v3576, %v3576
      %v3721 = vmul.f32 %v3579, %v3579
      %v3722 = vmul.f32 %v3581, %v3581
      %v3723 = vmul.f32 %v3584, %v3584
      %v3724 = vmul.f32 %v3586, %v3586
      %v3725 = vmul.f32 %v3589, %v3589
      %v3726 = vmul.f32 %v3591, %v3591
      %v3727 = vmul.f32 %v3594, %v3594
      %v3728 = vmul.f32 %v3596, %v3596
      %v3729 = vmul.f32 %v3599, %v3599
      %v3730 = vmul.f32 %v3601, %v3601
      %v3731 = vmul.f32 %v3604, %v3604
      %v3732 = vmul.f32 %v3606, %v3606
      %v3733 = vmul.f32 %v3609, %v3609
      %v3734 = vmul.f32 %v3611, %v3611
      %v3735 = vmul.f32 %v3614, %v3614
      %v3736 = vmul.f32 %v3616, %v3616
      %v3737 = vmul.f32 %v3619, %v3619
      %v3738 = vmul.f32 %v3621, %v3621
      %v3739 = vmul.f32 %v3624, %v3624
      %v3740 = vmul.f32 %v3626, %v3626
      %v3741 = vmul.f32 %v3629, %v3629
      %v3742 = vmul.f32 %v3631, %v3631
      %v3743 = vmul.f32 %v3634, %v3634
      %v3744 = vmul.f32 %v3636, %v3636
      %v3745 = vmul.f32 %v3639, %v3639
      %v3746 = vmul.f32 %v3641, %v3641
      %v3747 = vsel %vm3643, %v3715, 0.0
      %v3748 = vsel %vm3643, %v3716, 0.0
      %v3749 = vadd.f32 %v3747, %v3748
      %v3750 = vsel %vm3643, %v3717, 0.0
      %v3751 = vadd.f32 %v3749, %v3750
      %v3752 = vsel %vm3643, %v3718, 0.0
      %v3753 = vadd.f32 %v3751, %v3752
      %v3754 = vsel %vm3643, %v3719, 0.0
      %v3755 = vadd.f32 %v3753, %v3754
      %v3756 = vsel %vm3643, %v3720, 0.0
      %v3757 = vadd.f32 %v3755, %v3756
      %v3758 = vsel %vm3643, %v3721, 0.0
      %v3759 = vadd.f32 %v3757, %v3758
      %v3760 = vsel %vm3643, %v3722, 0.0
      %v3761 = vadd.f32 %v3759, %v3760
      %v3762 = vsel %vm3643, %v3723, 0.0
      %v3763 = vadd.f32 %v3761, %v3762
      %v3764 = vsel %vm3643, %v3724, 0.0
      %v3765 = vadd.f32 %v3763, %v3764
      %v3766 = vsel %vm3643, %v3725, 0.0
      %v3767 = vadd.f32 %v3765, %v3766
      %v3768 = vsel %vm3643, %v3726, 0.0
      %v3769 = vadd.f32 %v3767, %v3768
      %v3770 = vsel %vm3643, %v3727, 0.0
      %v3771 = vadd.f32 %v3769, %v3770
      %v3772 = vsel %vm3643, %v3728, 0.0
      %v3773 = vadd.f32 %v3771, %v3772
      %v3774 = vsel %vm3643, %v3729, 0.0
      %v3775 = vadd.f32 %v3773, %v3774
      %v3776 = vsel %vm3643, %v3730, 0.0
      %v3777 = vadd.f32 %v3775, %v3776
      %v3778 = vsel %vm3643, %v3731, 0.0
      %v3779 = vadd.f32 %v3777, %v3778
      %v3780 = vsel %vm3643, %v3732, 0.0
      %v3781 = vadd.f32 %v3779, %v3780
      %v3782 = vsel %vm3643, %v3733, 0.0
      %v3783 = vadd.f32 %v3781, %v3782
      %v3784 = vsel %vm3643, %v3734, 0.0
      %v3785 = vadd.f32 %v3783, %v3784
      %v3786 = vsel %vm3643, %v3735, 0.0
      %v3787 = vadd.f32 %v3785, %v3786
      %v3788 = vsel %vm3643, %v3736, 0.0
      %v3789 = vadd.f32 %v3787, %v3788
      %v3790 = vsel %vm3643, %v3737, 0.0
      %v3791 = vadd.f32 %v3789, %v3790
      %v3792 = vsel %vm3643, %v3738, 0.0
      %v3793 = vadd.f32 %v3791, %v3792
      %v3794 = vsel %vm3643, %v3739, 0.0
      %v3795 = vadd.f32 %v3793, %v3794
      %v3796 = vsel %vm3643, %v3740, 0.0
      %v3797 = vadd.f32 %v3795, %v3796
      %v3798 = vsel %vm3643, %v3741, 0.0
      %v3799 = vadd.f32 %v3797, %v3798
      %v3800 = vsel %vm3643, %v3742, 0.0
      %v3801 = vadd.f32 %v3799, %v3800
      %v3802 = vsel %vm3643, %v3743, 0.0
      %v3803 = vadd.f32 %v3801, %v3802
      %v3804 = vsel %vm3643, %v3744, 0.0
      %v3805 = vadd.f32 %v3803, %v3804
      %v3806 = vsel %vm3643, %v3745, 0.0
      %v3807 = vadd.f32 %v3805, %v3806
      %v3808 = vsel %vm3643, %v3746, 0.0
      %v3809 = vadd.f32 %v3807, %v3808
      %v3810 = vrot.slane %v3809, 4
      %v3811 = vadd.f32 %v3809, %v3810
      %v3812 = vrot.slane %v3811, 2
      %v3813 = vadd.f32 %v3811, %v3812
      %v3814 = vrot.slane %v3813, 1
      %v3815 = vadd.f32 %v3813, %v3814
      %3816 = vst.msk [vmem:[%s214] sm:$0x1] %vm3713, %v3815
      %3817 = vst.msk [vmem:[%s208] sm:$0xff] %vm3643, %v3564
      %3818 = vst.msk [vmem:[%s208 + $0x8] sm:$0xff] %vm3643, %v3566
      %3819 = vst.msk [vmem:[%s208 + $0x10] sm:$0xff] %vm3643, %v3569
      %3820 = vst.msk [vmem:[%s208 + $0x18] sm:$0xff] %vm3643, %v3571
      %3821 = vst.msk [vmem:[%s208 + $0x20] sm:$0xff] %vm3643, %v3574
      %3822 = vst.msk [vmem:[%s208 + $0x28] sm:$0xff] %vm3643, %v3576
      %3823 = vst.msk [vmem:[%s208 + $0x30] sm:$0xff] %vm3643, %v3579
      %3824 = vst.msk [vmem:[%s208 + $0x38] sm:$0xff] %vm3643, %v3581
      %3825 = vst.msk [vmem:[%s208 + $0x40] sm:$0xff] %vm3643, %v3584
      %3826 = vst.msk [vmem:[%s208 + $0x48] sm:$0xff] %vm3643, %v3586
      %3827 = vst.msk [vmem:[%s208 + $0x50] sm:$0xff] %vm3643, %v3589
      %3828 = vst.msk [vmem:[%s208 + $0x58] sm:$0xff] %vm3643, %v3591
      %3829 = vst.msk [vmem:[%s208 + $0x60] sm:$0xff] %vm3643, %v3594
      %3830 = vst.msk [vmem:[%s208 + $0x68] sm:$0xff] %vm3643, %v3596
      %3831 = vst.msk [vmem:[%s208 + $0x70] sm:$0xff] %vm3643, %v3599
      %3832 = vst.msk [vmem:[%s208 + $0x78] sm:$0xff] %vm3643, %v3601
      %3833 = vst.msk [vmem:[%s208 + $0x80] sm:$0xff] %vm3643, %v3604
      %3834 = vst.msk [vmem:[%s208 + $0x88] sm:$0xff] %vm3643, %v3606
      %3835 = vst.msk [vmem:[%s208 + $0x90] sm:$0xff] %vm3643, %v3609
      %3836 = vst.msk [vmem:[%s208 + $0x98] sm:$0xff] %vm3643, %v3611
      %3837 = vst.msk [vmem:[%s208 + $0xa0] sm:$0xff] %vm3643, %v3614
      %3838 = vst.msk [vmem:[%s208 + $0xa8] sm:$0xff] %vm3643, %v3616
      %3839 = vst.msk [vmem:[%s208 + $0xb0] sm:$0xff] %vm3643, %v3619
      %3840 = vst.msk [vmem:[%s208 + $0xb8] sm:$0xff] %vm3643, %v3621
      %3841 = vst.msk [vmem:[%s208 + $0xc0] sm:$0xff] %vm3643, %v3624
      %3842 = vst.msk [vmem:[%s208 + $0xc8] sm:$0xff] %vm3643, %v3626
      %3843 = vst.msk [vmem:[%s208 + $0xd0] sm:$0xff] %vm3643, %v3629
      %3844 = vst.msk [vmem:[%s208 + $0xd8] sm:$0xff] %vm3643, %v3631
      %3845 = vst.msk [vmem:[%s208 + $0xe0] sm:$0xff] %vm3643, %v3634
      %3846 = vst.msk [vmem:[%s208 + $0xe8] sm:$0xff] %vm3643, %v3636
      %3847 = vst.msk [vmem:[%s208 + $0xf0] sm:$0xff] %vm3643, %v3639
      %3848 = vst.msk [vmem:[%s208 + $0xf8] sm:$0xff] %vm3643, %v3641
      %p3849 = scmp.lt.s32.totalorder %s16, 1
      %s3850 = scalar_select %p3849, %s16, 1
      %s3851 = smul.addr %s3850, 32
      %s3852 = smul.addr %s3851, 8
      %s3853 = scalar_lea.vmem %s2, %s3852
      %p3854 = scmp.lt.s32.totalorder %s16, 1
      %s3855 = scalar_select %p3854, %s16, 1
      %s3856 = scalar_lea.vmem %s3, %s3855
      %p3857 = scmp.lt.s32.totalorder %s16, 1
      %s3858 = scalar_select %p3857, %s16, 1
      %s3859 = scalar_lea.vmem %s4, %s3858
      // Predicated region
      $region29: #{_vgg_block_fwd.2} parent=27 // pred_check
        %p3860 = pneg %p81
      $region30: #{_vgg_block_fwd.2} parent=27 // pred_check_branch
        %3862 = sbr.rel (%p3860) target = $region32
      $region31: #{_vgg_block_fwd.2} parent=27 // pred_region
        _
      $region32: #{_vgg_block_fwd.2} parent=27 // pred_fallthru
        _
      // Predicated region
      $region33: #{_vgg_block_fwd.2} parent=27 // pred_check
        %p3863 = pneg %p107
      $region34: #{_vgg_block_fwd.2} parent=27 // pred_check_branch
        %3865 = sbr.rel (%p3863) target = $region36
      $region35: #{_vgg_block_fwd.2} parent=27 // pred_region
        _
      $region36: #{_vgg_block_fwd.2} parent=27 // pred_fallthru
        _
      // Predicated region
      $region37: #{_vgg_block_fwd.2} parent=27 // pred_check
        %p3866 = pneg %p133
      $region38: #{_vgg_block_fwd.2} parent=27 // pred_check_branch
        %3868 = sbr.rel (%p3866) target = $region40
      $region39: #{_vgg_block_fwd.2} parent=27 // pred_region
        _
      $region40: #{_vgg_block_fwd.2} parent=27 // pred_fallthru
        _
    $region28: #{_vgg_block_fwd.2} parent=5 // pred_fallthru
      _
    %p3869 = scmp.le.s32.totalorder 2, %s11
    // Predicated region
    $region41: #{_vgg_block_fwd.2} parent=5 // pred_check
      %p3870 = pneg %p3869
    $region42: #{_vgg_block_fwd.2} parent=5 // pred_check_branch
      %3872 = sbr.rel (%p3870) target = $region44
    $region43: #{_vgg_block_fwd.2} parent=5 // pred_region
      %s3873 = ssub.s32 %s11, 2
      // Predicated region
      $region45: #{_vgg_block_fwd.2} parent=43 // pred_check
        %p3874 = pneg %p87
      $region46: #{_vgg_block_fwd.2} parent=43 // pred_check_branch
        %3876 = sbr.rel (%p3874) target = $region48
      $region47: #{_vgg_block_fwd.2} parent=43 // pred_region
        %p3877 = scmp.lt.s32.totalorder %s17, 1
        %s3878 = scalar_select %p3877, %s17, 1
        %s3879 = smul.addr %s3878, 32
        %s3880 = smul.addr %s3879, 8
        %s3881 = scalar_lea.vmem %s2, %s3880
      $region48: #{_vgg_block_fwd.2} parent=43 // pred_fallthru
        _
      // Predicated region
      $region49: #{_vgg_block_fwd.2} parent=43 // pred_check
        %p3882 = pneg %p113
      $region50: #{_vgg_block_fwd.2} parent=43 // pred_check_branch
        %3884 = sbr.rel (%p3882) target = $region52
      $region51: #{_vgg_block_fwd.2} parent=43 // pred_region
        %p3885 = scmp.lt.s32.totalorder %s17, 1
        %s3886 = scalar_select %p3885, %s17, 1
        %s3887 = scalar_lea.vmem %s3, %s3886
      $region52: #{_vgg_block_fwd.2} parent=43 // pred_fallthru
        _
      // Predicated region
      $region53: #{_vgg_block_fwd.2} parent=43 // pred_check
        %p3888 = pneg %p139
      $region54: #{_vgg_block_fwd.2} parent=43 // pred_check_branch
        %3890 = sbr.rel (%p3888) target = $region56
      $region55: #{_vgg_block_fwd.2} parent=43 // pred_region
        %p3891 = scmp.lt.s32.totalorder %s17, 1
        %s3892 = scalar_select %p3891, %s17, 1
        %s3893 = scalar_lea.vmem %s4, %s3892
      $region56: #{_vgg_block_fwd.2} parent=43 // pred_fallthru
        _
    $region44: #{_vgg_block_fwd.2} parent=5 // pred_fallthru
      _
  $region6: #{_vgg_block_fwd.2} parent=0 // loop_footer
    %s15 = sadd.s32 1, %s11
  $region7: #{_vgg_block_fwd.2} parent=0 // loop_footer_branch
    %10 = sbr.rel target = $region3
  $region8: #{_vgg_block_fwd.2} parent=0 // loop_exit
    _

</llo_original>
